<compile_context>
chip_gen: v6e
topology: v6e:2x2x1
jax: 0.10.0
libtpu: 0.0.40
codegen_flags: <defaults>
</compile_context>

<pallas_src>
import functools

import jax
import jax.numpy as jnp
import numpy as np
from jax.experimental import pallas as pl
from jax.experimental.pallas import tpu as pltpu


# ----------------------------- in-kernel helpers -----------------------------

def _softplus(x):
    # numerically-stable softplus, exp/log1p go to the EUP
    return jnp.maximum(x, 0.0) + jnp.log1p(jnp.exp(-jnp.abs(x)))


def _sigmoid(x):
    # tanh form of the logistic: identical math, single EUP op, no VALU divide
    return 0.5 * jnp.tanh(0.5 * x) + 0.5


# --------------------------------- the kernel --------------------------------

def mf_concrete_kernel(
    # batch-tiled inputs
    x_ref,                 # [TILE_B, Dp]  bf16
    noise_ref,             # [TILE_B, 2*Tp] f32  (eps | ulogit)
    # resident weights (bf16) / biases (f32)
    w1_ref, b1_ref,        # h_inf : Dp -> Hp
    w2_ref, b2_ref,        # q_inf : Hp -> 5*Tp  (fused, lane-aligned heads)
    w3_ref, b3_ref,        # h_gen : Tp -> Hp
    w4_ref, b4_ref,        # x_gen : Hp -> Dp
    # outputs
    recon_ref,             # [TILE_B, Dp]
    slab_ref,              # [TILE_B, 8*Tp]  (zd|zr|mu|logvar|pi|a|b|logsample)
    *, inv_temp, Tp,
):
    bf16 = jnp.bfloat16
    f32 = jnp.float32

    # hoisted loads (bias broadcasts materialize once)
    b1 = b1_ref[...]
    b2 = b2_ref[...]
    b3 = b3_ref[...]
    b4 = b4_ref[...]
    eps = noise_ref[:, 0:Tp]
    ulogit = noise_ref[:, Tp:2 * Tp]

    # ---- encode ----
    h1 = jnp.maximum(
        jnp.dot(x_ref[...], w1_ref[...], preferred_element_type=f32) + b1,
        0.0,
    )
    q = jnp.dot(h1.astype(bf16), w2_ref[...], preferred_element_type=f32) + b2

    mu       = q[:, 0 * Tp:1 * Tp]
    logvar   = q[:, 1 * Tp:2 * Tp]
    pi_logit = q[:, 2 * Tp:3 * Tp]
    a_par = _softplus(q[:, 3 * Tp:4 * Tp]) + 0.01
    b_par = _softplus(q[:, 4 * Tp:5 * Tp]) + 0.01

    # ---- sample (training-mode semantics: no rounding of z_discrete) ----
    logsample = (pi_logit + ulogit) * inv_temp      # reparametrize_discrete
    z_discrete = _sigmoid(logsample)
    std = jnp.exp(0.5 * logvar)
    z_real = eps * std + mu
    z = z_discrete * z_real                          # padded cols stay exactly 0

    # ---- decode ----
    h3 = jnp.maximum(
        jnp.dot(z.astype(bf16), w3_ref[...], preferred_element_type=f32) + b3,
        0.0,
    )
    recon = _sigmoid(
        jnp.dot(h3.astype(bf16), w4_ref[...], preferred_element_type=f32) + b4
    )

    # ---- write outputs (lane-dense, lane-aligned packed slab) ----
    recon_ref[...] = recon
    slab_ref[...] = jnp.concatenate(
        [z_discrete, z_real, mu, logvar, pi_logit, a_par, b_par, logsample],
        axis=1,
    )


# --------------------------------- wrapper -----------------------------------

def _round_up(n, m):
    return int(pl.cdiv(n, m)) * m


def mf_concrete_forward(x, params, eps, ulogit, *, temp, truncation, beta_key,
                        tile_b=None):
    """Returns the same 10-tuple as MFConcrete.forward (training mode)."""
    B, D = x.shape
    T = truncation
    w1, b1, w2, b2, w3, b3, w4, b4 = params
    H = w1.shape[1]

    bf16 = jnp.bfloat16
    f32 = jnp.float32

    # --- lane-aligned padded sizes (all pads are zeros -> exact semantics) ---
    Dp = _round_up(D, 128)      # 784 -> 896
    Hp = _round_up(H, 128)      # 500 -> 512
    Tp = _round_up(T, 128)      # per-head lane alignment

    # --- adaptive batch tiling ---
    if tile_b is None:
        tile_b = _round_up(max(B, 1), 16) if B <= 128 else 256
    nb = int(pl.cdiv(B, tile_b))
    Bp = nb * tile_b

    # --- pad + cast weights (bf16 for MXU), biases stay f32 ---
    w1p = jnp.pad(w1, ((0, Dp - D), (0, Hp - H))).astype(bf16)
    b1p = jnp.pad(b1, ((0, 0), (0, Hp - H)))
    w2_heads = [jnp.pad(w2[:, k * T:(k + 1) * T], ((0, Hp - H), (0, Tp - T)))
                for k in range(5)]
    w2p = jnp.concatenate(w2_heads, axis=1).astype(bf16)     # [Hp, 5*Tp]
    b2_heads = [jnp.pad(b2[:, k * T:(k + 1) * T], ((0, 0), (0, Tp - T)))
                for k in range(5)]
    b2p = jnp.concatenate(b2_heads, axis=1)                   # [1, 5*Tp]
    w3p = jnp.pad(w3, ((0, Tp - T), (0, Hp - H))).astype(bf16)
    b3p = jnp.pad(b3, ((0, 0), (0, Hp - H)))
    w4p = jnp.pad(w4, ((0, Hp - H), (0, Dp - D))).astype(bf16)
    b4p = jnp.pad(b4, ((0, 0), (0, Dp - D)))

    # --- pad + cast activations; pack noise into one lane-aligned slab ---
    xp = jnp.pad(x, ((0, Bp - B), (0, Dp - D))).astype(bf16)
    epsp = jnp.pad(eps, ((0, Bp - B), (0, Tp - T)))
    ulp = jnp.pad(ulogit, ((0, Bp - B), (0, Tp - T)))
    noise = jnp.concatenate([epsp, ulp], axis=1)              # [Bp, 2*Tp]

    out_shape = (
        jax.ShapeDtypeStruct((Bp, Dp), f32),        # recon (padded)
        jax.ShapeDtypeStruct((Bp, 8 * Tp), f32),    # packed slab
    )

    # batch-tiled activations, VMEM-resident weights (constant index_map)
    def act(width):
        return pl.BlockSpec((tile_b, width), lambda i: (i, 0))

    def res(shape):
        return pl.BlockSpec(shape, lambda i: (0, 0))

    in_specs = [
        act(Dp), act(2 * Tp),                    # x, (eps|ulogit)
        res((Dp, Hp)), res((1, Hp)),             # w1, b1
        res((Hp, 5 * Tp)), res((1, 5 * Tp)),     # w2, b2
        res((Tp, Hp)), res((1, Hp)),             # w3, b3
        res((Hp, Dp)), res((1, Dp)),             # w4, b4
    ]
    out_specs = (act(Dp), act(8 * Tp))

    flops = 2 * Bp * (Dp * Hp + Hp * 5 * Tp + Tp * Hp + Hp * Dp)
    weight_bytes = 2 * (Dp * Hp + Hp * 5 * Tp + Tp * Hp + Hp * Dp) \
        + 4 * (Hp + 5 * Tp + Hp + Dp)
    act_bytes = 2 * Bp * Dp + 4 * Bp * 2 * Tp + 4 * Bp * (Dp + 8 * Tp)
    cost = pl.CostEstimate(
        flops=flops,
        transcendentals=Bp * (Dp + 8 * Tp),
        bytes_accessed=weight_bytes + act_bytes,
    )

    recon_p, slab = pl.pallas_call(
        functools.partial(mf_concrete_kernel, inv_temp=1.0 / temp, Tp=Tp),
        out_shape=out_shape,
        grid_spec=pl.GridSpec(
            grid=(nb,),
            in_specs=in_specs,
            out_specs=out_specs,
        ),
        compiler_params=pltpu.CompilerParams(
            dimension_semantics=("parallel",),
        ),
        cost_estimate=cost,
    )(xp, noise, w1p, b1p, w2p, b2p, w3p, b3p, w4p, b4p)

    recon = recon_p[:B, :D]
    heads = [slab[:B, k * Tp:k * Tp + T] for k in range(8)]
    z_discrete, z_real, mu, logvar, pi_logit, a, b, logsample = heads

    # TODO(synk): Beta()(a, b) sampling (rejection-based) has no clean in-kernel
    # Pallas equivalent; it is computed in plain JAX from the kernel's a, b outputs.
    v = jax.random.beta(beta_key, a, b)

    return recon, z_discrete, z_real, v, mu, logvar, pi_logit, a, b, logsample


# ------------------------------ plain-JAX reference --------------------------

def reference_forward(x, params, eps, ulogit, *, temp, truncation):
    """Same math, same bf16-matmul / f32-elementwise precision policy."""
    w1, b1, w2, b2, w3, b3, w4, b4 = params
    T = truncation
    bf = lambda t: t.astype(jnp.bfloat16)
    f32 = jnp.float32
    h1 = jnp.maximum(jnp.dot(bf(x), bf(w1), preferred_element_type=f32) + b1, 0.0)
    q = jnp.dot(bf(h1), bf(w2), preferred_element_type=f32) + b2
    mu, logvar, pi_logit, a_raw, b_raw = [q[:, i * T:(i + 1) * T] for i in range(5)]
    a = jax.nn.softplus(a_raw) + 0.01
    b = jax.nn.softplus(b_raw) + 0.01
    logsample = (pi_logit + ulogit) / temp
    z_discrete = jax.nn.sigmoid(logsample)
    z_real = eps * jnp.exp(0.5 * logvar) + mu
    z = z_discrete * z_real
    h3 = jnp.maximum(jnp.dot(bf(z), bf(w3), preferred_element_type=f32) + b3, 0.0)
    recon = jax.nn.sigmoid(jnp.dot(bf(h3), bf(w4), preferred_element_type=f32) + b4)
    return recon, z_discrete, z_real, mu, logvar, pi_logit, a, b, logsample


# ----------------------------------- main -------------------------------------

if __name__ == "__main__":
    B = 8            # batch (padded only to the next multiple of 16 inside the wrapper)
    T = 32           # max_truncation_level (constructor arg; small for the demo)
    H = 500          # hidden width (hardcoded in the module)
    D = 784          # mnist flattened (hardcoded in the module)
    temp = 0.66

    key = jax.random.PRNGKey(0)
    ks = jax.random.split(key, 12)

    def init_linear(kw, kb, fan_in, fan_out):
        scale = 1.0 / np.sqrt(fan_in)
        w = scale * jax.random.normal(kw, (fan_in, fan_out), jnp.float32)
        b = scale * jax.random.normal(kb, (1, fan_out), jnp.float32)
        return w, b

    w1, b1 = init_linear(ks[0], ks[1], D, H)        # h_inf
    w2, b2 = init_linear(ks[2], ks[3], H, 5 * T)    # q_inf
    w3, b3 = init_linear(ks[4], ks[5], T, H)        # h_gen
    w4, b4 = init_linear(ks[6], ks[7], H, D)        # x_gen
    params = (w1, b1, w2, b2, w3, b3, w4, b4)

    # input "image" batch in [0, 1), already flattened (x.view(-1, 784))
    x = jax.random.uniform(ks[8], (B, D), jnp.float32)

    # sampling noise (the stochastic part of the forward), drawn deterministically here
    eps = jax.random.normal(ks[9], (B, T), jnp.float32)
    u = jax.random.uniform(ks[10], (B, T), jnp.float32, minval=1e-6, maxval=1.0 - 1e-6)
    ulogit = jnp.log(u) - jnp.log1p(-u)

    outs = mf_concrete_forward(
        x, params, eps, ulogit, temp=temp, truncation=T, beta_key=ks[11],
    )
    outs = jax.block_until_ready(outs)
    recon, z_discrete, z_real, v, mu, logvar, pi_logit, a, b, logsample = outs

    # side attributes the PyTorch module stashes during forward
    a_sum = float(jnp.sum(a))
    b_sum = float(jnp.sum(b))
    assert np.isfinite(a_sum) and np.isfinite(b_sum)

    # correctness check against a plain-JAX reference of the same math / precision
    ref = reference_forward(x, params, eps, ulogit, temp=temp, truncation=T)
    got = (recon, z_discrete, z_real, mu, logvar, pi_logit, a, b, logsample)
    for r, g in zip(ref, got):
        np.testing.assert_allclose(np.asarray(g), np.asarray(r), rtol=2e-2, atol=2e-2)

    print("KERNEL_OK")
</pallas_src>

<mosaic_0001>
module attributes {stable_mosaic.version = 11 : i64} {
  func.func @mf_concrete_kernel(%arg0: i32, %arg1: memref<16x896xbf16, #tpu.memory_space<vmem>>, %arg2: memref<16x256xf32, #tpu.memory_space<vmem>>, %arg3: memref<896x512xbf16, #tpu.memory_space<vmem>>, %arg4: memref<1x512xf32, #tpu.memory_space<vmem>>, %arg5: memref<512x640xbf16, #tpu.memory_space<vmem>>, %arg6: memref<1x640xf32, #tpu.memory_space<vmem>>, %arg7: memref<128x512xbf16, #tpu.memory_space<vmem>>, %arg8: memref<1x512xf32, #tpu.memory_space<vmem>>, %arg9: memref<512x896xbf16, #tpu.memory_space<vmem>>, %arg10: memref<1x896xf32, #tpu.memory_space<vmem>>, %arg11: memref<16x896xf32, #tpu.memory_space<vmem>>, %arg12: memref<16x1024xf32, #tpu.memory_space<vmem>>) attributes {dimension_semantics = [#tpu.dimension_semantics<parallel>], iteration_bounds = array<i64: 1>, scalar_prefetch = 0 : i64, scratch_operands = 0 : i64, tpu.core_type = #tpu.core_type<tc>, window_params = [{transform_indices = @transform_0, window_bounds = array<i64: 16, 896>}, {transform_indices = @transform_1, window_bounds = array<i64: 16, 256>}, {pipeline_mode = #tpu.pipeline_mode<synchronous>, transform_indices = @transform_2, window_bounds = array<i64: 896, 512>}, {pipeline_mode = #tpu.pipeline_mode<synchronous>, transform_indices = @transform_3, window_bounds = array<i64: 1, 512>}, {pipeline_mode = #tpu.pipeline_mode<synchronous>, transform_indices = @transform_4, window_bounds = array<i64: 512, 640>}, {pipeline_mode = #tpu.pipeline_mode<synchronous>, transform_indices = @transform_5, window_bounds = array<i64: 1, 640>}, {pipeline_mode = #tpu.pipeline_mode<synchronous>, transform_indices = @transform_6, window_bounds = array<i64: 128, 512>}, {pipeline_mode = #tpu.pipeline_mode<synchronous>, transform_indices = @transform_7, window_bounds = array<i64: 1, 512>}, {pipeline_mode = #tpu.pipeline_mode<synchronous>, transform_indices = @transform_8, window_bounds = array<i64: 512, 896>}, {pipeline_mode = #tpu.pipeline_mode<synchronous>, transform_indices = @transform_9, window_bounds = array<i64: 1, 896>}, {transform_indices = @transform_10, window_bounds = array<i64: 16, 896>}, {transform_indices = @transform_11, window_bounds = array<i64: 16, 1024>}]} {
    %c0 = arith.constant 0 : index
    %c0_0 = arith.constant 0 : index
    %0 = vector.load %arg4[%c0, %c0_0] : memref<1x512xf32, #tpu.memory_space<vmem>>, vector<1x512xf32>
    %c0_1 = arith.constant 0 : index
    %c0_2 = arith.constant 0 : index
    %1 = vector.load %arg6[%c0_1, %c0_2] : memref<1x640xf32, #tpu.memory_space<vmem>>, vector<1x640xf32>
    %c0_3 = arith.constant 0 : index
    %c0_4 = arith.constant 0 : index
    %2 = vector.load %arg8[%c0_3, %c0_4] : memref<1x512xf32, #tpu.memory_space<vmem>>, vector<1x512xf32>
    %c0_5 = arith.constant 0 : index
    %c0_6 = arith.constant 0 : index
    %3 = vector.load %arg10[%c0_5, %c0_6] : memref<1x896xf32, #tpu.memory_space<vmem>>, vector<1x896xf32>
    %c0_7 = arith.constant 0 : index
    %c0_8 = arith.constant 0 : index
    %4 = vector.load %arg2[%c0_7, %c0_8] : memref<16x256xf32, #tpu.memory_space<vmem>>, vector<16x128xf32>
    %c0_9 = arith.constant 0 : index
    %c128 = arith.constant 128 : index
    %5 = vector.load %arg2[%c0_9, %c128] : memref<16x256xf32, #tpu.memory_space<vmem>>, vector<16x128xf32>
    %c0_10 = arith.constant 0 : index
    %c0_11 = arith.constant 0 : index
    %6 = vector.load %arg1[%c0_10, %c0_11] : memref<16x896xbf16, #tpu.memory_space<vmem>>, vector<16x896xbf16>
    %c0_12 = arith.constant 0 : index
    %c0_13 = arith.constant 0 : index
    %7 = vector.load %arg3[%c0_12, %c0_13] : memref<896x512xbf16, #tpu.memory_space<vmem>>, vector<896x512xbf16>
    %cst = arith.constant dense<0.000000e+00> : vector<16x512xf32>
    %8 = tpu.matmul %6, %7, %cst {dimension_numbers = #tpu.dot_dimension_numbers<[1], [0], [0], [1], [0, 0, 1, 1], [], []>} : vector<16x896xbf16>, vector<896x512xbf16>, vector<16x512xf32> -> vector<16x512xf32>
    %9 = vector.broadcast %0 : vector<1x512xf32> to vector<16x512xf32>
    %10 = arith.addf %8, %9 : vector<16x512xf32>
    %cst_14 = arith.constant 0.000000e+00 : f32
    %11 = vector.broadcast %cst_14 : f32 to vector<16x512xf32>
    %12 = arith.maximumf %10, %11 : vector<16x512xf32>
    %13 = arith.truncf %12 : vector<16x512xf32> to vector<16x512xbf16>
    %c0_15 = arith.constant 0 : index
    %c0_16 = arith.constant 0 : index
    %14 = vector.load %arg5[%c0_15, %c0_16] : memref<512x640xbf16, #tpu.memory_space<vmem>>, vector<512x640xbf16>
    %cst_17 = arith.constant dense<0.000000e+00> : vector<16x640xf32>
    %15 = tpu.matmul %13, %14, %cst_17 {dimension_numbers = #tpu.dot_dimension_numbers<[1], [0], [0], [1], [0, 0, 1, 1], [], []>} : vector<16x512xbf16>, vector<512x640xbf16>, vector<16x640xf32> -> vector<16x640xf32>
    %16 = vector.broadcast %1 : vector<1x640xf32> to vector<16x640xf32>
    %17 = arith.addf %15, %16 : vector<16x640xf32>
    %18 = vector.extract_strided_slice %17 {offsets = [0, 0], sizes = [16, 128], strides = [1, 1]} : vector<16x640xf32> to vector<16x128xf32>
    %19 = vector.extract_strided_slice %17 {offsets = [0, 128], sizes = [16, 128], strides = [1, 1]} : vector<16x640xf32> to vector<16x128xf32>
    %20 = vector.extract_strided_slice %17 {offsets = [0, 256], sizes = [16, 128], strides = [1, 1]} : vector<16x640xf32> to vector<16x128xf32>
    %21 = vector.extract_strided_slice %17 {offsets = [0, 384], sizes = [16, 128], strides = [1, 1]} : vector<16x640xf32> to vector<16x128xf32>
    %cst_18 = arith.constant 0.000000e+00 : f32
    %22 = vector.broadcast %cst_18 : f32 to vector<16x128xf32>
    %23 = arith.maximumf %21, %22 : vector<16x128xf32>
    %24 = math.absf %21 : vector<16x128xf32>
    %cst_19 = arith.constant 0.000000e+00 : f32
    %25 = vector.broadcast %cst_19 : f32 to vector<16x128xf32>
    %26 = arith.subf %25, %24 : vector<16x128xf32>
    %27 = math.exp %26 : vector<16x128xf32>
    %28 = math.log1p %27 : vector<16x128xf32>
    %29 = arith.addf %23, %28 : vector<16x128xf32>
    %cst_20 = arith.constant 0.00999999977 : f32
    %30 = vector.broadcast %cst_20 : f32 to vector<16x128xf32>
    %31 = arith.addf %29, %30 : vector<16x128xf32>
    %32 = vector.extract_strided_slice %17 {offsets = [0, 512], sizes = [16, 128], strides = [1, 1]} : vector<16x640xf32> to vector<16x128xf32>
    %cst_21 = arith.constant 0.000000e+00 : f32
    %33 = vector.broadcast %cst_21 : f32 to vector<16x128xf32>
    %34 = arith.maximumf %32, %33 : vector<16x128xf32>
    %35 = math.absf %32 : vector<16x128xf32>
    %cst_22 = arith.constant 0.000000e+00 : f32
    %36 = vector.broadcast %cst_22 : f32 to vector<16x128xf32>
    %37 = arith.subf %36, %35 : vector<16x128xf32>
    %38 = math.exp %37 : vector<16x128xf32>
    %39 = math.log1p %38 : vector<16x128xf32>
    %40 = arith.addf %34, %39 : vector<16x128xf32>
    %cst_23 = arith.constant 0.00999999977 : f32
    %41 = vector.broadcast %cst_23 : f32 to vector<16x128xf32>
    %42 = arith.addf %40, %41 : vector<16x128xf32>
    %43 = arith.addf %20, %5 : vector<16x128xf32>
    %cst_24 = arith.constant 1.5151515 : f32
    %44 = vector.broadcast %cst_24 : f32 to vector<16x128xf32>
    %45 = arith.mulf %43, %44 : vector<16x128xf32>
    %cst_25 = arith.constant 5.000000e-01 : f32
    %46 = vector.broadcast %cst_25 : f32 to vector<16x128xf32>
    %47 = arith.mulf %46, %45 : vector<16x128xf32>
    %48 = math.tanh %47 : vector<16x128xf32>
    %cst_26 = arith.constant 5.000000e-01 : f32
    %49 = vector.broadcast %cst_26 : f32 to vector<16x128xf32>
    %50 = arith.mulf %49, %48 : vector<16x128xf32>
    %cst_27 = arith.constant 5.000000e-01 : f32
    %51 = vector.broadcast %cst_27 : f32 to vector<16x128xf32>
    %52 = arith.addf %50, %51 : vector<16x128xf32>
    %cst_28 = arith.constant 5.000000e-01 : f32
    %53 = vector.broadcast %cst_28 : f32 to vector<16x128xf32>
    %54 = arith.mulf %53, %19 : vector<16x128xf32>
    %55 = math.exp %54 : vector<16x128xf32>
    %56 = arith.mulf %4, %55 : vector<16x128xf32>
    %57 = arith.addf %56, %18 : vector<16x128xf32>
    %58 = arith.mulf %52, %57 : vector<16x128xf32>
    %59 = arith.truncf %58 : vector<16x128xf32> to vector<16x128xbf16>
    %c0_29 = arith.constant 0 : index
    %c0_30 = arith.constant 0 : index
    %60 = vector.load %arg7[%c0_29, %c0_30] : memref<128x512xbf16, #tpu.memory_space<vmem>>, vector<128x512xbf16>
    %cst_31 = arith.constant dense<0.000000e+00> : vector<16x512xf32>
    %61 = tpu.matmul %59, %60, %cst_31 {dimension_numbers = #tpu.dot_dimension_numbers<[1], [0], [0], [1], [0, 0, 1, 1], [], []>} : vector<16x128xbf16>, vector<128x512xbf16>, vector<16x512xf32> -> vector<16x512xf32>
    %62 = vector.broadcast %2 : vector<1x512xf32> to vector<16x512xf32>
    %63 = arith.addf %61, %62 : vector<16x512xf32>
    %cst_32 = arith.constant 0.000000e+00 : f32
    %64 = vector.broadcast %cst_32 : f32 to vector<16x512xf32>
    %65 = arith.maximumf %63, %64 : vector<16x512xf32>
    %66 = arith.truncf %65 : vector<16x512xf32> to vector<16x512xbf16>
    %c0_33 = arith.constant 0 : index
    %c0_34 = arith.constant 0 : index
    %67 = vector.load %arg9[%c0_33, %c0_34] : memref<512x896xbf16, #tpu.memory_space<vmem>>, vector<512x896xbf16>
    %cst_35 = arith.constant dense<0.000000e+00> : vector<16x896xf32>
    %68 = tpu.matmul %66, %67, %cst_35 {dimension_numbers = #tpu.dot_dimension_numbers<[1], [0], [0], [1], [0, 0, 1, 1], [], []>} : vector<16x512xbf16>, vector<512x896xbf16>, vector<16x896xf32> -> vector<16x896xf32>
    %69 = vector.broadcast %3 : vector<1x896xf32> to vector<16x896xf32>
    %70 = arith.addf %68, %69 : vector<16x896xf32>
    %cst_36 = arith.constant 5.000000e-01 : f32
    %71 = vector.broadcast %cst_36 : f32 to vector<16x896xf32>
    %72 = arith.mulf %71, %70 : vector<16x896xf32>
    %73 = math.tanh %72 : vector<16x896xf32>
    %cst_37 = arith.constant 5.000000e-01 : f32
    %74 = vector.broadcast %cst_37 : f32 to vector<16x896xf32>
    %75 = arith.mulf %74, %73 : vector<16x896xf32>
    %cst_38 = arith.constant 5.000000e-01 : f32
    %76 = vector.broadcast %cst_38 : f32 to vector<16x896xf32>
    %77 = arith.addf %75, %76 : vector<16x896xf32>
    %c0_39 = arith.constant 0 : index
    %c0_40 = arith.constant 0 : index
    %78 = vector.load %arg11[%c0_39, %c0_40] : memref<16x896xf32, #tpu.memory_space<vmem>>, vector<16x896xf32>
    tpu.vector_store %arg11[%c0_39, %c0_40], %77 {strides = array<i32>} : memref<16x896xf32, #tpu.memory_space<vmem>>, vector<16x896xf32>,
    %79 = tpu.concatenate %52, %57, %18, %19, %20, %31, %42, %45 in 1 : vector<16x128xf32>, vector<16x128xf32>, vector<16x128xf32>, vector<16x128xf32>, vector<16x128xf32>, vector<16x128xf32>, vector<16x128xf32>, vector<16x128xf32> -> vector<16x1024xf32>
    %c0_41 = arith.constant 0 : index
    %c0_42 = arith.constant 0 : index
    %80 = vector.load %arg12[%c0_41, %c0_42] : memref<16x1024xf32, #tpu.memory_space<vmem>>, vector<16x1024xf32>
    tpu.vector_store %arg12[%c0_41, %c0_42], %79 {strides = array<i32>} : memref<16x1024xf32, #tpu.memory_space<vmem>>, vector<16x1024xf32>,
    return
  }
  func.func @transform_0(%arg0: i32) -> (i32, i32) {
    %c0_i32 = arith.constant 0 : i32
    %c0_i32_0 = arith.constant 0 : i32
    return %arg0, %c0_i32 : i32, i32
  }
  func.func @transform_1(%arg0: i32) -> (i32, i32) {
    %c0_i32 = arith.constant 0 : i32
    %c0_i32_0 = arith.constant 0 : i32
    return %arg0, %c0_i32 : i32, i32
  }
  func.func @transform_2(%arg0: i32) -> (i32, i32) {
    %c0_i32 = arith.constant 0 : i32
    %c0_i32_0 = arith.constant 0 : i32
    %c0_i32_1 = arith.constant 0 : i32
    return %c0_i32, %c0_i32_0 : i32, i32
  }
  func.func @transform_3(%arg0: i32) -> (i32, i32) {
    %c0_i32 = arith.constant 0 : i32
    %c0_i32_0 = arith.constant 0 : i32
    %c0_i32_1 = arith.constant 0 : i32
    return %c0_i32, %c0_i32_0 : i32, i32
  }
  func.func @transform_4(%arg0: i32) -> (i32, i32) {
    %c0_i32 = arith.constant 0 : i32
    %c0_i32_0 = arith.constant 0 : i32
    %c0_i32_1 = arith.constant 0 : i32
    return %c0_i32, %c0_i32_0 : i32, i32
  }
  func.func @transform_5(%arg0: i32) -> (i32, i32) {
    %c0_i32 = arith.constant 0 : i32
    %c0_i32_0 = arith.constant 0 : i32
    %c0_i32_1 = arith.constant 0 : i32
    return %c0_i32, %c0_i32_0 : i32, i32
  }
  func.func @transform_6(%arg0: i32) -> (i32, i32) {
    %c0_i32 = arith.constant 0 : i32
    %c0_i32_0 = arith.constant 0 : i32
    %c0_i32_1 = arith.constant 0 : i32
    return %c0_i32, %c0_i32_0 : i32, i32
  }
  func.func @transform_7(%arg0: i32) -> (i32, i32) {
    %c0_i32 = arith.constant 0 : i32
    %c0_i32_0 = arith.constant 0 : i32
    %c0_i32_1 = arith.constant 0 : i32
    return %c0_i32, %c0_i32_0 : i32, i32
  }
  func.func @transform_8(%arg0: i32) -> (i32, i32) {
    %c0_i32 = arith.constant 0 : i32
    %c0_i32_0 = arith.constant 0 : i32
    %c0_i32_1 = arith.constant 0 : i32
    return %c0_i32, %c0_i32_0 : i32, i32
  }
  func.func @transform_9(%arg0: i32) -> (i32, i32) {
    %c0_i32 = arith.constant 0 : i32
    %c0_i32_0 = arith.constant 0 : i32
    %c0_i32_1 = arith.constant 0 : i32
    return %c0_i32, %c0_i32_0 : i32, i32
  }
  func.func @transform_10(%arg0: i32) -> (i32, i32) {
    %c0_i32 = arith.constant 0 : i32
    %c0_i32_0 = arith.constant 0 : i32
    return %arg0, %c0_i32 : i32, i32
  }
  func.func @transform_11(%arg0: i32) -> (i32, i32) {
    %c0_i32 = arith.constant 0 : i32
    %c0_i32_0 = arith.constant 0 : i32
    return %arg0, %c0_i32 : i32, i32
  }
}

</mosaic_0001>

<llo_original>
// kernel: tpu_custom_call.1
$region0: #{tpu_custom_call.1}
  #allocation0 [shape = 'u32[]', space=smem, size = 0x4, offset = 0x4, fixed_abs, tag = 'smem constant byte address 0x4 - core index']
  #allocation1 [shape = 'u32[144,128]{1,0:T(1,128)}', space=vmem, size = 0x12000, scoped, tag = 'internal scratch']
  %s0 = inlined_call_operand.hbm [shape: bf16[16,896], index: 0, kind: input, shape index: {}]
  %s1 = inlined_call_operand.hbm [shape: f32[16,256], index: 1, kind: input, shape index: {}]
  %s2 = inlined_call_operand.hbm [shape: bf16[896,512], index: 2, kind: input, shape index: {}]
  %s3 = inlined_call_operand.hbm [shape: f32[1,512], index: 3, kind: input, shape index: {}]
  %s4 = inlined_call_operand.hbm [shape: bf16[512,640], index: 4, kind: input, shape index: {}]
  %s5 = inlined_call_operand.vmem [shape: f32[1,640], index: 5, kind: input, shape index: {}]
  %s6 = inlined_call_operand.hbm [shape: bf16[128,512], index: 6, kind: input, shape index: {}]
  %s7 = inlined_call_operand.hbm [shape: f32[1,512], index: 7, kind: input, shape index: {}]
  %s8 = inlined_call_operand.hbm [shape: bf16[512,896], index: 8, kind: input, shape index: {}]
  %s9 = inlined_call_operand.vmem [shape: f32[1,896], index: 9, kind: input, shape index: {}]
  %s10 = inlined_call_operand.hbm [shape: f32[16,896], index: 10, kind: output, shape index: {0}]
  %s11 = inlined_call_operand.hbm [shape: f32[16,1024], index: 11, kind: output, shape index: {1}]
  %12 = xla_tuple %s10, %s11
  %s13 = sld [smem:[#allocation0]]
  $region90: #{tpu_custom_call.1} parent=0
    _
  %s15 = ssub.s32 1, %s13
  %s16 = scalar_select 0, %s15, %s13
  $region1: #{tpu_custom_call.1} parent=0
    #allocation2 [shape = 'u8[28672]{0}', space=vmem, size = 0x7000, scoped, tag = 'input window, operand 0, single buffered']
    #allocation3 [shape = 's32[1]{0}', space=sflag, size = 0x4, scoped, tag = 'scoped memory for tpu_custom_call.1']
    #allocation4 [shape = 's32[1]{0}', space=sflag, size = 0x4, scoped, tag = 'scoped memory for tpu_custom_call.1']
    #allocation5 [shape = 'u8[16384]{0}', space=vmem, size = 0x4000, scoped, tag = 'input window, operand 1, single buffered']
    #allocation6 [shape = 's32[1]{0}', space=sflag, size = 0x4, scoped, tag = 'scoped memory for tpu_custom_call.1']
    #allocation7 [shape = 'u8[917504]{0}', space=vmem, size = 0xe0000, scoped, tag = 'input window, operand 2, single buffered']
    #allocation8 [shape = 'u8[2048]{0}', space=vmem, size = 0x800, scoped, tag = 'input window, operand 3, single buffered']
    #allocation9 [shape = 's32[1]{0}', space=sflag, size = 0x4, scoped, tag = 'scoped memory for tpu_custom_call.1']
    #allocation10 [shape = 'u8[655360]{0}', space=vmem, size = 0xa0000, scoped, tag = 'input window, operand 4, single buffered']
    #allocation11 [shape = 'u8[131072]{0}', space=vmem, size = 0x20000, scoped, tag = 'input window, operand 6, single buffered']
    #allocation12 [shape = 's32[1]{0}', space=sflag, size = 0x4, scoped, tag = 'scoped memory for tpu_custom_call.1']
    #allocation13 [shape = 'u8[2048]{0}', space=vmem, size = 0x800, scoped, tag = 'input window, operand 7, single buffered']
    #allocation14 [shape = 'u8[917504]{0}', space=vmem, size = 0xe0000, scoped, tag = 'input window, operand 8, single buffered']
    #allocation15 [shape = 's32[1]{0}', space=sflag, size = 0x4, scoped, tag = 'scoped memory for tpu_custom_call.1']
    #allocation16 [shape = 'u8[57344]{0}', space=vmem, size = 0xe000, scoped, tag = 'output window, operand 0, single buffered']
    #allocation17 [shape = 'u8[65536]{0}', space=vmem, size = 0x10000, scoped, tag = 'output window, operand 1, single buffered']
    #allocation18 [shape = 's32[1]{0}', space=sflag, size = 0x4, scoped, tag = 'scoped memory for tpu_custom_call.1']
    %17 = vsyncpa [#allocation3], 0
    %18 = vsyncpa [#allocation6], 0
    %19 = vsyncpa [#allocation9], 0
    %20 = vsyncpa [#allocation12], 0
    %21 = vsyncpa [#allocation15], 0
    %22 = vsyncpa [#allocation4], 0
    %23 = vsyncpa [#allocation18], 0
    // Predicated region
    $region2: #{tpu_custom_call.1} parent=1 // pred_check
      _
    $region3: #{tpu_custom_call.1} parent=1 // pred_check_branch
      %25 = sbr.rel (0) target = $region5
    $region4: #{tpu_custom_call.1} parent=1 // pred_region
      %s27 = ssub.s32 896, 896
      %28 = vsyncadd [#allocation3], %s27
      %s29 = sshll.u32 [#allocation2], 4
      %s30 = int_to_ptr.vmem [resolvable:$true] %s29
      %35 = dma.hbm_to_vmem [thread:$0]  %s0, 896, %s30, [#allocation3], 448, 448, 28
    $region5: #{tpu_custom_call.1} parent=1 // pred_fallthru
      _
    // Predicated region
    $region6: #{tpu_custom_call.1} parent=1 // pred_check
      _
    $region7: #{tpu_custom_call.1} parent=1 // pred_check_branch
      %37 = sbr.rel (0) target = $region9
    $region8: #{tpu_custom_call.1} parent=1 // pred_region
      %s39 = ssub.s32 512, 512
      %40 = vsyncadd [#allocation6], %s39
      %s41 = sshll.u32 [#allocation5], 4
      %s42 = int_to_ptr.vmem [resolvable:$true] %s41
      %47 = dma.hbm_to_vmem [thread:$0]  %s1, 512, %s42, [#allocation6], 256, 256, 16
    $region9: #{tpu_custom_call.1} parent=1 // pred_fallthru
      _
    // Predicated region
    $region10: #{tpu_custom_call.1} parent=1 // pred_check
      _
    $region11: #{tpu_custom_call.1} parent=1 // pred_check_branch
      %49 = sbr.rel (0) target = $region13
    $region12: #{tpu_custom_call.1} parent=1 // pred_region
      %s51 = ssub.s32 28672, 28672
      %52 = vsyncadd [#allocation6], %s51
      %s53 = sshll.u32 [#allocation7], 4
      %s54 = int_to_ptr.vmem [resolvable:$true] %s53
      %59 = dma.hbm_to_vmem [thread:$0]  %s2, 28672, %s54, [#allocation6], 256, 256, 16
    $region13: #{tpu_custom_call.1} parent=1 // pred_fallthru
      _
    // Predicated region
    $region14: #{tpu_custom_call.1} parent=1 // pred_check
      _
    $region15: #{tpu_custom_call.1} parent=1 // pred_check_branch
      %61 = sbr.rel (0) target = $region17
    $region16: #{tpu_custom_call.1} parent=1 // pred_region
      %s63 = ssub.s32 64, 64
      %64 = vsyncadd [#allocation9], %s63
      %s66 = sshll.u32 [#allocation8], 4
      %s67 = int_to_ptr.vmem [resolvable:$true] %s66
      %69 = dma.hbm_to_vmem [thread:$0]  %s3, 64, %s67, [#allocation9]
    $region17: #{tpu_custom_call.1} parent=1 // pred_fallthru
      _
    // Predicated region
    $region18: #{tpu_custom_call.1} parent=1 // pred_check
      _
    $region19: #{tpu_custom_call.1} parent=1 // pred_check_branch
      %71 = sbr.rel (0) target = $region21
    $region20: #{tpu_custom_call.1} parent=1 // pred_region
      %s73 = ssub.s32 20480, 20480
      %74 = vsyncadd [#allocation9], %s73
      %s75 = sshll.u32 [#allocation10], 4
      %s76 = int_to_ptr.vmem [resolvable:$true] %s75
      %81 = dma.hbm_to_vmem [thread:$0]  %s4, 20480, %s76, [#allocation9], 320, 320, 20
    $region21: #{tpu_custom_call.1} parent=1 // pred_fallthru
      _
    // Predicated region
    $region22: #{tpu_custom_call.1} parent=1 // pred_check
      _
    $region23: #{tpu_custom_call.1} parent=1 // pred_check_branch
      %83 = sbr.rel (0) target = $region25
    $region24: #{tpu_custom_call.1} parent=1 // pred_region
      _
    $region25: #{tpu_custom_call.1} parent=1 // pred_fallthru
      _
    // Predicated region
    $region26: #{tpu_custom_call.1} parent=1 // pred_check
      _
    $region27: #{tpu_custom_call.1} parent=1 // pred_check_branch
      %85 = sbr.rel (0) target = $region29
    $region28: #{tpu_custom_call.1} parent=1 // pred_region
      %s87 = ssub.s32 4096, 4096
      %88 = vsyncadd [#allocation12], %s87
      %s89 = sshll.u32 [#allocation11], 4
      %s90 = int_to_ptr.vmem [resolvable:$true] %s89
      %95 = dma.hbm_to_vmem [thread:$0]  %s6, 4096, %s90, [#allocation12], 256, 256, 16
    $region29: #{tpu_custom_call.1} parent=1 // pred_fallthru
      _
    // Predicated region
    $region30: #{tpu_custom_call.1} parent=1 // pred_check
      _
    $region31: #{tpu_custom_call.1} parent=1 // pred_check_branch
      %97 = sbr.rel (0) target = $region33
    $region32: #{tpu_custom_call.1} parent=1 // pred_region
      %s99 = ssub.s32 64, 64
      %100 = vsyncadd [#allocation12], %s99
      %s102 = sshll.u32 [#allocation13], 4
      %s103 = int_to_ptr.vmem [resolvable:$true] %s102
      %105 = dma.hbm_to_vmem [thread:$0]  %s7, 64, %s103, [#allocation12]
    $region33: #{tpu_custom_call.1} parent=1 // pred_fallthru
      _
    // Predicated region
    $region34: #{tpu_custom_call.1} parent=1 // pred_check
      _
    $region35: #{tpu_custom_call.1} parent=1 // pred_check_branch
      %107 = sbr.rel (0) target = $region37
    $region36: #{tpu_custom_call.1} parent=1 // pred_region
      %s109 = ssub.s32 28672, 28672
      %110 = vsyncadd [#allocation15], %s109
      %s111 = sshll.u32 [#allocation14], 4
      %s112 = int_to_ptr.vmem [resolvable:$true] %s111
      %117 = dma.hbm_to_vmem [thread:$0]  %s8, 28672, %s112, [#allocation15], 448, 448, 28
    $region37: #{tpu_custom_call.1} parent=1 // pred_fallthru
      _
    // Predicated region
    $region38: #{tpu_custom_call.1} parent=1 // pred_check
      _
    $region39: #{tpu_custom_call.1} parent=1 // pred_check_branch
      %119 = sbr.rel (0) target = $region41
    $region40: #{tpu_custom_call.1} parent=1 // pred_region
      _
    $region41: #{tpu_custom_call.1} parent=1 // pred_fallthru
      _
    // Predicated region
    $region42: #{tpu_custom_call.1} parent=1 // pred_check
      _
    $region43: #{tpu_custom_call.1} parent=1 // pred_check_branch
      %121 = sbr.rel (0) target = $region45
    $region44: #{tpu_custom_call.1} parent=1 // pred_region
      %122 = dma.done [#allocation3], 896
    $region45: #{tpu_custom_call.1} parent=1 // pred_fallthru
      _
    // Predicated region
    $region46: #{tpu_custom_call.1} parent=1 // pred_check
      _
    $region47: #{tpu_custom_call.1} parent=1 // pred_check_branch
      %124 = sbr.rel (0) target = $region49
    $region48: #{tpu_custom_call.1} parent=1 // pred_region
      %125 = dma.done [#allocation6], 512
    $region49: #{tpu_custom_call.1} parent=1 // pred_fallthru
      _
    // Predicated region
    $region50: #{tpu_custom_call.1} parent=1 // pred_check
      _
    $region51: #{tpu_custom_call.1} parent=1 // pred_check_branch
      %127 = sbr.rel (0) target = $region53
    $region52: #{tpu_custom_call.1} parent=1 // pred_region
      %128 = dma.done [#allocation6], 28672
    $region53: #{tpu_custom_call.1} parent=1 // pred_fallthru
      _
    // Predicated region
    $region54: #{tpu_custom_call.1} parent=1 // pred_check
      _
    $region55: #{tpu_custom_call.1} parent=1 // pred_check_branch
      %130 = sbr.rel (0) target = $region57
    $region56: #{tpu_custom_call.1} parent=1 // pred_region
      %131 = dma.done [#allocation9], 64
    $region57: #{tpu_custom_call.1} parent=1 // pred_fallthru
      _
    // Predicated region
    $region58: #{tpu_custom_call.1} parent=1 // pred_check
      _
    $region59: #{tpu_custom_call.1} parent=1 // pred_check_branch
      %133 = sbr.rel (0) target = $region61
    $region60: #{tpu_custom_call.1} parent=1 // pred_region
      %134 = dma.done [#allocation9], 20480
    $region61: #{tpu_custom_call.1} parent=1 // pred_fallthru
      _
    // Predicated region
    $region62: #{tpu_custom_call.1} parent=1 // pred_check
      _
    $region63: #{tpu_custom_call.1} parent=1 // pred_check_branch
      %136 = sbr.rel (0) target = $region65
    $region64: #{tpu_custom_call.1} parent=1 // pred_region
      %137 = dma.done [#allocation12], 4096
    $region65: #{tpu_custom_call.1} parent=1 // pred_fallthru
      _
    // Predicated region
    $region66: #{tpu_custom_call.1} parent=1 // pred_check
      _
    $region67: #{tpu_custom_call.1} parent=1 // pred_check_branch
      %139 = sbr.rel (0) target = $region69
    $region68: #{tpu_custom_call.1} parent=1 // pred_region
      %140 = dma.done [#allocation12], 64
    $region69: #{tpu_custom_call.1} parent=1 // pred_fallthru
      _
    // Predicated region
    $region70: #{tpu_custom_call.1} parent=1 // pred_check
      _
    $region71: #{tpu_custom_call.1} parent=1 // pred_check_branch
      %142 = sbr.rel (0) target = $region73
    $region72: #{tpu_custom_call.1} parent=1 // pred_region
      %143 = dma.done [#allocation15], 28672
    $region73: #{tpu_custom_call.1} parent=1 // pred_fallthru
      _
    %v145 = vld [vmem:[#allocation8] sm:$0xf]
    %v146 = vld [vmem:[%s5] sm:$0x1f]
    %v147 = vld [vmem:[#allocation13] sm:$0xf]
    %v148 = vld [vmem:[%s9] sm:$0xff]
    %v149 = vld [vmem:[#allocation5] sm:$0xff]
    %v150 = vld [vmem:[#allocation5 + $0x10] sm:$0xff]
    %v151 = vld [vmem:[#allocation5 + $0x8] sm:$0xff]
    %v152 = vld [vmem:[#allocation5 + $0x18] sm:$0xff]
    %v153 = vld [vmem:[#allocation2] sm:$0xff]
    %v154 = vld [vmem:[#allocation2 + $0x8] sm:$0xff]
    %v155 = vld [vmem:[#allocation2 + $0x10] sm:$0xff]
    %v156 = vld [vmem:[#allocation2 + $0x18] sm:$0xf]
    %v157 = vld [vmem:[#allocation2 + $0x1c] sm:$0xff]
    %v158 = vld [vmem:[#allocation2 + $0x24] sm:$0xff]
    %v159 = vld [vmem:[#allocation2 + $0x2c] sm:$0xff]
    %v160 = vld [vmem:[#allocation2 + $0x34] sm:$0xf]
    %v161 = vld [vmem:[#allocation7] sm:$0xff]
    %v162 = vld [vmem:[#allocation7 + $0x8] sm:$0xff]
    %v163 = vld [vmem:[#allocation7 + $0x10] sm:$0xff]
    %v164 = vld [vmem:[#allocation7 + $0x18] sm:$0xff]
    %v165 = vld [vmem:[#allocation7 + $0x20] sm:$0xff]
    %v166 = vld [vmem:[#allocation7 + $0x28] sm:$0xff]
    %v167 = vld [vmem:[#allocation7 + $0x30] sm:$0xff]
    %v168 = vld [vmem:[#allocation7 + $0x38] sm:$0xff]
    %v169 = vld [vmem:[#allocation7 + $0x40] sm:$0xff]
    %v170 = vld [vmem:[#allocation7 + $0x48] sm:$0xff]
    %v171 = vld [vmem:[#allocation7 + $0x50] sm:$0xff]
    %v172 = vld [vmem:[#allocation7 + $0x58] sm:$0xff]
    %v173 = vld [vmem:[#allocation7 + $0x60] sm:$0xff]
    %v174 = vld [vmem:[#allocation7 + $0x68] sm:$0xff]
    %v175 = vld [vmem:[#allocation7 + $0x70] sm:$0xff]
    %v176 = vld [vmem:[#allocation7 + $0x78] sm:$0xff]
    %v177 = vld [vmem:[#allocation7 + $0x80] sm:$0xff]
    %v178 = vld [vmem:[#allocation7 + $0x88] sm:$0xff]
    %v179 = vld [vmem:[#allocation7 + $0x90] sm:$0xff]
    %v180 = vld [vmem:[#allocation7 + $0x98] sm:$0xff]
    %v181 = vld [vmem:[#allocation7 + $0xa0] sm:$0xff]
    %v182 = vld [vmem:[#allocation7 + $0xa8] sm:$0xff]
    %v183 = vld [vmem:[#allocation7 + $0xb0] sm:$0xff]
    %v184 = vld [vmem:[#allocation7 + $0xb8] sm:$0xff]
    %v185 = vld [vmem:[#allocation7 + $0xc0] sm:$0xff]
    %v186 = vld [vmem:[#allocation7 + $0xc8] sm:$0xff]
    %v187 = vld [vmem:[#allocation7 + $0xd0] sm:$0xff]
    %v188 = vld [vmem:[#allocation7 + $0xd8] sm:$0xff]
    %v189 = vld [vmem:[#allocation7 + $0xe0] sm:$0xff]
    %v190 = vld [vmem:[#allocation7 + $0xe8] sm:$0xff]
    %v191 = vld [vmem:[#allocation7 + $0xf0] sm:$0xff]
    %v192 = vld [vmem:[#allocation7 + $0xf8] sm:$0xff]
    %v193 = vld [vmem:[#allocation7 + $0x100] sm:$0xff]
    %v194 = vld [vmem:[#allocation7 + $0x108] sm:$0xff]
    %v195 = vld [vmem:[#allocation7 + $0x110] sm:$0xff]
    %v196 = vld [vmem:[#allocation7 + $0x118] sm:$0xff]
    %v197 = vld [vmem:[#allocation7 + $0x120] sm:$0xff]
    %v198 = vld [vmem:[#allocation7 + $0x128] sm:$0xff]
    %v199 = vld [vmem:[#allocation7 + $0x130] sm:$0xff]
    %v200 = vld [vmem:[#allocation7 + $0x138] sm:$0xff]
    %v201 = vld [vmem:[#allocation7 + $0x140] sm:$0xff]
    %v202 = vld [vmem:[#allocation7 + $0x148] sm:$0xff]
    %v203 = vld [vmem:[#allocation7 + $0x150] sm:$0xff]
    %v204 = vld [vmem:[#allocation7 + $0x158] sm:$0xff]
    %v205 = vld [vmem:[#allocation7 + $0x160] sm:$0xff]
    %v206 = vld [vmem:[#allocation7 + $0x168] sm:$0xff]
    %v207 = vld [vmem:[#allocation7 + $0x170] sm:$0xff]
    %v208 = vld [vmem:[#allocation7 + $0x178] sm:$0xff]
    %v209 = vld [vmem:[#allocation7 + $0x180] sm:$0xff]
    %v210 = vld [vmem:[#allocation7 + $0x188] sm:$0xff]
    %v211 = vld [vmem:[#allocation7 + $0x190] sm:$0xff]
    %v212 = vld [vmem:[#allocation7 + $0x198] sm:$0xff]
    %v213 = vld [vmem:[#allocation7 + $0x1a0] sm:$0xff]
    %v214 = vld [vmem:[#allocation7 + $0x1a8] sm:$0xff]
    %v215 = vld [vmem:[#allocation7 + $0x1b0] sm:$0xff]
    %v216 = vld [vmem:[#allocation7 + $0x1b8] sm:$0xff]
    %v217 = vld [vmem:[#allocation7 + $0x1c0] sm:$0xff]
    %v218 = vld [vmem:[#allocation7 + $0x1c8] sm:$0xff]
    %v219 = vld [vmem:[#allocation7 + $0x1d0] sm:$0xff]
    %v220 = vld [vmem:[#allocation7 + $0x1d8] sm:$0xff]
    %v221 = vld [vmem:[#allocation7 + $0x1e0] sm:$0xff]
    %v222 = vld [vmem:[#allocation7 + $0x1e8] sm:$0xff]
    %v223 = vld [vmem:[#allocation7 + $0x1f0] sm:$0xff]
    %v224 = vld [vmem:[#allocation7 + $0x1f8] sm:$0xff]
    %v225 = vld [vmem:[#allocation7 + $0x200] sm:$0xff]
    %v226 = vld [vmem:[#allocation7 + $0x208] sm:$0xff]
    %v227 = vld [vmem:[#allocation7 + $0x210] sm:$0xff]
    %v228 = vld [vmem:[#allocation7 + $0x218] sm:$0xff]
    %v229 = vld [vmem:[#allocation7 + $0x220] sm:$0xff]
    %v230 = vld [vmem:[#allocation7 + $0x228] sm:$0xff]
    %v231 = vld [vmem:[#allocation7 + $0x230] sm:$0xff]
    %v232 = vld [vmem:[#allocation7 + $0x238] sm:$0xff]
    %v233 = vld [vmem:[#allocation7 + $0x240] sm:$0xff]
    %v234 = vld [vmem:[#allocation7 + $0x248] sm:$0xff]
    %v235 = vld [vmem:[#allocation7 + $0x250] sm:$0xff]
    %v236 = vld [vmem:[#allocation7 + $0x258] sm:$0xff]
    %v237 = vld [vmem:[#allocation7 + $0x260] sm:$0xff]
    %v238 = vld [vmem:[#allocation7 + $0x268] sm:$0xff]
    %v239 = vld [vmem:[#allocation7 + $0x270] sm:$0xff]
    %v240 = vld [vmem:[#allocation7 + $0x278] sm:$0xff]
    %v241 = vld [vmem:[#allocation7 + $0x280] sm:$0xff]
    %v242 = vld [vmem:[#allocation7 + $0x288] sm:$0xff]
    %v243 = vld [vmem:[#allocation7 + $0x290] sm:$0xff]
    %v244 = vld [vmem:[#allocation7 + $0x298] sm:$0xff]
    %v245 = vld [vmem:[#allocation7 + $0x2a0] sm:$0xff]
    %v246 = vld [vmem:[#allocation7 + $0x2a8] sm:$0xff]
    %v247 = vld [vmem:[#allocation7 + $0x2b0] sm:$0xff]
    %v248 = vld [vmem:[#allocation7 + $0x2b8] sm:$0xff]
    %v249 = vld [vmem:[#allocation7 + $0x2c0] sm:$0xff]
    %v250 = vld [vmem:[#allocation7 + $0x2c8] sm:$0xff]
    %v251 = vld [vmem:[#allocation7 + $0x2d0] sm:$0xff]
    %v252 = vld [vmem:[#allocation7 + $0x2d8] sm:$0xff]
    %v253 = vld [vmem:[#allocation7 + $0x2e0] sm:$0xff]
    %v254 = vld [vmem:[#allocation7 + $0x2e8] sm:$0xff]
    %v255 = vld [vmem:[#allocation7 + $0x2f0] sm:$0xff]
    %v256 = vld [vmem:[#allocation7 + $0x2f8] sm:$0xff]
    %v257 = vld [vmem:[#allocation7 + $0x300] sm:$0xff]
    %v258 = vld [vmem:[#allocation7 + $0x308] sm:$0xff]
    %v259 = vld [vmem:[#allocation7 + $0x310] sm:$0xff]
    %v260 = vld [vmem:[#allocation7 + $0x318] sm:$0xff]
    %v261 = vld [vmem:[#allocation7 + $0x320] sm:$0xff]
    %v262 = vld [vmem:[#allocation7 + $0x328] sm:$0xff]
    %v263 = vld [vmem:[#allocation7 + $0x330] sm:$0xff]
    %v264 = vld [vmem:[#allocation7 + $0x338] sm:$0xff]
    %v265 = vld [vmem:[#allocation7 + $0x340] sm:$0xff]
    %v266 = vld [vmem:[#allocation7 + $0x348] sm:$0xff]
    %v267 = vld [vmem:[#allocation7 + $0x350] sm:$0xff]
    %v268 = vld [vmem:[#allocation7 + $0x358] sm:$0xff]
    %v269 = vld [vmem:[#allocation7 + $0x360] sm:$0xff]
    %v270 = vld [vmem:[#allocation7 + $0x368] sm:$0xff]
    %v271 = vld [vmem:[#allocation7 + $0x370] sm:$0xff]
    %v272 = vld [vmem:[#allocation7 + $0x378] sm:$0xff]
    %v273 = vld [vmem:[#allocation7 + $0x380] sm:$0xff]
    %v274 = vld [vmem:[#allocation7 + $0x388] sm:$0xff]
    %v275 = vld [vmem:[#allocation7 + $0x390] sm:$0xff]
    %v276 = vld [vmem:[#allocation7 + $0x398] sm:$0xff]
    %v277 = vld [vmem:[#allocation7 + $0x3a0] sm:$0xff]
    %v278 = vld [vmem:[#allocation7 + $0x3a8] sm:$0xff]
    %v279 = vld [vmem:[#allocation7 + $0x3b0] sm:$0xff]
    %v280 = vld [vmem:[#allocation7 + $0x3b8] sm:$0xff]
    %v281 = vld [vmem:[#allocation7 + $0x3c0] sm:$0xff]
    %v282 = vld [vmem:[#allocation7 + $0x3c8] sm:$0xff]
    %v283 = vld [vmem:[#allocation7 + $0x3d0] sm:$0xff]
    %v284 = vld [vmem:[#allocation7 + $0x3d8] sm:$0xff]
    %v285 = vld [vmem:[#allocation7 + $0x3e0] sm:$0xff]
    %v286 = vld [vmem:[#allocation7 + $0x3e8] sm:$0xff]
    %v287 = vld [vmem:[#allocation7 + $0x3f0] sm:$0xff]
    %v288 = vld [vmem:[#allocation7 + $0x3f8] sm:$0xff]
    %v289 = vld [vmem:[#allocation7 + $0x400] sm:$0xff]
    %v290 = vld [vmem:[#allocation7 + $0x408] sm:$0xff]
    %v291 = vld [vmem:[#allocation7 + $0x410] sm:$0xff]
    %v292 = vld [vmem:[#allocation7 + $0x418] sm:$0xff]
    %v293 = vld [vmem:[#allocation7 + $0x420] sm:$0xff]
    %v294 = vld [vmem:[#allocation7 + $0x428] sm:$0xff]
    %v295 = vld [vmem:[#allocation7 + $0x430] sm:$0xff]
    %v296 = vld [vmem:[#allocation7 + $0x438] sm:$0xff]
    %v297 = vld [vmem:[#allocation7 + $0x440] sm:$0xff]
    %v298 = vld [vmem:[#allocation7 + $0x448] sm:$0xff]
    %v299 = vld [vmem:[#allocation7 + $0x450] sm:$0xff]
    %v300 = vld [vmem:[#allocation7 + $0x458] sm:$0xff]
    %v301 = vld [vmem:[#allocation7 + $0x460] sm:$0xff]
    %v302 = vld [vmem:[#allocation7 + $0x468] sm:$0xff]
    %v303 = vld [vmem:[#allocation7 + $0x470] sm:$0xff]
    %v304 = vld [vmem:[#allocation7 + $0x478] sm:$0xff]
    %v305 = vld [vmem:[#allocation7 + $0x480] sm:$0xff]
    %v306 = vld [vmem:[#allocation7 + $0x488] sm:$0xff]
    %v307 = vld [vmem:[#allocation7 + $0x490] sm:$0xff]
    %v308 = vld [vmem:[#allocation7 + $0x498] sm:$0xff]
    %v309 = vld [vmem:[#allocation7 + $0x4a0] sm:$0xff]
    %v310 = vld [vmem:[#allocation7 + $0x4a8] sm:$0xff]
    %v311 = vld [vmem:[#allocation7 + $0x4b0] sm:$0xff]
    %v312 = vld [vmem:[#allocation7 + $0x4b8] sm:$0xff]
    %v313 = vld [vmem:[#allocation7 + $0x4c0] sm:$0xff]
    %v314 = vld [vmem:[#allocation7 + $0x4c8] sm:$0xff]
    %v315 = vld [vmem:[#allocation7 + $0x4d0] sm:$0xff]
    %v316 = vld [vmem:[#allocation7 + $0x4d8] sm:$0xff]
    %v317 = vld [vmem:[#allocation7 + $0x4e0] sm:$0xff]
    %v318 = vld [vmem:[#allocation7 + $0x4e8] sm:$0xff]
    %v319 = vld [vmem:[#allocation7 + $0x4f0] sm:$0xff]
    %v320 = vld [vmem:[#allocation7 + $0x4f8] sm:$0xff]
    %v321 = vld [vmem:[#allocation7 + $0x500] sm:$0xff]
    %v322 = vld [vmem:[#allocation7 + $0x508] sm:$0xff]
    %v323 = vld [vmem:[#allocation7 + $0x510] sm:$0xff]
    %v324 = vld [vmem:[#allocation7 + $0x518] sm:$0xff]
    %v325 = vld [vmem:[#allocation7 + $0x520] sm:$0xff]
    %v326 = vld [vmem:[#allocation7 + $0x528] sm:$0xff]
    %v327 = vld [vmem:[#allocation7 + $0x530] sm:$0xff]
    %v328 = vld [vmem:[#allocation7 + $0x538] sm:$0xff]
    %v329 = vld [vmem:[#allocation7 + $0x540] sm:$0xff]
    %v330 = vld [vmem:[#allocation7 + $0x548] sm:$0xff]
    %v331 = vld [vmem:[#allocation7 + $0x550] sm:$0xff]
    %v332 = vld [vmem:[#allocation7 + $0x558] sm:$0xff]
    %v333 = vld [vmem:[#allocation7 + $0x560] sm:$0xff]
    %v334 = vld [vmem:[#allocation7 + $0x568] sm:$0xff]
    %v335 = vld [vmem:[#allocation7 + $0x570] sm:$0xff]
    %v336 = vld [vmem:[#allocation7 + $0x578] sm:$0xff]
    %v337 = vld [vmem:[#allocation7 + $0x580] sm:$0xff]
    %v338 = vld [vmem:[#allocation7 + $0x588] sm:$0xff]
    %v339 = vld [vmem:[#allocation7 + $0x590] sm:$0xff]
    %v340 = vld [vmem:[#allocation7 + $0x598] sm:$0xff]
    %v341 = vld [vmem:[#allocation7 + $0x5a0] sm:$0xff]
    %v342 = vld [vmem:[#allocation7 + $0x5a8] sm:$0xff]
    %v343 = vld [vmem:[#allocation7 + $0x5b0] sm:$0xff]
    %v344 = vld [vmem:[#allocation7 + $0x5b8] sm:$0xff]
    %v345 = vld [vmem:[#allocation7 + $0x5c0] sm:$0xff]
    %v346 = vld [vmem:[#allocation7 + $0x5c8] sm:$0xff]
    %v347 = vld [vmem:[#allocation7 + $0x5d0] sm:$0xff]
    %v348 = vld [vmem:[#allocation7 + $0x5d8] sm:$0xff]
    %v349 = vld [vmem:[#allocation7 + $0x5e0] sm:$0xff]
    %v350 = vld [vmem:[#allocation7 + $0x5e8] sm:$0xff]
    %v351 = vld [vmem:[#allocation7 + $0x5f0] sm:$0xff]
    %v352 = vld [vmem:[#allocation7 + $0x5f8] sm:$0xff]
    %v353 = vld [vmem:[#allocation7 + $0x600] sm:$0xff]
    %v354 = vld [vmem:[#allocation7 + $0x608] sm:$0xff]
    %v355 = vld [vmem:[#allocation7 + $0x610] sm:$0xff]
    %v356 = vld [vmem:[#allocation7 + $0x618] sm:$0xff]
    %v357 = vld [vmem:[#allocation7 + $0x620] sm:$0xff]
    %v358 = vld [vmem:[#allocation7 + $0x628] sm:$0xff]
    %v359 = vld [vmem:[#allocation7 + $0x630] sm:$0xff]
    %v360 = vld [vmem:[#allocation7 + $0x638] sm:$0xff]
    %v361 = vld [vmem:[#allocation7 + $0x640] sm:$0xff]
    %v362 = vld [vmem:[#allocation7 + $0x648] sm:$0xff]
    %v363 = vld [vmem:[#allocation7 + $0x650] sm:$0xff]
    %v364 = vld [vmem:[#allocation7 + $0x658] sm:$0xff]
    %v365 = vld [vmem:[#allocation7 + $0x660] sm:$0xff]
    %v366 = vld [vmem:[#allocation7 + $0x668] sm:$0xff]
    %v367 = vld [vmem:[#allocation7 + $0x670] sm:$0xff]
    %v368 = vld [vmem:[#allocation7 + $0x678] sm:$0xff]
    %v369 = vld [vmem:[#allocation7 + $0x680] sm:$0xff]
    %v370 = vld [vmem:[#allocation7 + $0x688] sm:$0xff]
    %v371 = vld [vmem:[#allocation7 + $0x690] sm:$0xff]
    %v372 = vld [vmem:[#allocation7 + $0x698] sm:$0xff]
    %v373 = vld [vmem:[#allocation7 + $0x6a0] sm:$0xff]
    %v374 = vld [vmem:[#allocation7 + $0x6a8] sm:$0xff]
    %v375 = vld [vmem:[#allocation7 + $0x6b0] sm:$0xff]
    %v376 = vld [vmem:[#allocation7 + $0x6b8] sm:$0xff]
    %v377 = vld [vmem:[#allocation7 + $0x6c0] sm:$0xff]
    %v378 = vld [vmem:[#allocation7 + $0x6c8] sm:$0xff]
    %v379 = vld [vmem:[#allocation7 + $0x6d0] sm:$0xff]
    %v380 = vld [vmem:[#allocation7 + $0x6d8] sm:$0xff]
    %v381 = vld [vmem:[#allocation7 + $0x6e0] sm:$0xff]
    %v382 = vld [vmem:[#allocation7 + $0x6e8] sm:$0xff]
    %v383 = vld [vmem:[#allocation7 + $0x6f0] sm:$0xff]
    %v384 = vld [vmem:[#allocation7 + $0x6f8] sm:$0xff]
    %v386 = vlaneseq
    %v387 = vshrl.u32 %v386, 7
    %v388 = vsub.s32 0, %v387
    %v389 = vrot.slane %v145, %v388
    %v390 = vlaneseq
    %v391 = vshrl.u32 %v390, 7
    %v392 = vsub.s32 1, %v391
    %v393 = vrot.slane %v145, %v392
    %v394 = vlaneseq
    %v395 = vshrl.u32 %v394, 7
    %v396 = vsub.s32 2, %v395
    %v397 = vrot.slane %v145, %v396
    %v398 = vlaneseq
    %v399 = vshrl.u32 %v398, 7
    %v400 = vsub.s32 3, %v399
    %v401 = vrot.slane %v145, %v400
    %v414 = vunpack.c.l.b16 %v153
    %v415 = vunpack.c.h.b16 %v153
    %v416 = vunpack.c.l.b16 %v154
    %v417 = vunpack.c.h.b16 %v154
    %v418 = vunpack.c.l.b16 %v155
    %v419 = vunpack.c.h.b16 %v155
    %v420 = vunpack.c.l.b16 %v156
    %v421 = vunpack.c.l.b16 %v157
    %v422 = vunpack.c.h.b16 %v157
    %v423 = vunpack.c.l.b16 %v158
    %v424 = vunpack.c.h.b16 %v158
    %v425 = vunpack.c.l.b16 %v159
    %v426 = vunpack.c.h.b16 %v159
    %v427 = vunpack.c.l.b16 %v160
    %v428 = vpack.c.b16 %v421, %v414
    %v429 = vpack.c.b16 %v422, %v415
    %v430 = vpack.c.b16 %v423, %v416
    %v431 = vpack.c.b16 %v424, %v417
    %v432 = vpack.c.b16 %v425, %v418
    %v433 = vpack.c.b16 %v426, %v419
    %v434 = vpack.c.b16 %v427, %v420
    %v666 = vunpack.c.l.b16 %v161
    %v667 = vunpack.c.h.b16 %v161
    %v668 = vunpack.c.l.b16 %v162
    %v669 = vunpack.c.h.b16 %v162
    %v670 = vunpack.c.l.b16 %v163
    %v671 = vunpack.c.h.b16 %v163
    %v672 = vunpack.c.l.b16 %v164
    %v673 = vunpack.c.h.b16 %v164
    %v674 = vunpack.c.l.b16 %v165
    %v675 = vunpack.c.h.b16 %v165
    %v676 = vunpack.c.l.b16 %v166
    %v677 = vunpack.c.h.b16 %v166
    %v678 = vunpack.c.l.b16 %v167
    %v679 = vunpack.c.h.b16 %v167
    %v680 = vunpack.c.l.b16 %v168
    %v681 = vunpack.c.h.b16 %v168
    %v682 = vunpack.c.l.b16 %v169
    %v683 = vunpack.c.h.b16 %v169
    %v684 = vunpack.c.l.b16 %v170
    %v685 = vunpack.c.h.b16 %v170
    %v686 = vunpack.c.l.b16 %v171
    %v687 = vunpack.c.h.b16 %v171
    %v688 = vunpack.c.l.b16 %v172
    %v689 = vunpack.c.h.b16 %v172
    %v690 = vunpack.c.l.b16 %v173
    %v691 = vunpack.c.h.b16 %v173
    %v692 = vunpack.c.l.b16 %v174
    %v693 = vunpack.c.h.b16 %v174
    %v694 = vunpack.c.l.b16 %v175
    %v695 = vunpack.c.h.b16 %v175
    %v696 = vunpack.c.l.b16 %v176
    %v697 = vunpack.c.h.b16 %v176
    %v698 = vunpack.c.l.b16 %v177
    %v699 = vunpack.c.h.b16 %v177
    %v700 = vunpack.c.l.b16 %v178
    %v701 = vunpack.c.h.b16 %v178
    %v702 = vunpack.c.l.b16 %v179
    %v703 = vunpack.c.h.b16 %v179
    %v704 = vunpack.c.l.b16 %v180
    %v705 = vunpack.c.h.b16 %v180
    %v706 = vunpack.c.l.b16 %v181
    %v707 = vunpack.c.h.b16 %v181
    %v708 = vunpack.c.l.b16 %v182
    %v709 = vunpack.c.h.b16 %v182
    %v710 = vunpack.c.l.b16 %v183
    %v711 = vunpack.c.h.b16 %v183
    %v712 = vunpack.c.l.b16 %v184
    %v713 = vunpack.c.h.b16 %v184
    %v714 = vunpack.c.l.b16 %v185
    %v715 = vunpack.c.h.b16 %v185
    %v716 = vunpack.c.l.b16 %v186
    %v717 = vunpack.c.h.b16 %v186
    %v718 = vunpack.c.l.b16 %v187
    %v719 = vunpack.c.h.b16 %v187
    %v720 = vunpack.c.l.b16 %v188
    %v721 = vunpack.c.h.b16 %v188
    %v722 = vunpack.c.l.b16 %v189
    %v723 = vunpack.c.h.b16 %v189
    %v724 = vunpack.c.l.b16 %v190
    %v725 = vunpack.c.h.b16 %v190
    %v726 = vunpack.c.l.b16 %v191
    %v727 = vunpack.c.h.b16 %v191
    %v728 = vunpack.c.l.b16 %v192
    %v729 = vunpack.c.h.b16 %v192
    %v730 = vunpack.c.l.b16 %v193
    %v731 = vunpack.c.h.b16 %v193
    %v732 = vunpack.c.l.b16 %v194
    %v733 = vunpack.c.h.b16 %v194
    %v734 = vunpack.c.l.b16 %v195
    %v735 = vunpack.c.h.b16 %v195
    %v736 = vunpack.c.l.b16 %v196
    %v737 = vunpack.c.h.b16 %v196
    %v738 = vunpack.c.l.b16 %v197
    %v739 = vunpack.c.h.b16 %v197
    %v740 = vunpack.c.l.b16 %v198
    %v741 = vunpack.c.h.b16 %v198
    %v742 = vunpack.c.l.b16 %v199
    %v743 = vunpack.c.h.b16 %v199
    %v744 = vunpack.c.l.b16 %v200
    %v745 = vunpack.c.h.b16 %v200
    %v746 = vunpack.c.l.b16 %v201
    %v747 = vunpack.c.h.b16 %v201
    %v748 = vunpack.c.l.b16 %v202
    %v749 = vunpack.c.h.b16 %v202
    %v750 = vunpack.c.l.b16 %v203
    %v751 = vunpack.c.h.b16 %v203
    %v752 = vunpack.c.l.b16 %v204
    %v753 = vunpack.c.h.b16 %v204
    %v754 = vunpack.c.l.b16 %v205
    %v755 = vunpack.c.h.b16 %v205
    %v756 = vunpack.c.l.b16 %v206
    %v757 = vunpack.c.h.b16 %v206
    %v758 = vunpack.c.l.b16 %v207
    %v759 = vunpack.c.h.b16 %v207
    %v760 = vunpack.c.l.b16 %v208
    %v761 = vunpack.c.h.b16 %v208
    %v762 = vunpack.c.l.b16 %v209
    %v763 = vunpack.c.h.b16 %v209
    %v764 = vunpack.c.l.b16 %v210
    %v765 = vunpack.c.h.b16 %v210
    %v766 = vunpack.c.l.b16 %v211
    %v767 = vunpack.c.h.b16 %v211
    %v768 = vunpack.c.l.b16 %v212
    %v769 = vunpack.c.h.b16 %v212
    %v770 = vunpack.c.l.b16 %v213
    %v771 = vunpack.c.h.b16 %v213
    %v772 = vunpack.c.l.b16 %v214
    %v773 = vunpack.c.h.b16 %v214
    %v774 = vunpack.c.l.b16 %v215
    %v775 = vunpack.c.h.b16 %v215
    %v776 = vunpack.c.l.b16 %v216
    %v777 = vunpack.c.h.b16 %v216
    %v778 = vunpack.c.l.b16 %v217
    %v779 = vunpack.c.h.b16 %v217
    %v780 = vunpack.c.l.b16 %v218
    %v781 = vunpack.c.h.b16 %v218
    %v782 = vunpack.c.l.b16 %v219
    %v783 = vunpack.c.h.b16 %v219
    %v784 = vunpack.c.l.b16 %v220
    %v785 = vunpack.c.h.b16 %v220
    %v786 = vunpack.c.l.b16 %v221
    %v787 = vunpack.c.h.b16 %v221
    %v788 = vunpack.c.l.b16 %v222
    %v789 = vunpack.c.h.b16 %v222
    %v790 = vunpack.c.l.b16 %v223
    %v791 = vunpack.c.h.b16 %v223
    %v792 = vunpack.c.l.b16 %v224
    %v793 = vunpack.c.h.b16 %v224
    %v794 = vunpack.c.l.b16 %v225
    %v795 = vunpack.c.h.b16 %v225
    %v796 = vunpack.c.l.b16 %v226
    %v797 = vunpack.c.h.b16 %v226
    %v798 = vunpack.c.l.b16 %v227
    %v799 = vunpack.c.h.b16 %v227
    %v800 = vunpack.c.l.b16 %v228
    %v801 = vunpack.c.h.b16 %v228
    %v802 = vunpack.c.l.b16 %v229
    %v803 = vunpack.c.h.b16 %v229
    %v804 = vunpack.c.l.b16 %v230
    %v805 = vunpack.c.h.b16 %v230
    %v806 = vunpack.c.l.b16 %v231
    %v807 = vunpack.c.h.b16 %v231
    %v808 = vunpack.c.l.b16 %v232
    %v809 = vunpack.c.h.b16 %v232
    %v810 = vunpack.c.l.b16 %v233
    %v811 = vunpack.c.h.b16 %v233
    %v812 = vunpack.c.l.b16 %v234
    %v813 = vunpack.c.h.b16 %v234
    %v814 = vunpack.c.l.b16 %v235
    %v815 = vunpack.c.h.b16 %v235
    %v816 = vunpack.c.l.b16 %v236
    %v817 = vunpack.c.h.b16 %v236
    %v818 = vunpack.c.l.b16 %v237
    %v819 = vunpack.c.h.b16 %v237
    %v820 = vunpack.c.l.b16 %v238
    %v821 = vunpack.c.h.b16 %v238
    %v822 = vunpack.c.l.b16 %v239
    %v823 = vunpack.c.h.b16 %v239
    %v824 = vunpack.c.l.b16 %v240
    %v825 = vunpack.c.h.b16 %v240
    %v826 = vunpack.c.l.b16 %v241
    %v827 = vunpack.c.h.b16 %v241
    %v828 = vunpack.c.l.b16 %v242
    %v829 = vunpack.c.h.b16 %v242
    %v830 = vunpack.c.l.b16 %v243
    %v831 = vunpack.c.h.b16 %v243
    %v832 = vunpack.c.l.b16 %v244
    %v833 = vunpack.c.h.b16 %v244
    %v834 = vunpack.c.l.b16 %v245
    %v835 = vunpack.c.h.b16 %v245
    %v836 = vunpack.c.l.b16 %v246
    %v837 = vunpack.c.h.b16 %v246
    %v838 = vunpack.c.l.b16 %v247
    %v839 = vunpack.c.h.b16 %v247
    %v840 = vunpack.c.l.b16 %v248
    %v841 = vunpack.c.h.b16 %v248
    %v842 = vunpack.c.l.b16 %v249
    %v843 = vunpack.c.h.b16 %v249
    %v844 = vunpack.c.l.b16 %v250
    %v845 = vunpack.c.h.b16 %v250
    %v846 = vunpack.c.l.b16 %v251
    %v847 = vunpack.c.h.b16 %v251
    %v848 = vunpack.c.l.b16 %v252
    %v849 = vunpack.c.h.b16 %v252
    %v850 = vunpack.c.l.b16 %v253
    %v851 = vunpack.c.h.b16 %v253
    %v852 = vunpack.c.l.b16 %v254
    %v853 = vunpack.c.h.b16 %v254
    %v854 = vunpack.c.l.b16 %v255
    %v855 = vunpack.c.h.b16 %v255
    %v856 = vunpack.c.l.b16 %v256
    %v857 = vunpack.c.h.b16 %v256
    %v858 = vunpack.c.l.b16 %v257
    %v859 = vunpack.c.h.b16 %v257
    %v860 = vunpack.c.l.b16 %v258
    %v861 = vunpack.c.h.b16 %v258
    %v862 = vunpack.c.l.b16 %v259
    %v863 = vunpack.c.h.b16 %v259
    %v864 = vunpack.c.l.b16 %v260
    %v865 = vunpack.c.h.b16 %v260
    %v866 = vunpack.c.l.b16 %v261
    %v867 = vunpack.c.h.b16 %v261
    %v868 = vunpack.c.l.b16 %v262
    %v869 = vunpack.c.h.b16 %v262
    %v870 = vunpack.c.l.b16 %v263
    %v871 = vunpack.c.h.b16 %v263
    %v872 = vunpack.c.l.b16 %v264
    %v873 = vunpack.c.h.b16 %v264
    %v874 = vunpack.c.l.b16 %v265
    %v875 = vunpack.c.h.b16 %v265
    %v876 = vunpack.c.l.b16 %v266
    %v877 = vunpack.c.h.b16 %v266
    %v878 = vunpack.c.l.b16 %v267
    %v879 = vunpack.c.h.b16 %v267
    %v880 = vunpack.c.l.b16 %v268
    %v881 = vunpack.c.h.b16 %v268
    %v882 = vunpack.c.l.b16 %v269
    %v883 = vunpack.c.h.b16 %v269
    %v884 = vunpack.c.l.b16 %v270
    %v885 = vunpack.c.h.b16 %v270
    %v886 = vunpack.c.l.b16 %v271
    %v887 = vunpack.c.h.b16 %v271
    %v888 = vunpack.c.l.b16 %v272
    %v889 = vunpack.c.h.b16 %v272
    %v890 = vunpack.c.l.b16 %v273
    %v891 = vunpack.c.h.b16 %v273
    %v892 = vunpack.c.l.b16 %v274
    %v893 = vunpack.c.h.b16 %v274
    %v894 = vunpack.c.l.b16 %v275
    %v895 = vunpack.c.h.b16 %v275
    %v896 = vunpack.c.l.b16 %v276
    %v897 = vunpack.c.h.b16 %v276
    %v898 = vunpack.c.l.b16 %v277
    %v899 = vunpack.c.h.b16 %v277
    %v900 = vunpack.c.l.b16 %v278
    %v901 = vunpack.c.h.b16 %v278
    %v902 = vunpack.c.l.b16 %v279
    %v903 = vunpack.c.h.b16 %v279
    %v904 = vunpack.c.l.b16 %v280
    %v905 = vunpack.c.h.b16 %v280
    %v906 = vunpack.c.l.b16 %v281
    %v907 = vunpack.c.h.b16 %v281
    %v908 = vunpack.c.l.b16 %v282
    %v909 = vunpack.c.h.b16 %v282
    %v910 = vunpack.c.l.b16 %v283
    %v911 = vunpack.c.h.b16 %v283
    %v912 = vunpack.c.l.b16 %v284
    %v913 = vunpack.c.h.b16 %v284
    %v914 = vunpack.c.l.b16 %v285
    %v915 = vunpack.c.h.b16 %v285
    %v916 = vunpack.c.l.b16 %v286
    %v917 = vunpack.c.h.b16 %v286
    %v918 = vunpack.c.l.b16 %v287
    %v919 = vunpack.c.h.b16 %v287
    %v920 = vunpack.c.l.b16 %v288
    %v921 = vunpack.c.h.b16 %v288
    %v922 = vunpack.c.l.b16 %v289
    %v923 = vunpack.c.h.b16 %v289
    %v924 = vunpack.c.l.b16 %v290
    %v925 = vunpack.c.h.b16 %v290
    %v926 = vunpack.c.l.b16 %v291
    %v927 = vunpack.c.h.b16 %v291
    %v928 = vunpack.c.l.b16 %v292
    %v929 = vunpack.c.h.b16 %v292
    %v930 = vunpack.c.l.b16 %v293
    %v931 = vunpack.c.h.b16 %v293
    %v932 = vunpack.c.l.b16 %v294
    %v933 = vunpack.c.h.b16 %v294
    %v934 = vunpack.c.l.b16 %v295
    %v935 = vunpack.c.h.b16 %v295
    %v936 = vunpack.c.l.b16 %v296
    %v937 = vunpack.c.h.b16 %v296
    %v938 = vunpack.c.l.b16 %v297
    %v939 = vunpack.c.h.b16 %v297
    %v940 = vunpack.c.l.b16 %v298
    %v941 = vunpack.c.h.b16 %v298
    %v942 = vunpack.c.l.b16 %v299
    %v943 = vunpack.c.h.b16 %v299
    %v944 = vunpack.c.l.b16 %v300
    %v945 = vunpack.c.h.b16 %v300
    %v946 = vunpack.c.l.b16 %v301
    %v947 = vunpack.c.h.b16 %v301
    %v948 = vunpack.c.l.b16 %v302
    %v949 = vunpack.c.h.b16 %v302
    %v950 = vunpack.c.l.b16 %v303
    %v951 = vunpack.c.h.b16 %v303
    %v952 = vunpack.c.l.b16 %v304
    %v953 = vunpack.c.h.b16 %v304
    %v954 = vunpack.c.l.b16 %v305
    %v955 = vunpack.c.h.b16 %v305
    %v956 = vunpack.c.l.b16 %v306
    %v957 = vunpack.c.h.b16 %v306
    %v958 = vunpack.c.l.b16 %v307
    %v959 = vunpack.c.h.b16 %v307
    %v960 = vunpack.c.l.b16 %v308
    %v961 = vunpack.c.h.b16 %v308
    %v962 = vunpack.c.l.b16 %v309
    %v963 = vunpack.c.h.b16 %v309
    %v964 = vunpack.c.l.b16 %v310
    %v965 = vunpack.c.h.b16 %v310
    %v966 = vunpack.c.l.b16 %v311
    %v967 = vunpack.c.h.b16 %v311
    %v968 = vunpack.c.l.b16 %v312
    %v969 = vunpack.c.h.b16 %v312
    %v970 = vunpack.c.l.b16 %v313
    %v971 = vunpack.c.h.b16 %v313
    %v972 = vunpack.c.l.b16 %v314
    %v973 = vunpack.c.h.b16 %v314
    %v974 = vunpack.c.l.b16 %v315
    %v975 = vunpack.c.h.b16 %v315
    %v976 = vunpack.c.l.b16 %v316
    %v977 = vunpack.c.h.b16 %v316
    %v978 = vunpack.c.l.b16 %v317
    %v979 = vunpack.c.h.b16 %v317
    %v980 = vunpack.c.l.b16 %v318
    %v981 = vunpack.c.h.b16 %v318
    %v982 = vunpack.c.l.b16 %v319
    %v983 = vunpack.c.h.b16 %v319
    %v984 = vunpack.c.l.b16 %v320
    %v985 = vunpack.c.h.b16 %v320
    %v986 = vunpack.c.l.b16 %v321
    %v987 = vunpack.c.h.b16 %v321
    %v988 = vunpack.c.l.b16 %v322
    %v989 = vunpack.c.h.b16 %v322
    %v990 = vunpack.c.l.b16 %v323
    %v991 = vunpack.c.h.b16 %v323
    %v992 = vunpack.c.l.b16 %v324
    %v993 = vunpack.c.h.b16 %v324
    %v994 = vunpack.c.l.b16 %v325
    %v995 = vunpack.c.h.b16 %v325
    %v996 = vunpack.c.l.b16 %v326
    %v997 = vunpack.c.h.b16 %v326
    %v998 = vunpack.c.l.b16 %v327
    %v999 = vunpack.c.h.b16 %v327
    %v1000 = vunpack.c.l.b16 %v328
    %v1001 = vunpack.c.h.b16 %v328
    %v1002 = vunpack.c.l.b16 %v329
    %v1003 = vunpack.c.h.b16 %v329
    %v1004 = vunpack.c.l.b16 %v330
    %v1005 = vunpack.c.h.b16 %v330
    %v1006 = vunpack.c.l.b16 %v331
    %v1007 = vunpack.c.h.b16 %v331
    %v1008 = vunpack.c.l.b16 %v332
    %v1009 = vunpack.c.h.b16 %v332
    %v1010 = vunpack.c.l.b16 %v333
    %v1011 = vunpack.c.h.b16 %v333
    %v1012 = vunpack.c.l.b16 %v334
    %v1013 = vunpack.c.h.b16 %v334
    %v1014 = vunpack.c.l.b16 %v335
    %v1015 = vunpack.c.h.b16 %v335
    %v1016 = vunpack.c.l.b16 %v336
    %v1017 = vunpack.c.h.b16 %v336
    %v1018 = vunpack.c.l.b16 %v337
    %v1019 = vunpack.c.h.b16 %v337
    %v1020 = vunpack.c.l.b16 %v338
    %v1021 = vunpack.c.h.b16 %v338
    %v1022 = vunpack.c.l.b16 %v339
    %v1023 = vunpack.c.h.b16 %v339
    %v1024 = vunpack.c.l.b16 %v340
    %v1025 = vunpack.c.h.b16 %v340
    %v1026 = vunpack.c.l.b16 %v341
    %v1027 = vunpack.c.h.b16 %v341
    %v1028 = vunpack.c.l.b16 %v342
    %v1029 = vunpack.c.h.b16 %v342
    %v1030 = vunpack.c.l.b16 %v343
    %v1031 = vunpack.c.h.b16 %v343
    %v1032 = vunpack.c.l.b16 %v344
    %v1033 = vunpack.c.h.b16 %v344
    %v1034 = vunpack.c.l.b16 %v345
    %v1035 = vunpack.c.h.b16 %v345
    %v1036 = vunpack.c.l.b16 %v346
    %v1037 = vunpack.c.h.b16 %v346
    %v1038 = vunpack.c.l.b16 %v347
    %v1039 = vunpack.c.h.b16 %v347
    %v1040 = vunpack.c.l.b16 %v348
    %v1041 = vunpack.c.h.b16 %v348
    %v1042 = vunpack.c.l.b16 %v349
    %v1043 = vunpack.c.h.b16 %v349
    %v1044 = vunpack.c.l.b16 %v350
    %v1045 = vunpack.c.h.b16 %v350
    %v1046 = vunpack.c.l.b16 %v351
    %v1047 = vunpack.c.h.b16 %v351
    %v1048 = vunpack.c.l.b16 %v352
    %v1049 = vunpack.c.h.b16 %v352
    %v1050 = vunpack.c.l.b16 %v353
    %v1051 = vunpack.c.h.b16 %v353
    %v1052 = vunpack.c.l.b16 %v354
    %v1053 = vunpack.c.h.b16 %v354
    %v1054 = vunpack.c.l.b16 %v355
    %v1055 = vunpack.c.h.b16 %v355
    %v1056 = vunpack.c.l.b16 %v356
    %v1057 = vunpack.c.h.b16 %v356
    %v1058 = vunpack.c.l.b16 %v357
    %v1059 = vunpack.c.h.b16 %v357
    %v1060 = vunpack.c.l.b16 %v358
    %v1061 = vunpack.c.h.b16 %v358
    %v1062 = vunpack.c.l.b16 %v359
    %v1063 = vunpack.c.h.b16 %v359
    %v1064 = vunpack.c.l.b16 %v360
    %v1065 = vunpack.c.h.b16 %v360
    %v1066 = vunpack.c.l.b16 %v361
    %v1067 = vunpack.c.h.b16 %v361
    %v1068 = vunpack.c.l.b16 %v362
    %v1069 = vunpack.c.h.b16 %v362
    %v1070 = vunpack.c.l.b16 %v363
    %v1071 = vunpack.c.h.b16 %v363
    %v1072 = vunpack.c.l.b16 %v364
    %v1073 = vunpack.c.h.b16 %v364
    %v1074 = vunpack.c.l.b16 %v365
    %v1075 = vunpack.c.h.b16 %v365
    %v1076 = vunpack.c.l.b16 %v366
    %v1077 = vunpack.c.h.b16 %v366
    %v1078 = vunpack.c.l.b16 %v367
    %v1079 = vunpack.c.h.b16 %v367
    %v1080 = vunpack.c.l.b16 %v368
    %v1081 = vunpack.c.h.b16 %v368
    %v1082 = vunpack.c.l.b16 %v369
    %v1083 = vunpack.c.h.b16 %v369
    %v1084 = vunpack.c.l.b16 %v370
    %v1085 = vunpack.c.h.b16 %v370
    %v1086 = vunpack.c.l.b16 %v371
    %v1087 = vunpack.c.h.b16 %v371
    %v1088 = vunpack.c.l.b16 %v372
    %v1089 = vunpack.c.h.b16 %v372
    %v1090 = vunpack.c.l.b16 %v373
    %v1091 = vunpack.c.h.b16 %v373
    %v1092 = vunpack.c.l.b16 %v374
    %v1093 = vunpack.c.h.b16 %v374
    %v1094 = vunpack.c.l.b16 %v375
    %v1095 = vunpack.c.h.b16 %v375
    %v1096 = vunpack.c.l.b16 %v376
    %v1097 = vunpack.c.h.b16 %v376
    %v1098 = vunpack.c.l.b16 %v377
    %v1099 = vunpack.c.h.b16 %v377
    %v1100 = vunpack.c.l.b16 %v378
    %v1101 = vunpack.c.h.b16 %v378
    %v1102 = vunpack.c.l.b16 %v379
    %v1103 = vunpack.c.h.b16 %v379
    %v1104 = vunpack.c.l.b16 %v380
    %v1105 = vunpack.c.h.b16 %v380
    %v1106 = vunpack.c.l.b16 %v381
    %v1107 = vunpack.c.h.b16 %v381
    %v1108 = vunpack.c.l.b16 %v382
    %v1109 = vunpack.c.h.b16 %v382
    %v1110 = vunpack.c.l.b16 %v383
    %v1111 = vunpack.c.h.b16 %v383
    %v1112 = vunpack.c.l.b16 %v384
    %v1113 = vunpack.c.h.b16 %v384
    %v1114 = vpack.c.b16 %v670, %v666
    %v1115 = vpack.c.b16 %v671, %v667
    %v1116 = vpack.c.b16 %v672, %v668
    %v1117 = vpack.c.b16 %v673, %v669
    %v1118 = vpack.c.b16 %v678, %v674
    %v1119 = vpack.c.b16 %v679, %v675
    %v1120 = vpack.c.b16 %v680, %v676
    %v1121 = vpack.c.b16 %v681, %v677
    %v1122 = vpack.c.b16 %v686, %v682
    %v1123 = vpack.c.b16 %v687, %v683
    %v1124 = vpack.c.b16 %v688, %v684
    %v1125 = vpack.c.b16 %v689, %v685
    %v1126 = vpack.c.b16 %v694, %v690
    %v1127 = vpack.c.b16 %v695, %v691
    %v1128 = vpack.c.b16 %v696, %v692
    %v1129 = vpack.c.b16 %v697, %v693
    %v1130 = vpack.c.b16 %v702, %v698
    %v1131 = vpack.c.b16 %v703, %v699
    %v1132 = vpack.c.b16 %v704, %v700
    %v1133 = vpack.c.b16 %v705, %v701
    %v1134 = vpack.c.b16 %v710, %v706
    %v1135 = vpack.c.b16 %v711, %v707
    %v1136 = vpack.c.b16 %v712, %v708
    %v1137 = vpack.c.b16 %v713, %v709
    %v1138 = vpack.c.b16 %v718, %v714
    %v1139 = vpack.c.b16 %v719, %v715
    %v1140 = vpack.c.b16 %v720, %v716
    %v1141 = vpack.c.b16 %v721, %v717
    %v1142 = vpack.c.b16 %v726, %v722
    %v1143 = vpack.c.b16 %v727, %v723
    %v1144 = vpack.c.b16 %v728, %v724
    %v1145 = vpack.c.b16 %v729, %v725
    %v1146 = vpack.c.b16 %v734, %v730
    %v1147 = vpack.c.b16 %v735, %v731
    %v1148 = vpack.c.b16 %v736, %v732
    %v1149 = vpack.c.b16 %v737, %v733
    %v1150 = vpack.c.b16 %v742, %v738
    %v1151 = vpack.c.b16 %v743, %v739
    %v1152 = vpack.c.b16 %v744, %v740
    %v1153 = vpack.c.b16 %v745, %v741
    %v1154 = vpack.c.b16 %v750, %v746
    %v1155 = vpack.c.b16 %v751, %v747
    %v1156 = vpack.c.b16 %v752, %v748
    %v1157 = vpack.c.b16 %v753, %v749
    %v1158 = vpack.c.b16 %v758, %v754
    %v1159 = vpack.c.b16 %v759, %v755
    %v1160 = vpack.c.b16 %v760, %v756
    %v1161 = vpack.c.b16 %v761, %v757
    %v1162 = vpack.c.b16 %v766, %v762
    %v1163 = vpack.c.b16 %v767, %v763
    %v1164 = vpack.c.b16 %v768, %v764
    %v1165 = vpack.c.b16 %v769, %v765
    %v1166 = vpack.c.b16 %v774, %v770
    %v1167 = vpack.c.b16 %v775, %v771
    %v1168 = vpack.c.b16 %v776, %v772
    %v1169 = vpack.c.b16 %v777, %v773
    %v1170 = vpack.c.b16 %v782, %v778
    %v1171 = vpack.c.b16 %v783, %v779
    %v1172 = vpack.c.b16 %v784, %v780
    %v1173 = vpack.c.b16 %v785, %v781
    %v1174 = vpack.c.b16 %v790, %v786
    %v1175 = vpack.c.b16 %v791, %v787
    %v1176 = vpack.c.b16 %v792, %v788
    %v1177 = vpack.c.b16 %v793, %v789
    %v1178 = vpack.c.b16 %v798, %v794
    %v1179 = vpack.c.b16 %v799, %v795
    %v1180 = vpack.c.b16 %v800, %v796
    %v1181 = vpack.c.b16 %v801, %v797
    %v1182 = vpack.c.b16 %v806, %v802
    %v1183 = vpack.c.b16 %v807, %v803
    %v1184 = vpack.c.b16 %v808, %v804
    %v1185 = vpack.c.b16 %v809, %v805
    %v1186 = vpack.c.b16 %v814, %v810
    %v1187 = vpack.c.b16 %v815, %v811
    %v1188 = vpack.c.b16 %v816, %v812
    %v1189 = vpack.c.b16 %v817, %v813
    %v1190 = vpack.c.b16 %v822, %v818
    %v1191 = vpack.c.b16 %v823, %v819
    %v1192 = vpack.c.b16 %v824, %v820
    %v1193 = vpack.c.b16 %v825, %v821
    %v1194 = vpack.c.b16 %v830, %v826
    %v1195 = vpack.c.b16 %v831, %v827
    %v1196 = vpack.c.b16 %v832, %v828
    %v1197 = vpack.c.b16 %v833, %v829
    %v1198 = vpack.c.b16 %v838, %v834
    %v1199 = vpack.c.b16 %v839, %v835
    %v1200 = vpack.c.b16 %v840, %v836
    %v1201 = vpack.c.b16 %v841, %v837
    %v1202 = vpack.c.b16 %v846, %v842
    %v1203 = vpack.c.b16 %v847, %v843
    %v1204 = vpack.c.b16 %v848, %v844
    %v1205 = vpack.c.b16 %v849, %v845
    %v1206 = vpack.c.b16 %v854, %v850
    %v1207 = vpack.c.b16 %v855, %v851
    %v1208 = vpack.c.b16 %v856, %v852
    %v1209 = vpack.c.b16 %v857, %v853
    %v1210 = vpack.c.b16 %v862, %v858
    %v1211 = vpack.c.b16 %v863, %v859
    %v1212 = vpack.c.b16 %v864, %v860
    %v1213 = vpack.c.b16 %v865, %v861
    %v1214 = vpack.c.b16 %v870, %v866
    %v1215 = vpack.c.b16 %v871, %v867
    %v1216 = vpack.c.b16 %v872, %v868
    %v1217 = vpack.c.b16 %v873, %v869
    %v1218 = vpack.c.b16 %v878, %v874
    %v1219 = vpack.c.b16 %v879, %v875
    %v1220 = vpack.c.b16 %v880, %v876
    %v1221 = vpack.c.b16 %v881, %v877
    %v1222 = vpack.c.b16 %v886, %v882
    %v1223 = vpack.c.b16 %v887, %v883
    %v1224 = vpack.c.b16 %v888, %v884
    %v1225 = vpack.c.b16 %v889, %v885
    %v1226 = vpack.c.b16 %v894, %v890
    %v1227 = vpack.c.b16 %v895, %v891
    %v1228 = vpack.c.b16 %v896, %v892
    %v1229 = vpack.c.b16 %v897, %v893
    %v1230 = vpack.c.b16 %v902, %v898
    %v1231 = vpack.c.b16 %v903, %v899
    %v1232 = vpack.c.b16 %v904, %v900
    %v1233 = vpack.c.b16 %v905, %v901
    %v1234 = vpack.c.b16 %v910, %v906
    %v1235 = vpack.c.b16 %v911, %v907
    %v1236 = vpack.c.b16 %v912, %v908
    %v1237 = vpack.c.b16 %v913, %v909
    %v1238 = vpack.c.b16 %v918, %v914
    %v1239 = vpack.c.b16 %v919, %v915
    %v1240 = vpack.c.b16 %v920, %v916
    %v1241 = vpack.c.b16 %v921, %v917
    %v1242 = vpack.c.b16 %v926, %v922
    %v1243 = vpack.c.b16 %v927, %v923
    %v1244 = vpack.c.b16 %v928, %v924
    %v1245 = vpack.c.b16 %v929, %v925
    %v1246 = vpack.c.b16 %v934, %v930
    %v1247 = vpack.c.b16 %v935, %v931
    %v1248 = vpack.c.b16 %v936, %v932
    %v1249 = vpack.c.b16 %v937, %v933
    %v1250 = vpack.c.b16 %v942, %v938
    %v1251 = vpack.c.b16 %v943, %v939
    %v1252 = vpack.c.b16 %v944, %v940
    %v1253 = vpack.c.b16 %v945, %v941
    %v1254 = vpack.c.b16 %v950, %v946
    %v1255 = vpack.c.b16 %v951, %v947
    %v1256 = vpack.c.b16 %v952, %v948
    %v1257 = vpack.c.b16 %v953, %v949
    %v1258 = vpack.c.b16 %v958, %v954
    %v1259 = vpack.c.b16 %v959, %v955
    %v1260 = vpack.c.b16 %v960, %v956
    %v1261 = vpack.c.b16 %v961, %v957
    %v1262 = vpack.c.b16 %v966, %v962
    %v1263 = vpack.c.b16 %v967, %v963
    %v1264 = vpack.c.b16 %v968, %v964
    %v1265 = vpack.c.b16 %v969, %v965
    %v1266 = vpack.c.b16 %v974, %v970
    %v1267 = vpack.c.b16 %v975, %v971
    %v1268 = vpack.c.b16 %v976, %v972
    %v1269 = vpack.c.b16 %v977, %v973
    %v1270 = vpack.c.b16 %v982, %v978
    %v1271 = vpack.c.b16 %v983, %v979
    %v1272 = vpack.c.b16 %v984, %v980
    %v1273 = vpack.c.b16 %v985, %v981
    %v1274 = vpack.c.b16 %v990, %v986
    %v1275 = vpack.c.b16 %v991, %v987
    %v1276 = vpack.c.b16 %v992, %v988
    %v1277 = vpack.c.b16 %v993, %v989
    %v1278 = vpack.c.b16 %v998, %v994
    %v1279 = vpack.c.b16 %v999, %v995
    %v1280 = vpack.c.b16 %v1000, %v996
    %v1281 = vpack.c.b16 %v1001, %v997
    %v1282 = vpack.c.b16 %v1006, %v1002
    %v1283 = vpack.c.b16 %v1007, %v1003
    %v1284 = vpack.c.b16 %v1008, %v1004
    %v1285 = vpack.c.b16 %v1009, %v1005
    %v1286 = vpack.c.b16 %v1014, %v1010
    %v1287 = vpack.c.b16 %v1015, %v1011
    %v1288 = vpack.c.b16 %v1016, %v1012
    %v1289 = vpack.c.b16 %v1017, %v1013
    %v1290 = vpack.c.b16 %v1022, %v1018
    %v1291 = vpack.c.b16 %v1023, %v1019
    %v1292 = vpack.c.b16 %v1024, %v1020
    %v1293 = vpack.c.b16 %v1025, %v1021
    %v1294 = vpack.c.b16 %v1030, %v1026
    %v1295 = vpack.c.b16 %v1031, %v1027
    %v1296 = vpack.c.b16 %v1032, %v1028
    %v1297 = vpack.c.b16 %v1033, %v1029
    %v1298 = vpack.c.b16 %v1038, %v1034
    %v1299 = vpack.c.b16 %v1039, %v1035
    %v1300 = vpack.c.b16 %v1040, %v1036
    %v1301 = vpack.c.b16 %v1041, %v1037
    %v1302 = vpack.c.b16 %v1046, %v1042
    %v1303 = vpack.c.b16 %v1047, %v1043
    %v1304 = vpack.c.b16 %v1048, %v1044
    %v1305 = vpack.c.b16 %v1049, %v1045
    %v1306 = vpack.c.b16 %v1054, %v1050
    %v1307 = vpack.c.b16 %v1055, %v1051
    %v1308 = vpack.c.b16 %v1056, %v1052
    %v1309 = vpack.c.b16 %v1057, %v1053
    %v1310 = vpack.c.b16 %v1062, %v1058
    %v1311 = vpack.c.b16 %v1063, %v1059
    %v1312 = vpack.c.b16 %v1064, %v1060
    %v1313 = vpack.c.b16 %v1065, %v1061
    %v1314 = vpack.c.b16 %v1070, %v1066
    %v1315 = vpack.c.b16 %v1071, %v1067
    %v1316 = vpack.c.b16 %v1072, %v1068
    %v1317 = vpack.c.b16 %v1073, %v1069
    %v1318 = vpack.c.b16 %v1078, %v1074
    %v1319 = vpack.c.b16 %v1079, %v1075
    %v1320 = vpack.c.b16 %v1080, %v1076
    %v1321 = vpack.c.b16 %v1081, %v1077
    %v1322 = vpack.c.b16 %v1086, %v1082
    %v1323 = vpack.c.b16 %v1087, %v1083
    %v1324 = vpack.c.b16 %v1088, %v1084
    %v1325 = vpack.c.b16 %v1089, %v1085
    %v1326 = vpack.c.b16 %v1094, %v1090
    %v1327 = vpack.c.b16 %v1095, %v1091
    %v1328 = vpack.c.b16 %v1096, %v1092
    %v1329 = vpack.c.b16 %v1097, %v1093
    %v1330 = vpack.c.b16 %v1102, %v1098
    %v1331 = vpack.c.b16 %v1103, %v1099
    %v1332 = vpack.c.b16 %v1104, %v1100
    %v1333 = vpack.c.b16 %v1105, %v1101
    %v1334 = vpack.c.b16 %v1110, %v1106
    %v1335 = vpack.c.b16 %v1111, %v1107
    %v1336 = vpack.c.b16 %v1112, %v1108
    %v1337 = vpack.c.b16 %v1113, %v1109
    %1562 = vmatprep.subr.bf16.mxu0 %v1143
    %1563 = vmatpush1.bf16.msra.mxu0 %v1142
    %1564 = vmatprep.subr.bf16.mxu0 %v1139
    %1565 = vmatpush1.bf16.msra.mxu0 %v1138
    %1566 = vmatprep.subr.bf16.mxu0 %v1135
    %1567 = vmatpush1.bf16.msra.mxu0 %v1134
    %1568 = vmatprep.subr.bf16.mxu0 %v1131
    %1569 = vmatpush1.bf16.msra.mxu0 %v1130
    %1570 = vmatprep.subr.bf16.mxu0 %v1127
    %1571 = vmatpush1.bf16.msra.mxu0 %v1126
    %1572 = vmatprep.subr.bf16.mxu0 %v1123
    %1573 = vmatpush1.bf16.msra.mxu0 %v1122
    %1574 = vmatprep.subr.bf16.mxu0 %v1119
    %1575 = vmatpush1.bf16.msra.mxu0 %v1118
    %1576 = vmatprep.subr.bf16.mxu0 %v1115
    %1577 = vmatpush1.bf16.msra.mxu0 %v1114
    %1578 = vmatprep.subr.bf16.mxu0 %v1175
    %1579 = vmatpush2.bf16.msra.mxu0 %v1174
    %1580 = vmatprep.subr.bf16.mxu0 %v1171
    %1581 = vmatpush2.bf16.msra.mxu0 %v1170
    %1582 = vmatprep.subr.bf16.mxu0 %v1167
    %1583 = vmatpush2.bf16.msra.mxu0 %v1166
    %1584 = vmatprep.subr.bf16.mxu0 %v1163
    %1585 = vmatpush2.bf16.msra.mxu0 %v1162
    %1586 = vmatprep.subr.bf16.mxu0 %v1159
    %1587 = vmatpush2.bf16.msra.mxu0 %v1158
    %1588 = vmatprep.subr.bf16.mxu0 %v1155
    %1589 = vmatpush2.bf16.msra.mxu0 %v1154
    %1590 = vmatprep.subr.bf16.mxu0 %v1151
    %1591 = vmatpush2.bf16.msra.mxu0 %v1150
    %1592 = vmatprep.subr.bf16.mxu0 %v1147
    %1593 = vmatpush2.bf16.msra.mxu0 %v1146
    %1594 = vmatprep.mubr.bf16.mxu0 %v429
    %1595 = vmatmul.mubr.bf16.gmra.mxu0 %v428
    %v1596 = vpop.f32.mrf.mxu0
    %v1597 = vadd.f32 %v389, %v1596
    %v1598 = vpop.f32.mrf.mxu0
    %v1599 = vadd.f32 %v393, %v1598
    %v1600 = vpop.f32.mrf.mxu0
    %v1601 = vadd.f32 %v389, %v1600
    %v1602 = vpop.f32.mrf.mxu0
    %v1603 = vadd.f32 %v393, %v1602
    %1604 = vdwg.mxu0
    %1605 = vmatprep.subr.bf16.mxu0 %v1207
    %1606 = vmatpush1.bf16.msra.mxu0 %v1206
    %1607 = vmatprep.subr.bf16.mxu0 %v1203
    %1608 = vmatpush1.bf16.msra.mxu0 %v1202
    %1609 = vmatprep.subr.bf16.mxu0 %v1199
    %1610 = vmatpush1.bf16.msra.mxu0 %v1198
    %1611 = vmatprep.subr.bf16.mxu0 %v1195
    %1612 = vmatpush1.bf16.msra.mxu0 %v1194
    %1613 = vmatprep.subr.bf16.mxu0 %v1191
    %1614 = vmatpush1.bf16.msra.mxu0 %v1190
    %1615 = vmatprep.subr.bf16.mxu0 %v1187
    %1616 = vmatpush1.bf16.msra.mxu0 %v1186
    %1617 = vmatprep.subr.bf16.mxu0 %v1183
    %1618 = vmatpush1.bf16.msra.mxu0 %v1182
    %1619 = vmatprep.subr.bf16.mxu0 %v1179
    %1620 = vmatpush1.bf16.msra.mxu0 %v1178
    %1621 = vmatprep.subr.bf16.mxu0 %v1239
    %1622 = vmatpush2.bf16.msra.mxu0 %v1238
    %1623 = vmatprep.subr.bf16.mxu0 %v1235
    %1624 = vmatpush2.bf16.msra.mxu0 %v1234
    %1625 = vmatprep.subr.bf16.mxu0 %v1231
    %1626 = vmatpush2.bf16.msra.mxu0 %v1230
    %1627 = vmatprep.subr.bf16.mxu0 %v1227
    %1628 = vmatpush2.bf16.msra.mxu0 %v1226
    %1629 = vmatprep.subr.bf16.mxu0 %v1223
    %1630 = vmatpush2.bf16.msra.mxu0 %v1222
    %1631 = vmatprep.subr.bf16.mxu0 %v1219
    %1632 = vmatpush2.bf16.msra.mxu0 %v1218
    %1633 = vmatprep.subr.bf16.mxu0 %v1215
    %1634 = vmatpush2.bf16.msra.mxu0 %v1214
    %1635 = vmatprep.subr.bf16.mxu0 %v1211
    %1636 = vmatpush2.bf16.msra.mxu0 %v1210
    %1637 = vmatprep.mubr.bf16.mxu0 %v431
    %1638 = vmatmul.mubr.bf16.gmra.mxu0 %v430
    %v1639 = vpop.f32.mrf.mxu0
    %v1640 = vadd.f32 %v1597, %v1639
    %v1641 = vpop.f32.mrf.mxu0
    %v1642 = vadd.f32 %v1599, %v1641
    %v1643 = vpop.f32.mrf.mxu0
    %v1644 = vadd.f32 %v1601, %v1643
    %v1645 = vpop.f32.mrf.mxu0
    %v1646 = vadd.f32 %v1603, %v1645
    %1647 = vdwg.mxu0
    %1648 = vmatprep.subr.bf16.mxu0 %v1271
    %1649 = vmatpush1.bf16.msra.mxu0 %v1270
    %1650 = vmatprep.subr.bf16.mxu0 %v1267
    %1651 = vmatpush1.bf16.msra.mxu0 %v1266
    %1652 = vmatprep.subr.bf16.mxu0 %v1263
    %1653 = vmatpush1.bf16.msra.mxu0 %v1262
    %1654 = vmatprep.subr.bf16.mxu0 %v1259
    %1655 = vmatpush1.bf16.msra.mxu0 %v1258
    %1656 = vmatprep.subr.bf16.mxu0 %v1255
    %1657 = vmatpush1.bf16.msra.mxu0 %v1254
    %1658 = vmatprep.subr.bf16.mxu0 %v1251
    %1659 = vmatpush1.bf16.msra.mxu0 %v1250
    %1660 = vmatprep.subr.bf16.mxu0 %v1247
    %1661 = vmatpush1.bf16.msra.mxu0 %v1246
    %1662 = vmatprep.subr.bf16.mxu0 %v1243
    %1663 = vmatpush1.bf16.msra.mxu0 %v1242
    %1664 = vmatprep.subr.bf16.mxu0 %v1303
    %1665 = vmatpush2.bf16.msra.mxu0 %v1302
    %1666 = vmatprep.subr.bf16.mxu0 %v1299
    %1667 = vmatpush2.bf16.msra.mxu0 %v1298
    %1668 = vmatprep.subr.bf16.mxu0 %v1295
    %1669 = vmatpush2.bf16.msra.mxu0 %v1294
    %1670 = vmatprep.subr.bf16.mxu0 %v1291
    %1671 = vmatpush2.bf16.msra.mxu0 %v1290
    %1672 = vmatprep.subr.bf16.mxu0 %v1287
    %1673 = vmatpush2.bf16.msra.mxu0 %v1286
    %1674 = vmatprep.subr.bf16.mxu0 %v1283
    %1675 = vmatpush2.bf16.msra.mxu0 %v1282
    %1676 = vmatprep.subr.bf16.mxu0 %v1279
    %1677 = vmatpush2.bf16.msra.mxu0 %v1278
    %1678 = vmatprep.subr.bf16.mxu0 %v1275
    %1679 = vmatpush2.bf16.msra.mxu0 %v1274
    %1680 = vmatprep.mubr.bf16.mxu0 %v433
    %1681 = vmatmul.mubr.bf16.gmra.mxu0 %v432
    %v1682 = vpop.f32.mrf.mxu0
    %v1683 = vadd.f32 %v1640, %v1682
    %v1684 = vpop.f32.mrf.mxu0
    %v1685 = vadd.f32 %v1642, %v1684
    %v1686 = vpop.f32.mrf.mxu0
    %v1687 = vadd.f32 %v1644, %v1686
    %v1688 = vpop.f32.mrf.mxu0
    %v1689 = vadd.f32 %v1646, %v1688
    %1690 = vdwg.mxu0
    %1691 = vmatprep.subr.bf16.mxu0 %v1335
    %1692 = vmatpush1.bf16.msra.mxu0 %v1334
    %1693 = vmatprep.subr.bf16.mxu0 %v1331
    %1694 = vmatpush1.bf16.msra.mxu0 %v1330
    %1695 = vmatprep.subr.bf16.mxu0 %v1327
    %1696 = vmatpush1.bf16.msra.mxu0 %v1326
    %1697 = vmatprep.subr.bf16.mxu0 %v1323
    %1698 = vmatpush1.bf16.msra.mxu0 %v1322
    %1699 = vmatprep.subr.bf16.mxu0 %v1319
    %1700 = vmatpush1.bf16.msra.mxu0 %v1318
    %1701 = vmatprep.subr.bf16.mxu0 %v1315
    %1702 = vmatpush1.bf16.msra.mxu0 %v1314
    %1703 = vmatprep.subr.bf16.mxu0 %v1311
    %1704 = vmatpush1.bf16.msra.mxu0 %v1310
    %1705 = vmatprep.subr.bf16.mxu0 %v1307
    %1706 = vmatpush1.bf16.msra.mxu0 %v1306
    %1707 = vmatprep.subr.bf16.mxu0 0
    %1708 = vmatpush2.bf16.msra.mxu0 0
    %1709 = vmatprep.subr.bf16.mxu0 0
    %1710 = vmatpush2.bf16.msra.mxu0 0
    %1711 = vmatprep.subr.bf16.mxu0 0
    %1712 = vmatpush2.bf16.msra.mxu0 0
    %1713 = vmatprep.subr.bf16.mxu0 0
    %1714 = vmatpush2.bf16.msra.mxu0 0
    %1715 = vmatprep.subr.bf16.mxu0 0
    %1716 = vmatpush2.bf16.msra.mxu0 0
    %1717 = vmatprep.subr.bf16.mxu0 0
    %1718 = vmatpush2.bf16.msra.mxu0 0
    %1719 = vmatprep.subr.bf16.mxu0 0
    %1720 = vmatpush2.bf16.msra.mxu0 0
    %1721 = vmatprep.subr.bf16.mxu0 0
    %1722 = vmatpush2.bf16.msra.mxu0 0
    %1723 = vmatprep.mubr.bf16.mxu0 0
    %1724 = vmatmul.mubr.bf16.gmra.mxu0 %v434
    %v1725 = vpop.f32.mrf.mxu0
    %v1726 = vadd.f32 %v1683, %v1725
    %v1727 = vpop.f32.mrf.mxu0
    %v1728 = vadd.f32 %v1685, %v1727
    %v1729 = vpop.f32.mrf.mxu0
    %v1730 = vadd.f32 %v1687, %v1729
    %v1731 = vpop.f32.mrf.mxu0
    %v1732 = vadd.f32 %v1689, %v1731
    %1733 = vdwg.mxu0
    %1734 = vmatprep.subr.bf16.mxu0 %v1145
    %1735 = vmatpush1.bf16.msra.mxu0 %v1144
    %1736 = vmatprep.subr.bf16.mxu0 %v1141
    %1737 = vmatpush1.bf16.msra.mxu0 %v1140
    %1738 = vmatprep.subr.bf16.mxu0 %v1137
    %1739 = vmatpush1.bf16.msra.mxu0 %v1136
    %1740 = vmatprep.subr.bf16.mxu0 %v1133
    %1741 = vmatpush1.bf16.msra.mxu0 %v1132
    %1742 = vmatprep.subr.bf16.mxu0 %v1129
    %1743 = vmatpush1.bf16.msra.mxu0 %v1128
    %1744 = vmatprep.subr.bf16.mxu0 %v1125
    %1745 = vmatpush1.bf16.msra.mxu0 %v1124
    %1746 = vmatprep.subr.bf16.mxu0 %v1121
    %1747 = vmatpush1.bf16.msra.mxu0 %v1120
    %1748 = vmatprep.subr.bf16.mxu0 %v1117
    %1749 = vmatpush1.bf16.msra.mxu0 %v1116
    %1750 = vmatprep.subr.bf16.mxu0 %v1177
    %1751 = vmatpush2.bf16.msra.mxu0 %v1176
    %1752 = vmatprep.subr.bf16.mxu0 %v1173
    %1753 = vmatpush2.bf16.msra.mxu0 %v1172
    %1754 = vmatprep.subr.bf16.mxu0 %v1169
    %1755 = vmatpush2.bf16.msra.mxu0 %v1168
    %1756 = vmatprep.subr.bf16.mxu0 %v1165
    %1757 = vmatpush2.bf16.msra.mxu0 %v1164
    %1758 = vmatprep.subr.bf16.mxu0 %v1161
    %1759 = vmatpush2.bf16.msra.mxu0 %v1160
    %1760 = vmatprep.subr.bf16.mxu0 %v1157
    %1761 = vmatpush2.bf16.msra.mxu0 %v1156
    %1762 = vmatprep.subr.bf16.mxu0 %v1153
    %1763 = vmatpush2.bf16.msra.mxu0 %v1152
    %1764 = vmatprep.subr.bf16.mxu0 %v1149
    %1765 = vmatpush2.bf16.msra.mxu0 %v1148
    %1766 = vmatprep.mubr.bf16.mxu0 %v429
    %1767 = vmatmul.mubr.bf16.gmra.mxu0 %v428
    %v1768 = vpop.f32.mrf.mxu0
    %v1769 = vadd.f32 %v397, %v1768
    %v1770 = vpop.f32.mrf.mxu0
    %v1771 = vadd.f32 %v401, %v1770
    %v1772 = vpop.f32.mrf.mxu0
    %v1773 = vadd.f32 %v397, %v1772
    %v1774 = vpop.f32.mrf.mxu0
    %v1775 = vadd.f32 %v401, %v1774
    %1776 = vdwg.mxu0
    %1777 = vmatprep.subr.bf16.mxu0 %v1209
    %1778 = vmatpush1.bf16.msra.mxu0 %v1208
    %1779 = vmatprep.subr.bf16.mxu0 %v1205
    %1780 = vmatpush1.bf16.msra.mxu0 %v1204
    %1781 = vmatprep.subr.bf16.mxu0 %v1201
    %1782 = vmatpush1.bf16.msra.mxu0 %v1200
    %1783 = vmatprep.subr.bf16.mxu0 %v1197
    %1784 = vmatpush1.bf16.msra.mxu0 %v1196
    %1785 = vmatprep.subr.bf16.mxu0 %v1193
    %1786 = vmatpush1.bf16.msra.mxu0 %v1192
    %1787 = vmatprep.subr.bf16.mxu0 %v1189
    %1788 = vmatpush1.bf16.msra.mxu0 %v1188
    %1789 = vmatprep.subr.bf16.mxu0 %v1185
    %1790 = vmatpush1.bf16.msra.mxu0 %v1184
    %1791 = vmatprep.subr.bf16.mxu0 %v1181
    %1792 = vmatpush1.bf16.msra.mxu0 %v1180
    %1793 = vmatprep.subr.bf16.mxu0 %v1241
    %1794 = vmatpush2.bf16.msra.mxu0 %v1240
    %1795 = vmatprep.subr.bf16.mxu0 %v1237
    %1796 = vmatpush2.bf16.msra.mxu0 %v1236
    %1797 = vmatprep.subr.bf16.mxu0 %v1233
    %1798 = vmatpush2.bf16.msra.mxu0 %v1232
    %1799 = vmatprep.subr.bf16.mxu0 %v1229
    %1800 = vmatpush2.bf16.msra.mxu0 %v1228
    %1801 = vmatprep.subr.bf16.mxu0 %v1225
    %1802 = vmatpush2.bf16.msra.mxu0 %v1224
    %1803 = vmatprep.subr.bf16.mxu0 %v1221
    %1804 = vmatpush2.bf16.msra.mxu0 %v1220
    %1805 = vmatprep.subr.bf16.mxu0 %v1217
    %1806 = vmatpush2.bf16.msra.mxu0 %v1216
    %1807 = vmatprep.subr.bf16.mxu0 %v1213
    %1808 = vmatpush2.bf16.msra.mxu0 %v1212
    %1809 = vmatprep.mubr.bf16.mxu0 %v431
    %1810 = vmatmul.mubr.bf16.gmra.mxu0 %v430
    %v1811 = vpop.f32.mrf.mxu0
    %v1812 = vadd.f32 %v1769, %v1811
    %v1813 = vpop.f32.mrf.mxu0
    %v1814 = vadd.f32 %v1771, %v1813
    %v1815 = vpop.f32.mrf.mxu0
    %v1816 = vadd.f32 %v1773, %v1815
    %v1817 = vpop.f32.mrf.mxu0
    %v1818 = vadd.f32 %v1775, %v1817
    %1819 = vdwg.mxu0
    %1820 = vmatprep.subr.bf16.mxu0 %v1273
    %1821 = vmatpush1.bf16.msra.mxu0 %v1272
    %1822 = vmatprep.subr.bf16.mxu0 %v1269
    %1823 = vmatpush1.bf16.msra.mxu0 %v1268
    %1824 = vmatprep.subr.bf16.mxu0 %v1265
    %1825 = vmatpush1.bf16.msra.mxu0 %v1264
    %1826 = vmatprep.subr.bf16.mxu0 %v1261
    %1827 = vmatpush1.bf16.msra.mxu0 %v1260
    %1828 = vmatprep.subr.bf16.mxu0 %v1257
    %1829 = vmatpush1.bf16.msra.mxu0 %v1256
    %1830 = vmatprep.subr.bf16.mxu0 %v1253
    %1831 = vmatpush1.bf16.msra.mxu0 %v1252
    %1832 = vmatprep.subr.bf16.mxu0 %v1249
    %1833 = vmatpush1.bf16.msra.mxu0 %v1248
    %1834 = vmatprep.subr.bf16.mxu0 %v1245
    %1835 = vmatpush1.bf16.msra.mxu0 %v1244
    %1836 = vmatprep.subr.bf16.mxu0 %v1305
    %1837 = vmatpush2.bf16.msra.mxu0 %v1304
    %1838 = vmatprep.subr.bf16.mxu0 %v1301
    %1839 = vmatpush2.bf16.msra.mxu0 %v1300
    %1840 = vmatprep.subr.bf16.mxu0 %v1297
    %1841 = vmatpush2.bf16.msra.mxu0 %v1296
    %1842 = vmatprep.subr.bf16.mxu0 %v1293
    %1843 = vmatpush2.bf16.msra.mxu0 %v1292
    %1844 = vmatprep.subr.bf16.mxu0 %v1289
    %1845 = vmatpush2.bf16.msra.mxu0 %v1288
    %1846 = vmatprep.subr.bf16.mxu0 %v1285
    %1847 = vmatpush2.bf16.msra.mxu0 %v1284
    %1848 = vmatprep.subr.bf16.mxu0 %v1281
    %1849 = vmatpush2.bf16.msra.mxu0 %v1280
    %1850 = vmatprep.subr.bf16.mxu0 %v1277
    %1851 = vmatpush2.bf16.msra.mxu0 %v1276
    %1852 = vmatprep.mubr.bf16.mxu0 %v433
    %1853 = vmatmul.mubr.bf16.gmra.mxu0 %v432
    %v1854 = vpop.f32.mrf.mxu0
    %v1855 = vadd.f32 %v1812, %v1854
    %v1856 = vpop.f32.mrf.mxu0
    %v1857 = vadd.f32 %v1814, %v1856
    %v1858 = vpop.f32.mrf.mxu0
    %v1859 = vadd.f32 %v1816, %v1858
    %v1860 = vpop.f32.mrf.mxu0
    %v1861 = vadd.f32 %v1818, %v1860
    %1862 = vdwg.mxu0
    %1863 = vmatprep.subr.bf16.mxu0 %v1337
    %1864 = vmatpush1.bf16.msra.mxu0 %v1336
    %1865 = vmatprep.subr.bf16.mxu0 %v1333
    %1866 = vmatpush1.bf16.msra.mxu0 %v1332
    %1867 = vmatprep.subr.bf16.mxu0 %v1329
    %1868 = vmatpush1.bf16.msra.mxu0 %v1328
    %1869 = vmatprep.subr.bf16.mxu0 %v1325
    %1870 = vmatpush1.bf16.msra.mxu0 %v1324
    %1871 = vmatprep.subr.bf16.mxu0 %v1321
    %1872 = vmatpush1.bf16.msra.mxu0 %v1320
    %1873 = vmatprep.subr.bf16.mxu0 %v1317
    %1874 = vmatpush1.bf16.msra.mxu0 %v1316
    %1875 = vmatprep.subr.bf16.mxu0 %v1313
    %1876 = vmatpush1.bf16.msra.mxu0 %v1312
    %1877 = vmatprep.subr.bf16.mxu0 %v1309
    %1878 = vmatpush1.bf16.msra.mxu0 %v1308
    %1879 = vmatprep.subr.bf16.mxu0 0
    %1880 = vmatpush2.bf16.msra.mxu0 0
    %1881 = vmatprep.subr.bf16.mxu0 0
    %1882 = vmatpush2.bf16.msra.mxu0 0
    %1883 = vmatprep.subr.bf16.mxu0 0
    %1884 = vmatpush2.bf16.msra.mxu0 0
    %1885 = vmatprep.subr.bf16.mxu0 0
    %1886 = vmatpush2.bf16.msra.mxu0 0
    %1887 = vmatprep.subr.bf16.mxu0 0
    %1888 = vmatpush2.bf16.msra.mxu0 0
    %1889 = vmatprep.subr.bf16.mxu0 0
    %1890 = vmatpush2.bf16.msra.mxu0 0
    %1891 = vmatprep.subr.bf16.mxu0 0
    %1892 = vmatpush2.bf16.msra.mxu0 0
    %1893 = vmatprep.subr.bf16.mxu0 0
    %1894 = vmatpush2.bf16.msra.mxu0 0
    %1895 = vmatprep.mubr.bf16.mxu0 0
    %1896 = vmatmul.mubr.bf16.gmra.mxu0 %v434
    %v1897 = vpop.f32.mrf.mxu0
    %v1898 = vadd.f32 %v1855, %v1897
    %v1899 = vpop.f32.mrf.mxu0
    %v1900 = vadd.f32 %v1857, %v1899
    %v1901 = vpop.f32.mrf.mxu0
    %v1902 = vadd.f32 %v1859, %v1901
    %v1903 = vpop.f32.mrf.mxu0
    %v1904 = vadd.f32 %v1861, %v1903
    %1905 = vdwg.mxu0
    %v1906 = vmax.f32 %v1726, 0.0
    %v1907 = vmax.f32 %v1728, 0.0
    %v1908 = vmax.f32 %v1898, 0.0
    %v1909 = vmax.f32 %v1900, 0.0
    %v1910 = vmax.f32 %v1730, 0.0
    %v1911 = vmax.f32 %v1732, 0.0
    %v1912 = vmax.f32 %v1902, 0.0
    %v1913 = vmax.f32 %v1904, 0.0
    %v1914 = vpack.c.bf16 %v1910, %v1906
    %v1915 = vpack.c.bf16 %v1911, %v1907
    %v1916 = vpack.c.bf16 %v1912, %v1908
    %v1917 = vpack.c.bf16 %v1913, %v1909
    %v1918 = vld [vmem:[#allocation10] sm:$0xff]
    %v1919 = vld [vmem:[#allocation10 + $0x8] sm:$0xff]
    %v1920 = vld [vmem:[#allocation10 + $0x10] sm:$0xf]
    %v1921 = vld [vmem:[#allocation10 + $0x14] sm:$0xff]
    %v1922 = vld [vmem:[#allocation10 + $0x1c] sm:$0xff]
    %v1923 = vld [vmem:[#allocation10 + $0x24] sm:$0xf]
    %v1924 = vld [vmem:[#allocation10 + $0x28] sm:$0xff]
    %v1925 = vld [vmem:[#allocation10 + $0x30] sm:$0xff]
    %v1926 = vld [vmem:[#allocation10 + $0x38] sm:$0xf]
    %v1927 = vld [vmem:[#allocation10 + $0x3c] sm:$0xff]
    %v1928 = vld [vmem:[#allocation10 + $0x44] sm:$0xff]
    %v1929 = vld [vmem:[#allocation10 + $0x4c] sm:$0xf]
    %v1930 = vld [vmem:[#allocation10 + $0x50] sm:$0xff]
    %v1931 = vld [vmem:[#allocation10 + $0x58] sm:$0xff]
    %v1932 = vld [vmem:[#allocation10 + $0x60] sm:$0xf]
    %v1933 = vld [vmem:[#allocation10 + $0x64] sm:$0xff]
    %v1934 = vld [vmem:[#allocation10 + $0x6c] sm:$0xff]
    %v1935 = vld [vmem:[#allocation10 + $0x74] sm:$0xf]
    %v1936 = vld [vmem:[#allocation10 + $0x78] sm:$0xff]
    %v1937 = vld [vmem:[#allocation10 + $0x80] sm:$0xff]
    %v1938 = vld [vmem:[#allocation10 + $0x88] sm:$0xf]
    %v1939 = vld [vmem:[#allocation10 + $0x8c] sm:$0xff]
    %v1940 = vld [vmem:[#allocation10 + $0x94] sm:$0xff]
    %v1941 = vld [vmem:[#allocation10 + $0x9c] sm:$0xf]
    %v1942 = vld [vmem:[#allocation10 + $0xa0] sm:$0xff]
    %v1943 = vld [vmem:[#allocation10 + $0xa8] sm:$0xff]
    %v1944 = vld [vmem:[#allocation10 + $0xb0] sm:$0xf]
    %v1945 = vld [vmem:[#allocation10 + $0xb4] sm:$0xff]
    %v1946 = vld [vmem:[#allocation10 + $0xbc] sm:$0xff]
    %v1947 = vld [vmem:[#allocation10 + $0xc4] sm:$0xf]
    %v1948 = vld [vmem:[#allocation10 + $0xc8] sm:$0xff]
    %v1949 = vld [vmem:[#allocation10 + $0xd0] sm:$0xff]
    %v1950 = vld [vmem:[#allocation10 + $0xd8] sm:$0xf]
    %v1951 = vld [vmem:[#allocation10 + $0xdc] sm:$0xff]
    %v1952 = vld [vmem:[#allocation10 + $0xe4] sm:$0xff]
    %v1953 = vld [vmem:[#allocation10 + $0xec] sm:$0xf]
    %v1954 = vld [vmem:[#allocation10 + $0xf0] sm:$0xff]
    %v1955 = vld [vmem:[#allocation10 + $0xf8] sm:$0xff]
    %v1956 = vld [vmem:[#allocation10 + $0x100] sm:$0xf]
    %v1957 = vld [vmem:[#allocation10 + $0x104] sm:$0xff]
    %v1958 = vld [vmem:[#allocation10 + $0x10c] sm:$0xff]
    %v1959 = vld [vmem:[#allocation10 + $0x114] sm:$0xf]
    %v1960 = vld [vmem:[#allocation10 + $0x118] sm:$0xff]
    %v1961 = vld [vmem:[#allocation10 + $0x120] sm:$0xff]
    %v1962 = vld [vmem:[#allocation10 + $0x128] sm:$0xf]
    %v1963 = vld [vmem:[#allocation10 + $0x12c] sm:$0xff]
    %v1964 = vld [vmem:[#allocation10 + $0x134] sm:$0xff]
    %v1965 = vld [vmem:[#allocation10 + $0x13c] sm:$0xf]
    %v1966 = vld [vmem:[#allocation10 + $0x140] sm:$0xff]
    %v1967 = vld [vmem:[#allocation10 + $0x148] sm:$0xff]
    %v1968 = vld [vmem:[#allocation10 + $0x150] sm:$0xf]
    %v1969 = vld [vmem:[#allocation10 + $0x154] sm:$0xff]
    %v1970 = vld [vmem:[#allocation10 + $0x15c] sm:$0xff]
    %v1971 = vld [vmem:[#allocation10 + $0x164] sm:$0xf]
    %v1972 = vld [vmem:[#allocation10 + $0x168] sm:$0xff]
    %v1973 = vld [vmem:[#allocation10 + $0x170] sm:$0xff]
    %v1974 = vld [vmem:[#allocation10 + $0x178] sm:$0xf]
    %v1975 = vld [vmem:[#allocation10 + $0x17c] sm:$0xff]
    %v1976 = vld [vmem:[#allocation10 + $0x184] sm:$0xff]
    %v1977 = vld [vmem:[#allocation10 + $0x18c] sm:$0xf]
    %v1978 = vld [vmem:[#allocation10 + $0x190] sm:$0xff]
    %v1979 = vld [vmem:[#allocation10 + $0x198] sm:$0xff]
    %v1980 = vld [vmem:[#allocation10 + $0x1a0] sm:$0xf]
    %v1981 = vld [vmem:[#allocation10 + $0x1a4] sm:$0xff]
    %v1982 = vld [vmem:[#allocation10 + $0x1ac] sm:$0xff]
    %v1983 = vld [vmem:[#allocation10 + $0x1b4] sm:$0xf]
    %v1984 = vld [vmem:[#allocation10 + $0x1b8] sm:$0xff]
    %v1985 = vld [vmem:[#allocation10 + $0x1c0] sm:$0xff]
    %v1986 = vld [vmem:[#allocation10 + $0x1c8] sm:$0xf]
    %v1987 = vld [vmem:[#allocation10 + $0x1cc] sm:$0xff]
    %v1988 = vld [vmem:[#allocation10 + $0x1d4] sm:$0xff]
    %v1989 = vld [vmem:[#allocation10 + $0x1dc] sm:$0xf]
    %v1990 = vld [vmem:[#allocation10 + $0x1e0] sm:$0xff]
    %v1991 = vld [vmem:[#allocation10 + $0x1e8] sm:$0xff]
    %v1992 = vld [vmem:[#allocation10 + $0x1f0] sm:$0xf]
    %v1993 = vld [vmem:[#allocation10 + $0x1f4] sm:$0xff]
    %v1994 = vld [vmem:[#allocation10 + $0x1fc] sm:$0xff]
    %v1995 = vld [vmem:[#allocation10 + $0x204] sm:$0xf]
    %v1996 = vld [vmem:[#allocation10 + $0x208] sm:$0xff]
    %v1997 = vld [vmem:[#allocation10 + $0x210] sm:$0xff]
    %v1998 = vld [vmem:[#allocation10 + $0x218] sm:$0xf]
    %v1999 = vld [vmem:[#allocation10 + $0x21c] sm:$0xff]
    %v2000 = vld [vmem:[#allocation10 + $0x224] sm:$0xff]
    %v2001 = vld [vmem:[#allocation10 + $0x22c] sm:$0xf]
    %v2002 = vld [vmem:[#allocation10 + $0x230] sm:$0xff]
    %v2003 = vld [vmem:[#allocation10 + $0x238] sm:$0xff]
    %v2004 = vld [vmem:[#allocation10 + $0x240] sm:$0xf]
    %v2005 = vld [vmem:[#allocation10 + $0x244] sm:$0xff]
    %v2006 = vld [vmem:[#allocation10 + $0x24c] sm:$0xff]
    %v2007 = vld [vmem:[#allocation10 + $0x254] sm:$0xf]
    %v2008 = vld [vmem:[#allocation10 + $0x258] sm:$0xff]
    %v2009 = vld [vmem:[#allocation10 + $0x260] sm:$0xff]
    %v2010 = vld [vmem:[#allocation10 + $0x268] sm:$0xf]
    %v2011 = vld [vmem:[#allocation10 + $0x26c] sm:$0xff]
    %v2012 = vld [vmem:[#allocation10 + $0x274] sm:$0xff]
    %v2013 = vld [vmem:[#allocation10 + $0x27c] sm:$0xf]
    %v2014 = vld [vmem:[#allocation10 + $0x280] sm:$0xff]
    %v2015 = vld [vmem:[#allocation10 + $0x288] sm:$0xff]
    %v2016 = vld [vmem:[#allocation10 + $0x290] sm:$0xf]
    %v2017 = vld [vmem:[#allocation10 + $0x294] sm:$0xff]
    %v2018 = vld [vmem:[#allocation10 + $0x29c] sm:$0xff]
    %v2019 = vld [vmem:[#allocation10 + $0x2a4] sm:$0xf]
    %v2020 = vld [vmem:[#allocation10 + $0x2a8] sm:$0xff]
    %v2021 = vld [vmem:[#allocation10 + $0x2b0] sm:$0xff]
    %v2022 = vld [vmem:[#allocation10 + $0x2b8] sm:$0xf]
    %v2023 = vld [vmem:[#allocation10 + $0x2bc] sm:$0xff]
    %v2024 = vld [vmem:[#allocation10 + $0x2c4] sm:$0xff]
    %v2025 = vld [vmem:[#allocation10 + $0x2cc] sm:$0xf]
    %v2026 = vld [vmem:[#allocation10 + $0x2d0] sm:$0xff]
    %v2027 = vld [vmem:[#allocation10 + $0x2d8] sm:$0xff]
    %v2028 = vld [vmem:[#allocation10 + $0x2e0] sm:$0xf]
    %v2029 = vld [vmem:[#allocation10 + $0x2e4] sm:$0xff]
    %v2030 = vld [vmem:[#allocation10 + $0x2ec] sm:$0xff]
    %v2031 = vld [vmem:[#allocation10 + $0x2f4] sm:$0xf]
    %v2032 = vld [vmem:[#allocation10 + $0x2f8] sm:$0xff]
    %v2033 = vld [vmem:[#allocation10 + $0x300] sm:$0xff]
    %v2034 = vld [vmem:[#allocation10 + $0x308] sm:$0xf]
    %v2035 = vld [vmem:[#allocation10 + $0x30c] sm:$0xff]
    %v2036 = vld [vmem:[#allocation10 + $0x314] sm:$0xff]
    %v2037 = vld [vmem:[#allocation10 + $0x31c] sm:$0xf]
    %v2038 = vld [vmem:[#allocation10 + $0x320] sm:$0xff]
    %v2039 = vld [vmem:[#allocation10 + $0x328] sm:$0xff]
    %v2040 = vld [vmem:[#allocation10 + $0x330] sm:$0xf]
    %v2041 = vld [vmem:[#allocation10 + $0x334] sm:$0xff]
    %v2042 = vld [vmem:[#allocation10 + $0x33c] sm:$0xff]
    %v2043 = vld [vmem:[#allocation10 + $0x344] sm:$0xf]
    %v2044 = vld [vmem:[#allocation10 + $0x348] sm:$0xff]
    %v2045 = vld [vmem:[#allocation10 + $0x350] sm:$0xff]
    %v2046 = vld [vmem:[#allocation10 + $0x358] sm:$0xf]
    %v2047 = vld [vmem:[#allocation10 + $0x35c] sm:$0xff]
    %v2048 = vld [vmem:[#allocation10 + $0x364] sm:$0xff]
    %v2049 = vld [vmem:[#allocation10 + $0x36c] sm:$0xf]
    %v2050 = vld [vmem:[#allocation10 + $0x370] sm:$0xff]
    %v2051 = vld [vmem:[#allocation10 + $0x378] sm:$0xff]
    %v2052 = vld [vmem:[#allocation10 + $0x380] sm:$0xf]
    %v2053 = vld [vmem:[#allocation10 + $0x384] sm:$0xff]
    %v2054 = vld [vmem:[#allocation10 + $0x38c] sm:$0xff]
    %v2055 = vld [vmem:[#allocation10 + $0x394] sm:$0xf]
    %v2056 = vld [vmem:[#allocation10 + $0x398] sm:$0xff]
    %v2057 = vld [vmem:[#allocation10 + $0x3a0] sm:$0xff]
    %v2058 = vld [vmem:[#allocation10 + $0x3a8] sm:$0xf]
    %v2059 = vld [vmem:[#allocation10 + $0x3ac] sm:$0xff]
    %v2060 = vld [vmem:[#allocation10 + $0x3b4] sm:$0xff]
    %v2061 = vld [vmem:[#allocation10 + $0x3bc] sm:$0xf]
    %v2062 = vld [vmem:[#allocation10 + $0x3c0] sm:$0xff]
    %v2063 = vld [vmem:[#allocation10 + $0x3c8] sm:$0xff]
    %v2064 = vld [vmem:[#allocation10 + $0x3d0] sm:$0xf]
    %v2065 = vld [vmem:[#allocation10 + $0x3d4] sm:$0xff]
    %v2066 = vld [vmem:[#allocation10 + $0x3dc] sm:$0xff]
    %v2067 = vld [vmem:[#allocation10 + $0x3e4] sm:$0xf]
    %v2068 = vld [vmem:[#allocation10 + $0x3e8] sm:$0xff]
    %v2069 = vld [vmem:[#allocation10 + $0x3f0] sm:$0xff]
    %v2070 = vld [vmem:[#allocation10 + $0x3f8] sm:$0xf]
    %v2071 = vld [vmem:[#allocation10 + $0x3fc] sm:$0xff]
    %v2072 = vld [vmem:[#allocation10 + $0x404] sm:$0xff]
    %v2073 = vld [vmem:[#allocation10 + $0x40c] sm:$0xf]
    %v2074 = vld [vmem:[#allocation10 + $0x410] sm:$0xff]
    %v2075 = vld [vmem:[#allocation10 + $0x418] sm:$0xff]
    %v2076 = vld [vmem:[#allocation10 + $0x420] sm:$0xf]
    %v2077 = vld [vmem:[#allocation10 + $0x424] sm:$0xff]
    %v2078 = vld [vmem:[#allocation10 + $0x42c] sm:$0xff]
    %v2079 = vld [vmem:[#allocation10 + $0x434] sm:$0xf]
    %v2080 = vld [vmem:[#allocation10 + $0x438] sm:$0xff]
    %v2081 = vld [vmem:[#allocation10 + $0x440] sm:$0xff]
    %v2082 = vld [vmem:[#allocation10 + $0x448] sm:$0xf]
    %v2083 = vld [vmem:[#allocation10 + $0x44c] sm:$0xff]
    %v2084 = vld [vmem:[#allocation10 + $0x454] sm:$0xff]
    %v2085 = vld [vmem:[#allocation10 + $0x45c] sm:$0xf]
    %v2086 = vld [vmem:[#allocation10 + $0x460] sm:$0xff]
    %v2087 = vld [vmem:[#allocation10 + $0x468] sm:$0xff]
    %v2088 = vld [vmem:[#allocation10 + $0x470] sm:$0xf]
    %v2089 = vld [vmem:[#allocation10 + $0x474] sm:$0xff]
    %v2090 = vld [vmem:[#allocation10 + $0x47c] sm:$0xff]
    %v2091 = vld [vmem:[#allocation10 + $0x484] sm:$0xf]
    %v2092 = vld [vmem:[#allocation10 + $0x488] sm:$0xff]
    %v2093 = vld [vmem:[#allocation10 + $0x490] sm:$0xff]
    %v2094 = vld [vmem:[#allocation10 + $0x498] sm:$0xf]
    %v2095 = vld [vmem:[#allocation10 + $0x49c] sm:$0xff]
    %v2096 = vld [vmem:[#allocation10 + $0x4a4] sm:$0xff]
    %v2097 = vld [vmem:[#allocation10 + $0x4ac] sm:$0xf]
    %v2098 = vld [vmem:[#allocation10 + $0x4b0] sm:$0xff]
    %v2099 = vld [vmem:[#allocation10 + $0x4b8] sm:$0xff]
    %v2100 = vld [vmem:[#allocation10 + $0x4c0] sm:$0xf]
    %v2101 = vld [vmem:[#allocation10 + $0x4c4] sm:$0xff]
    %v2102 = vld [vmem:[#allocation10 + $0x4cc] sm:$0xff]
    %v2103 = vld [vmem:[#allocation10 + $0x4d4] sm:$0xf]
    %v2104 = vld [vmem:[#allocation10 + $0x4d8] sm:$0xff]
    %v2105 = vld [vmem:[#allocation10 + $0x4e0] sm:$0xff]
    %v2106 = vld [vmem:[#allocation10 + $0x4e8] sm:$0xf]
    %v2107 = vld [vmem:[#allocation10 + $0x4ec] sm:$0xff]
    %v2108 = vld [vmem:[#allocation10 + $0x4f4] sm:$0xff]
    %v2109 = vld [vmem:[#allocation10 + $0x4fc] sm:$0xf]
    %v2111 = vlaneseq
    %v2112 = vshrl.u32 %v2111, 7
    %v2113 = vsub.s32 0, %v2112
    %v2114 = vrot.slane %v146, %v2113
    %v2115 = vlaneseq
    %v2116 = vshrl.u32 %v2115, 7
    %v2117 = vsub.s32 1, %v2116
    %v2118 = vrot.slane %v146, %v2117
    %v2119 = vlaneseq
    %v2120 = vshrl.u32 %v2119, 7
    %v2121 = vsub.s32 2, %v2120
    %v2122 = vrot.slane %v146, %v2121
    %v2123 = vlaneseq
    %v2124 = vshrl.u32 %v2123, 7
    %v2125 = vsub.s32 3, %v2124
    %v2126 = vrot.slane %v146, %v2125
    %v2127 = vlaneseq
    %v2128 = vshrl.u32 %v2127, 7
    %v2129 = vsub.s32 4, %v2128
    %v2130 = vrot.slane %v146, %v2129
    %v2328 = vunpack.c.l.b16 %v1918
    %v2329 = vunpack.c.h.b16 %v1918
    %v2330 = vunpack.c.l.b16 %v1919
    %v2331 = vunpack.c.h.b16 %v1919
    %v2332 = vunpack.c.l.b16 %v1920
    %v2333 = vunpack.c.l.b16 %v1921
    %v2334 = vunpack.c.h.b16 %v1921
    %v2335 = vunpack.c.l.b16 %v1922
    %v2336 = vunpack.c.h.b16 %v1922
    %v2337 = vunpack.c.l.b16 %v1923
    %v2338 = vunpack.c.l.b16 %v1924
    %v2339 = vunpack.c.h.b16 %v1924
    %v2340 = vunpack.c.l.b16 %v1925
    %v2341 = vunpack.c.h.b16 %v1925
    %v2342 = vunpack.c.l.b16 %v1926
    %v2343 = vunpack.c.l.b16 %v1927
    %v2344 = vunpack.c.h.b16 %v1927
    %v2345 = vunpack.c.l.b16 %v1928
    %v2346 = vunpack.c.h.b16 %v1928
    %v2347 = vunpack.c.l.b16 %v1929
    %v2348 = vunpack.c.l.b16 %v1930
    %v2349 = vunpack.c.h.b16 %v1930
    %v2350 = vunpack.c.l.b16 %v1931
    %v2351 = vunpack.c.h.b16 %v1931
    %v2352 = vunpack.c.l.b16 %v1932
    %v2353 = vunpack.c.l.b16 %v1933
    %v2354 = vunpack.c.h.b16 %v1933
    %v2355 = vunpack.c.l.b16 %v1934
    %v2356 = vunpack.c.h.b16 %v1934
    %v2357 = vunpack.c.l.b16 %v1935
    %v2358 = vunpack.c.l.b16 %v1936
    %v2359 = vunpack.c.h.b16 %v1936
    %v2360 = vunpack.c.l.b16 %v1937
    %v2361 = vunpack.c.h.b16 %v1937
    %v2362 = vunpack.c.l.b16 %v1938
    %v2363 = vunpack.c.l.b16 %v1939
    %v2364 = vunpack.c.h.b16 %v1939
    %v2365 = vunpack.c.l.b16 %v1940
    %v2366 = vunpack.c.h.b16 %v1940
    %v2367 = vunpack.c.l.b16 %v1941
    %v2368 = vunpack.c.l.b16 %v1942
    %v2369 = vunpack.c.h.b16 %v1942
    %v2370 = vunpack.c.l.b16 %v1943
    %v2371 = vunpack.c.h.b16 %v1943
    %v2372 = vunpack.c.l.b16 %v1944
    %v2373 = vunpack.c.l.b16 %v1945
    %v2374 = vunpack.c.h.b16 %v1945
    %v2375 = vunpack.c.l.b16 %v1946
    %v2376 = vunpack.c.h.b16 %v1946
    %v2377 = vunpack.c.l.b16 %v1947
    %v2378 = vunpack.c.l.b16 %v1948
    %v2379 = vunpack.c.h.b16 %v1948
    %v2380 = vunpack.c.l.b16 %v1949
    %v2381 = vunpack.c.h.b16 %v1949
    %v2382 = vunpack.c.l.b16 %v1950
    %v2383 = vunpack.c.l.b16 %v1951
    %v2384 = vunpack.c.h.b16 %v1951
    %v2385 = vunpack.c.l.b16 %v1952
    %v2386 = vunpack.c.h.b16 %v1952
    %v2387 = vunpack.c.l.b16 %v1953
    %v2388 = vunpack.c.l.b16 %v1954
    %v2389 = vunpack.c.h.b16 %v1954
    %v2390 = vunpack.c.l.b16 %v1955
    %v2391 = vunpack.c.h.b16 %v1955
    %v2392 = vunpack.c.l.b16 %v1956
    %v2393 = vunpack.c.l.b16 %v1957
    %v2394 = vunpack.c.h.b16 %v1957
    %v2395 = vunpack.c.l.b16 %v1958
    %v2396 = vunpack.c.h.b16 %v1958
    %v2397 = vunpack.c.l.b16 %v1959
    %v2398 = vunpack.c.l.b16 %v1960
    %v2399 = vunpack.c.h.b16 %v1960
    %v2400 = vunpack.c.l.b16 %v1961
    %v2401 = vunpack.c.h.b16 %v1961
    %v2402 = vunpack.c.l.b16 %v1962
    %v2403 = vunpack.c.l.b16 %v1963
    %v2404 = vunpack.c.h.b16 %v1963
    %v2405 = vunpack.c.l.b16 %v1964
    %v2406 = vunpack.c.h.b16 %v1964
    %v2407 = vunpack.c.l.b16 %v1965
    %v2408 = vunpack.c.l.b16 %v1966
    %v2409 = vunpack.c.h.b16 %v1966
    %v2410 = vunpack.c.l.b16 %v1967
    %v2411 = vunpack.c.h.b16 %v1967
    %v2412 = vunpack.c.l.b16 %v1968
    %v2413 = vunpack.c.l.b16 %v1969
    %v2414 = vunpack.c.h.b16 %v1969
    %v2415 = vunpack.c.l.b16 %v1970
    %v2416 = vunpack.c.h.b16 %v1970
    %v2417 = vunpack.c.l.b16 %v1971
    %v2418 = vunpack.c.l.b16 %v1972
    %v2419 = vunpack.c.h.b16 %v1972
    %v2420 = vunpack.c.l.b16 %v1973
    %v2421 = vunpack.c.h.b16 %v1973
    %v2422 = vunpack.c.l.b16 %v1974
    %v2423 = vunpack.c.l.b16 %v1975
    %v2424 = vunpack.c.h.b16 %v1975
    %v2425 = vunpack.c.l.b16 %v1976
    %v2426 = vunpack.c.h.b16 %v1976
    %v2427 = vunpack.c.l.b16 %v1977
    %v2428 = vunpack.c.l.b16 %v1978
    %v2429 = vunpack.c.h.b16 %v1978
    %v2430 = vunpack.c.l.b16 %v1979
    %v2431 = vunpack.c.h.b16 %v1979
    %v2432 = vunpack.c.l.b16 %v1980
    %v2433 = vunpack.c.l.b16 %v1981
    %v2434 = vunpack.c.h.b16 %v1981
    %v2435 = vunpack.c.l.b16 %v1982
    %v2436 = vunpack.c.h.b16 %v1982
    %v2437 = vunpack.c.l.b16 %v1983
    %v2438 = vunpack.c.l.b16 %v1984
    %v2439 = vunpack.c.h.b16 %v1984
    %v2440 = vunpack.c.l.b16 %v1985
    %v2441 = vunpack.c.h.b16 %v1985
    %v2442 = vunpack.c.l.b16 %v1986
    %v2443 = vunpack.c.l.b16 %v1987
    %v2444 = vunpack.c.h.b16 %v1987
    %v2445 = vunpack.c.l.b16 %v1988
    %v2446 = vunpack.c.h.b16 %v1988
    %v2447 = vunpack.c.l.b16 %v1989
    %v2448 = vunpack.c.l.b16 %v1990
    %v2449 = vunpack.c.h.b16 %v1990
    %v2450 = vunpack.c.l.b16 %v1991
    %v2451 = vunpack.c.h.b16 %v1991
    %v2452 = vunpack.c.l.b16 %v1992
    %v2453 = vunpack.c.l.b16 %v1993
    %v2454 = vunpack.c.h.b16 %v1993
    %v2455 = vunpack.c.l.b16 %v1994
    %v2456 = vunpack.c.h.b16 %v1994
    %v2457 = vunpack.c.l.b16 %v1995
    %v2458 = vunpack.c.l.b16 %v1996
    %v2459 = vunpack.c.h.b16 %v1996
    %v2460 = vunpack.c.l.b16 %v1997
    %v2461 = vunpack.c.h.b16 %v1997
    %v2462 = vunpack.c.l.b16 %v1998
    %v2463 = vunpack.c.l.b16 %v1999
    %v2464 = vunpack.c.h.b16 %v1999
    %v2465 = vunpack.c.l.b16 %v2000
    %v2466 = vunpack.c.h.b16 %v2000
    %v2467 = vunpack.c.l.b16 %v2001
    %v2468 = vunpack.c.l.b16 %v2002
    %v2469 = vunpack.c.h.b16 %v2002
    %v2470 = vunpack.c.l.b16 %v2003
    %v2471 = vunpack.c.h.b16 %v2003
    %v2472 = vunpack.c.l.b16 %v2004
    %v2473 = vunpack.c.l.b16 %v2005
    %v2474 = vunpack.c.h.b16 %v2005
    %v2475 = vunpack.c.l.b16 %v2006
    %v2476 = vunpack.c.h.b16 %v2006
    %v2477 = vunpack.c.l.b16 %v2007
    %v2478 = vunpack.c.l.b16 %v2008
    %v2479 = vunpack.c.h.b16 %v2008
    %v2480 = vunpack.c.l.b16 %v2009
    %v2481 = vunpack.c.h.b16 %v2009
    %v2482 = vunpack.c.l.b16 %v2010
    %v2483 = vunpack.c.l.b16 %v2011
    %v2484 = vunpack.c.h.b16 %v2011
    %v2485 = vunpack.c.l.b16 %v2012
    %v2486 = vunpack.c.h.b16 %v2012
    %v2487 = vunpack.c.l.b16 %v2013
    %v2488 = vunpack.c.l.b16 %v2014
    %v2489 = vunpack.c.h.b16 %v2014
    %v2490 = vunpack.c.l.b16 %v2015
    %v2491 = vunpack.c.h.b16 %v2015
    %v2492 = vunpack.c.l.b16 %v2016
    %v2493 = vunpack.c.l.b16 %v2017
    %v2494 = vunpack.c.h.b16 %v2017
    %v2495 = vunpack.c.l.b16 %v2018
    %v2496 = vunpack.c.h.b16 %v2018
    %v2497 = vunpack.c.l.b16 %v2019
    %v2498 = vunpack.c.l.b16 %v2020
    %v2499 = vunpack.c.h.b16 %v2020
    %v2500 = vunpack.c.l.b16 %v2021
    %v2501 = vunpack.c.h.b16 %v2021
    %v2502 = vunpack.c.l.b16 %v2022
    %v2503 = vunpack.c.l.b16 %v2023
    %v2504 = vunpack.c.h.b16 %v2023
    %v2505 = vunpack.c.l.b16 %v2024
    %v2506 = vunpack.c.h.b16 %v2024
    %v2507 = vunpack.c.l.b16 %v2025
    %v2508 = vunpack.c.l.b16 %v2026
    %v2509 = vunpack.c.h.b16 %v2026
    %v2510 = vunpack.c.l.b16 %v2027
    %v2511 = vunpack.c.h.b16 %v2027
    %v2512 = vunpack.c.l.b16 %v2028
    %v2513 = vunpack.c.l.b16 %v2029
    %v2514 = vunpack.c.h.b16 %v2029
    %v2515 = vunpack.c.l.b16 %v2030
    %v2516 = vunpack.c.h.b16 %v2030
    %v2517 = vunpack.c.l.b16 %v2031
    %v2518 = vunpack.c.l.b16 %v2032
    %v2519 = vunpack.c.h.b16 %v2032
    %v2520 = vunpack.c.l.b16 %v2033
    %v2521 = vunpack.c.h.b16 %v2033
    %v2522 = vunpack.c.l.b16 %v2034
    %v2523 = vunpack.c.l.b16 %v2035
    %v2524 = vunpack.c.h.b16 %v2035
    %v2525 = vunpack.c.l.b16 %v2036
    %v2526 = vunpack.c.h.b16 %v2036
    %v2527 = vunpack.c.l.b16 %v2037
    %v2528 = vunpack.c.l.b16 %v2038
    %v2529 = vunpack.c.h.b16 %v2038
    %v2530 = vunpack.c.l.b16 %v2039
    %v2531 = vunpack.c.h.b16 %v2039
    %v2532 = vunpack.c.l.b16 %v2040
    %v2533 = vunpack.c.l.b16 %v2041
    %v2534 = vunpack.c.h.b16 %v2041
    %v2535 = vunpack.c.l.b16 %v2042
    %v2536 = vunpack.c.h.b16 %v2042
    %v2537 = vunpack.c.l.b16 %v2043
    %v2538 = vunpack.c.l.b16 %v2044
    %v2539 = vunpack.c.h.b16 %v2044
    %v2540 = vunpack.c.l.b16 %v2045
    %v2541 = vunpack.c.h.b16 %v2045
    %v2542 = vunpack.c.l.b16 %v2046
    %v2543 = vunpack.c.l.b16 %v2047
    %v2544 = vunpack.c.h.b16 %v2047
    %v2545 = vunpack.c.l.b16 %v2048
    %v2546 = vunpack.c.h.b16 %v2048
    %v2547 = vunpack.c.l.b16 %v2049
    %v2548 = vunpack.c.l.b16 %v2050
    %v2549 = vunpack.c.h.b16 %v2050
    %v2550 = vunpack.c.l.b16 %v2051
    %v2551 = vunpack.c.h.b16 %v2051
    %v2552 = vunpack.c.l.b16 %v2052
    %v2553 = vunpack.c.l.b16 %v2053
    %v2554 = vunpack.c.h.b16 %v2053
    %v2555 = vunpack.c.l.b16 %v2054
    %v2556 = vunpack.c.h.b16 %v2054
    %v2557 = vunpack.c.l.b16 %v2055
    %v2558 = vunpack.c.l.b16 %v2056
    %v2559 = vunpack.c.h.b16 %v2056
    %v2560 = vunpack.c.l.b16 %v2057
    %v2561 = vunpack.c.h.b16 %v2057
    %v2562 = vunpack.c.l.b16 %v2058
    %v2563 = vunpack.c.l.b16 %v2059
    %v2564 = vunpack.c.h.b16 %v2059
    %v2565 = vunpack.c.l.b16 %v2060
    %v2566 = vunpack.c.h.b16 %v2060
    %v2567 = vunpack.c.l.b16 %v2061
    %v2568 = vunpack.c.l.b16 %v2062
    %v2569 = vunpack.c.h.b16 %v2062
    %v2570 = vunpack.c.l.b16 %v2063
    %v2571 = vunpack.c.h.b16 %v2063
    %v2572 = vunpack.c.l.b16 %v2064
    %v2573 = vunpack.c.l.b16 %v2065
    %v2574 = vunpack.c.h.b16 %v2065
    %v2575 = vunpack.c.l.b16 %v2066
    %v2576 = vunpack.c.h.b16 %v2066
    %v2577 = vunpack.c.l.b16 %v2067
    %v2578 = vunpack.c.l.b16 %v2068
    %v2579 = vunpack.c.h.b16 %v2068
    %v2580 = vunpack.c.l.b16 %v2069
    %v2581 = vunpack.c.h.b16 %v2069
    %v2582 = vunpack.c.l.b16 %v2070
    %v2583 = vunpack.c.l.b16 %v2071
    %v2584 = vunpack.c.h.b16 %v2071
    %v2585 = vunpack.c.l.b16 %v2072
    %v2586 = vunpack.c.h.b16 %v2072
    %v2587 = vunpack.c.l.b16 %v2073
    %v2588 = vunpack.c.l.b16 %v2074
    %v2589 = vunpack.c.h.b16 %v2074
    %v2590 = vunpack.c.l.b16 %v2075
    %v2591 = vunpack.c.h.b16 %v2075
    %v2592 = vunpack.c.l.b16 %v2076
    %v2593 = vunpack.c.l.b16 %v2077
    %v2594 = vunpack.c.h.b16 %v2077
    %v2595 = vunpack.c.l.b16 %v2078
    %v2596 = vunpack.c.h.b16 %v2078
    %v2597 = vunpack.c.l.b16 %v2079
    %v2598 = vunpack.c.l.b16 %v2080
    %v2599 = vunpack.c.h.b16 %v2080
    %v2600 = vunpack.c.l.b16 %v2081
    %v2601 = vunpack.c.h.b16 %v2081
    %v2602 = vunpack.c.l.b16 %v2082
    %v2603 = vunpack.c.l.b16 %v2083
    %v2604 = vunpack.c.h.b16 %v2083
    %v2605 = vunpack.c.l.b16 %v2084
    %v2606 = vunpack.c.h.b16 %v2084
    %v2607 = vunpack.c.l.b16 %v2085
    %v2608 = vunpack.c.l.b16 %v2086
    %v2609 = vunpack.c.h.b16 %v2086
    %v2610 = vunpack.c.l.b16 %v2087
    %v2611 = vunpack.c.h.b16 %v2087
    %v2612 = vunpack.c.l.b16 %v2088
    %v2613 = vunpack.c.l.b16 %v2089
    %v2614 = vunpack.c.h.b16 %v2089
    %v2615 = vunpack.c.l.b16 %v2090
    %v2616 = vunpack.c.h.b16 %v2090
    %v2617 = vunpack.c.l.b16 %v2091
    %v2618 = vunpack.c.l.b16 %v2092
    %v2619 = vunpack.c.h.b16 %v2092
    %v2620 = vunpack.c.l.b16 %v2093
    %v2621 = vunpack.c.h.b16 %v2093
    %v2622 = vunpack.c.l.b16 %v2094
    %v2623 = vunpack.c.l.b16 %v2095
    %v2624 = vunpack.c.h.b16 %v2095
    %v2625 = vunpack.c.l.b16 %v2096
    %v2626 = vunpack.c.h.b16 %v2096
    %v2627 = vunpack.c.l.b16 %v2097
    %v2628 = vunpack.c.l.b16 %v2098
    %v2629 = vunpack.c.h.b16 %v2098
    %v2630 = vunpack.c.l.b16 %v2099
    %v2631 = vunpack.c.h.b16 %v2099
    %v2632 = vunpack.c.l.b16 %v2100
    %v2633 = vunpack.c.l.b16 %v2101
    %v2634 = vunpack.c.h.b16 %v2101
    %v2635 = vunpack.c.l.b16 %v2102
    %v2636 = vunpack.c.h.b16 %v2102
    %v2637 = vunpack.c.l.b16 %v2103
    %v2638 = vunpack.c.l.b16 %v2104
    %v2639 = vunpack.c.h.b16 %v2104
    %v2640 = vunpack.c.l.b16 %v2105
    %v2641 = vunpack.c.h.b16 %v2105
    %v2642 = vunpack.c.l.b16 %v2106
    %v2643 = vunpack.c.l.b16 %v2107
    %v2644 = vunpack.c.h.b16 %v2107
    %v2645 = vunpack.c.l.b16 %v2108
    %v2646 = vunpack.c.h.b16 %v2108
    %v2647 = vunpack.c.l.b16 %v2109
    %v2648 = vpack.c.b16 %v2333, %v2328
    %v2649 = vpack.c.b16 %v2334, %v2329
    %v2650 = vpack.c.b16 %v2335, %v2330
    %v2651 = vpack.c.b16 %v2336, %v2331
    %v2652 = vpack.c.b16 %v2337, %v2332
    %v2653 = vpack.c.b16 %v2343, %v2338
    %v2654 = vpack.c.b16 %v2344, %v2339
    %v2655 = vpack.c.b16 %v2345, %v2340
    %v2656 = vpack.c.b16 %v2346, %v2341
    %v2657 = vpack.c.b16 %v2347, %v2342
    %v2658 = vpack.c.b16 %v2353, %v2348
    %v2659 = vpack.c.b16 %v2354, %v2349
    %v2660 = vpack.c.b16 %v2355, %v2350
    %v2661 = vpack.c.b16 %v2356, %v2351
    %v2662 = vpack.c.b16 %v2357, %v2352
    %v2663 = vpack.c.b16 %v2363, %v2358
    %v2664 = vpack.c.b16 %v2364, %v2359
    %v2665 = vpack.c.b16 %v2365, %v2360
    %v2666 = vpack.c.b16 %v2366, %v2361
    %v2667 = vpack.c.b16 %v2367, %v2362
    %v2668 = vpack.c.b16 %v2373, %v2368
    %v2669 = vpack.c.b16 %v2374, %v2369
    %v2670 = vpack.c.b16 %v2375, %v2370
    %v2671 = vpack.c.b16 %v2376, %v2371
    %v2672 = vpack.c.b16 %v2377, %v2372
    %v2673 = vpack.c.b16 %v2383, %v2378
    %v2674 = vpack.c.b16 %v2384, %v2379
    %v2675 = vpack.c.b16 %v2385, %v2380
    %v2676 = vpack.c.b16 %v2386, %v2381
    %v2677 = vpack.c.b16 %v2387, %v2382
    %v2678 = vpack.c.b16 %v2393, %v2388
    %v2679 = vpack.c.b16 %v2394, %v2389
    %v2680 = vpack.c.b16 %v2395, %v2390
    %v2681 = vpack.c.b16 %v2396, %v2391
    %v2682 = vpack.c.b16 %v2397, %v2392
    %v2683 = vpack.c.b16 %v2403, %v2398
    %v2684 = vpack.c.b16 %v2404, %v2399
    %v2685 = vpack.c.b16 %v2405, %v2400
    %v2686 = vpack.c.b16 %v2406, %v2401
    %v2687 = vpack.c.b16 %v2407, %v2402
    %v2688 = vpack.c.b16 %v2413, %v2408
    %v2689 = vpack.c.b16 %v2414, %v2409
    %v2690 = vpack.c.b16 %v2415, %v2410
    %v2691 = vpack.c.b16 %v2416, %v2411
    %v2692 = vpack.c.b16 %v2417, %v2412
    %v2693 = vpack.c.b16 %v2423, %v2418
    %v2694 = vpack.c.b16 %v2424, %v2419
    %v2695 = vpack.c.b16 %v2425, %v2420
    %v2696 = vpack.c.b16 %v2426, %v2421
    %v2697 = vpack.c.b16 %v2427, %v2422
    %v2698 = vpack.c.b16 %v2433, %v2428
    %v2699 = vpack.c.b16 %v2434, %v2429
    %v2700 = vpack.c.b16 %v2435, %v2430
    %v2701 = vpack.c.b16 %v2436, %v2431
    %v2702 = vpack.c.b16 %v2437, %v2432
    %v2703 = vpack.c.b16 %v2443, %v2438
    %v2704 = vpack.c.b16 %v2444, %v2439
    %v2705 = vpack.c.b16 %v2445, %v2440
    %v2706 = vpack.c.b16 %v2446, %v2441
    %v2707 = vpack.c.b16 %v2447, %v2442
    %v2708 = vpack.c.b16 %v2453, %v2448
    %v2709 = vpack.c.b16 %v2454, %v2449
    %v2710 = vpack.c.b16 %v2455, %v2450
    %v2711 = vpack.c.b16 %v2456, %v2451
    %v2712 = vpack.c.b16 %v2457, %v2452
    %v2713 = vpack.c.b16 %v2463, %v2458
    %v2714 = vpack.c.b16 %v2464, %v2459
    %v2715 = vpack.c.b16 %v2465, %v2460
    %v2716 = vpack.c.b16 %v2466, %v2461
    %v2717 = vpack.c.b16 %v2467, %v2462
    %v2718 = vpack.c.b16 %v2473, %v2468
    %v2719 = vpack.c.b16 %v2474, %v2469
    %v2720 = vpack.c.b16 %v2475, %v2470
    %v2721 = vpack.c.b16 %v2476, %v2471
    %v2722 = vpack.c.b16 %v2477, %v2472
    %v2723 = vpack.c.b16 %v2483, %v2478
    %v2724 = vpack.c.b16 %v2484, %v2479
    %v2725 = vpack.c.b16 %v2485, %v2480
    %v2726 = vpack.c.b16 %v2486, %v2481
    %v2727 = vpack.c.b16 %v2487, %v2482
    %v2728 = vpack.c.b16 %v2493, %v2488
    %v2729 = vpack.c.b16 %v2494, %v2489
    %v2730 = vpack.c.b16 %v2495, %v2490
    %v2731 = vpack.c.b16 %v2496, %v2491
    %v2732 = vpack.c.b16 %v2497, %v2492
    %v2733 = vpack.c.b16 %v2503, %v2498
    %v2734 = vpack.c.b16 %v2504, %v2499
    %v2735 = vpack.c.b16 %v2505, %v2500
    %v2736 = vpack.c.b16 %v2506, %v2501
    %v2737 = vpack.c.b16 %v2507, %v2502
    %v2738 = vpack.c.b16 %v2513, %v2508
    %v2739 = vpack.c.b16 %v2514, %v2509
    %v2740 = vpack.c.b16 %v2515, %v2510
    %v2741 = vpack.c.b16 %v2516, %v2511
    %v2742 = vpack.c.b16 %v2517, %v2512
    %v2743 = vpack.c.b16 %v2523, %v2518
    %v2744 = vpack.c.b16 %v2524, %v2519
    %v2745 = vpack.c.b16 %v2525, %v2520
    %v2746 = vpack.c.b16 %v2526, %v2521
    %v2747 = vpack.c.b16 %v2527, %v2522
    %v2748 = vpack.c.b16 %v2533, %v2528
    %v2749 = vpack.c.b16 %v2534, %v2529
    %v2750 = vpack.c.b16 %v2535, %v2530
    %v2751 = vpack.c.b16 %v2536, %v2531
    %v2752 = vpack.c.b16 %v2537, %v2532
    %v2753 = vpack.c.b16 %v2543, %v2538
    %v2754 = vpack.c.b16 %v2544, %v2539
    %v2755 = vpack.c.b16 %v2545, %v2540
    %v2756 = vpack.c.b16 %v2546, %v2541
    %v2757 = vpack.c.b16 %v2547, %v2542
    %v2758 = vpack.c.b16 %v2553, %v2548
    %v2759 = vpack.c.b16 %v2554, %v2549
    %v2760 = vpack.c.b16 %v2555, %v2550
    %v2761 = vpack.c.b16 %v2556, %v2551
    %v2762 = vpack.c.b16 %v2557, %v2552
    %v2763 = vpack.c.b16 %v2563, %v2558
    %v2764 = vpack.c.b16 %v2564, %v2559
    %v2765 = vpack.c.b16 %v2565, %v2560
    %v2766 = vpack.c.b16 %v2566, %v2561
    %v2767 = vpack.c.b16 %v2567, %v2562
    %v2768 = vpack.c.b16 %v2573, %v2568
    %v2769 = vpack.c.b16 %v2574, %v2569
    %v2770 = vpack.c.b16 %v2575, %v2570
    %v2771 = vpack.c.b16 %v2576, %v2571
    %v2772 = vpack.c.b16 %v2577, %v2572
    %v2773 = vpack.c.b16 %v2583, %v2578
    %v2774 = vpack.c.b16 %v2584, %v2579
    %v2775 = vpack.c.b16 %v2585, %v2580
    %v2776 = vpack.c.b16 %v2586, %v2581
    %v2777 = vpack.c.b16 %v2587, %v2582
    %v2778 = vpack.c.b16 %v2593, %v2588
    %v2779 = vpack.c.b16 %v2594, %v2589
    %v2780 = vpack.c.b16 %v2595, %v2590
    %v2781 = vpack.c.b16 %v2596, %v2591
    %v2782 = vpack.c.b16 %v2597, %v2592
    %v2783 = vpack.c.b16 %v2603, %v2598
    %v2784 = vpack.c.b16 %v2604, %v2599
    %v2785 = vpack.c.b16 %v2605, %v2600
    %v2786 = vpack.c.b16 %v2606, %v2601
    %v2787 = vpack.c.b16 %v2607, %v2602
    %v2788 = vpack.c.b16 %v2613, %v2608
    %v2789 = vpack.c.b16 %v2614, %v2609
    %v2790 = vpack.c.b16 %v2615, %v2610
    %v2791 = vpack.c.b16 %v2616, %v2611
    %v2792 = vpack.c.b16 %v2617, %v2612
    %v2793 = vpack.c.b16 %v2623, %v2618
    %v2794 = vpack.c.b16 %v2624, %v2619
    %v2795 = vpack.c.b16 %v2625, %v2620
    %v2796 = vpack.c.b16 %v2626, %v2621
    %v2797 = vpack.c.b16 %v2627, %v2622
    %v2798 = vpack.c.b16 %v2633, %v2628
    %v2799 = vpack.c.b16 %v2634, %v2629
    %v2800 = vpack.c.b16 %v2635, %v2630
    %v2801 = vpack.c.b16 %v2636, %v2631
    %v2802 = vpack.c.b16 %v2637, %v2632
    %v2803 = vpack.c.b16 %v2643, %v2638
    %v2804 = vpack.c.b16 %v2644, %v2639
    %v2805 = vpack.c.b16 %v2645, %v2640
    %v2806 = vpack.c.b16 %v2646, %v2641
    %v2807 = vpack.c.b16 %v2647, %v2642
    %2968 = vmatprep.subr.bf16.mxu0 %v2684
    %2969 = vmatpush1.bf16.msra.mxu0 %v2683
    %2970 = vmatprep.subr.bf16.mxu0 %v2679
    %2971 = vmatpush1.bf16.msra.mxu0 %v2678
    %2972 = vmatprep.subr.bf16.mxu0 %v2674
    %2973 = vmatpush1.bf16.msra.mxu0 %v2673
    %2974 = vmatprep.subr.bf16.mxu0 %v2669
    %2975 = vmatpush1.bf16.msra.mxu0 %v2668
    %2976 = vmatprep.subr.bf16.mxu0 %v2664
    %2977 = vmatpush1.bf16.msra.mxu0 %v2663
    %2978 = vmatprep.subr.bf16.mxu0 %v2659
    %2979 = vmatpush1.bf16.msra.mxu0 %v2658
    %2980 = vmatprep.subr.bf16.mxu0 %v2654
    %2981 = vmatpush1.bf16.msra.mxu0 %v2653
    %2982 = vmatprep.subr.bf16.mxu0 %v2649
    %2983 = vmatpush1.bf16.msra.mxu0 %v2648
    %2984 = vmatprep.subr.bf16.mxu0 %v2724
    %2985 = vmatpush2.bf16.msra.mxu0 %v2723
    %2986 = vmatprep.subr.bf16.mxu0 %v2719
    %2987 = vmatpush2.bf16.msra.mxu0 %v2718
    %2988 = vmatprep.subr.bf16.mxu0 %v2714
    %2989 = vmatpush2.bf16.msra.mxu0 %v2713
    %2990 = vmatprep.subr.bf16.mxu0 %v2709
    %2991 = vmatpush2.bf16.msra.mxu0 %v2708
    %2992 = vmatprep.subr.bf16.mxu0 %v2704
    %2993 = vmatpush2.bf16.msra.mxu0 %v2703
    %2994 = vmatprep.subr.bf16.mxu0 %v2699
    %2995 = vmatpush2.bf16.msra.mxu0 %v2698
    %2996 = vmatprep.subr.bf16.mxu0 %v2694
    %2997 = vmatpush2.bf16.msra.mxu0 %v2693
    %2998 = vmatprep.subr.bf16.mxu0 %v2689
    %2999 = vmatpush2.bf16.msra.mxu0 %v2688
    %3000 = vmatprep.mubr.bf16.mxu0 %v1915
    %3001 = vmatmul.mubr.bf16.gmra.mxu0 %v1914
    %v3002 = vpop.f32.mrf.mxu0
    %v3003 = vadd.f32 %v2114, %v3002
    %v3004 = vpop.f32.mrf.mxu0
    %v3005 = vadd.f32 %v2118, %v3004
    %v3006 = vpop.f32.mrf.mxu0
    %v3007 = vadd.f32 %v2114, %v3006
    %v3008 = vpop.f32.mrf.mxu0
    %v3009 = vadd.f32 %v2118, %v3008
    %3010 = vdwg.mxu0
    %3011 = vmatprep.subr.bf16.mxu0 %v2764
    %3012 = vmatpush1.bf16.msra.mxu0 %v2763
    %3013 = vmatprep.subr.bf16.mxu0 %v2759
    %3014 = vmatpush1.bf16.msra.mxu0 %v2758
    %3015 = vmatprep.subr.bf16.mxu0 %v2754
    %3016 = vmatpush1.bf16.msra.mxu0 %v2753
    %3017 = vmatprep.subr.bf16.mxu0 %v2749
    %3018 = vmatpush1.bf16.msra.mxu0 %v2748
    %3019 = vmatprep.subr.bf16.mxu0 %v2744
    %3020 = vmatpush1.bf16.msra.mxu0 %v2743
    %3021 = vmatprep.subr.bf16.mxu0 %v2739
    %3022 = vmatpush1.bf16.msra.mxu0 %v2738
    %3023 = vmatprep.subr.bf16.mxu0 %v2734
    %3024 = vmatpush1.bf16.msra.mxu0 %v2733
    %3025 = vmatprep.subr.bf16.mxu0 %v2729
    %3026 = vmatpush1.bf16.msra.mxu0 %v2728
    %3027 = vmatprep.subr.bf16.mxu0 %v2804
    %3028 = vmatpush2.bf16.msra.mxu0 %v2803
    %3029 = vmatprep.subr.bf16.mxu0 %v2799
    %3030 = vmatpush2.bf16.msra.mxu0 %v2798
    %3031 = vmatprep.subr.bf16.mxu0 %v2794
    %3032 = vmatpush2.bf16.msra.mxu0 %v2793
    %3033 = vmatprep.subr.bf16.mxu0 %v2789
    %3034 = vmatpush2.bf16.msra.mxu0 %v2788
    %3035 = vmatprep.subr.bf16.mxu0 %v2784
    %3036 = vmatpush2.bf16.msra.mxu0 %v2783
    %3037 = vmatprep.subr.bf16.mxu0 %v2779
    %3038 = vmatpush2.bf16.msra.mxu0 %v2778
    %3039 = vmatprep.subr.bf16.mxu0 %v2774
    %3040 = vmatpush2.bf16.msra.mxu0 %v2773
    %3041 = vmatprep.subr.bf16.mxu0 %v2769
    %3042 = vmatpush2.bf16.msra.mxu0 %v2768
    %3043 = vmatprep.mubr.bf16.mxu0 %v1917
    %3044 = vmatmul.mubr.bf16.gmra.mxu0 %v1916
    %v3045 = vpop.f32.mrf.mxu0
    %v3046 = vadd.f32 %v3003, %v3045
    %v3047 = vpop.f32.mrf.mxu0
    %v3048 = vadd.f32 %v3005, %v3047
    %v3049 = vpop.f32.mrf.mxu0
    %v3050 = vadd.f32 %v3007, %v3049
    %v3051 = vpop.f32.mrf.mxu0
    %v3052 = vadd.f32 %v3009, %v3051
    %3053 = vdwg.mxu0
    %3054 = vmatprep.subr.bf16.mxu0 %v2686
    %3055 = vmatpush1.bf16.msra.mxu0 %v2685
    %3056 = vmatprep.subr.bf16.mxu0 %v2681
    %3057 = vmatpush1.bf16.msra.mxu0 %v2680
    %3058 = vmatprep.subr.bf16.mxu0 %v2676
    %3059 = vmatpush1.bf16.msra.mxu0 %v2675
    %3060 = vmatprep.subr.bf16.mxu0 %v2671
    %3061 = vmatpush1.bf16.msra.mxu0 %v2670
    %3062 = vmatprep.subr.bf16.mxu0 %v2666
    %3063 = vmatpush1.bf16.msra.mxu0 %v2665
    %3064 = vmatprep.subr.bf16.mxu0 %v2661
    %3065 = vmatpush1.bf16.msra.mxu0 %v2660
    %3066 = vmatprep.subr.bf16.mxu0 %v2656
    %3067 = vmatpush1.bf16.msra.mxu0 %v2655
    %3068 = vmatprep.subr.bf16.mxu0 %v2651
    %3069 = vmatpush1.bf16.msra.mxu0 %v2650
    %3070 = vmatprep.subr.bf16.mxu0 %v2726
    %3071 = vmatpush2.bf16.msra.mxu0 %v2725
    %3072 = vmatprep.subr.bf16.mxu0 %v2721
    %3073 = vmatpush2.bf16.msra.mxu0 %v2720
    %3074 = vmatprep.subr.bf16.mxu0 %v2716
    %3075 = vmatpush2.bf16.msra.mxu0 %v2715
    %3076 = vmatprep.subr.bf16.mxu0 %v2711
    %3077 = vmatpush2.bf16.msra.mxu0 %v2710
    %3078 = vmatprep.subr.bf16.mxu0 %v2706
    %3079 = vmatpush2.bf16.msra.mxu0 %v2705
    %3080 = vmatprep.subr.bf16.mxu0 %v2701
    %3081 = vmatpush2.bf16.msra.mxu0 %v2700
    %3082 = vmatprep.subr.bf16.mxu0 %v2696
    %3083 = vmatpush2.bf16.msra.mxu0 %v2695
    %3084 = vmatprep.subr.bf16.mxu0 %v2691
    %3085 = vmatpush2.bf16.msra.mxu0 %v2690
    %3086 = vmatprep.mubr.bf16.mxu0 %v1915
    %3087 = vmatmul.mubr.bf16.gmra.mxu0 %v1914
    %v3088 = vpop.f32.mrf.mxu0
    %v3089 = vadd.f32 %v2122, %v3088
    %v3090 = vpop.f32.mrf.mxu0
    %v3091 = vadd.f32 %v2126, %v3090
    %v3092 = vpop.f32.mrf.mxu0
    %v3093 = vadd.f32 %v2122, %v3092
    %v3094 = vpop.f32.mrf.mxu0
    %v3095 = vadd.f32 %v2126, %v3094
    %3096 = vdwg.mxu0
    %3097 = vmatprep.subr.bf16.mxu0 %v2766
    %3098 = vmatpush1.bf16.msra.mxu0 %v2765
    %3099 = vmatprep.subr.bf16.mxu0 %v2761
    %3100 = vmatpush1.bf16.msra.mxu0 %v2760
    %3101 = vmatprep.subr.bf16.mxu0 %v2756
    %3102 = vmatpush1.bf16.msra.mxu0 %v2755
    %3103 = vmatprep.subr.bf16.mxu0 %v2751
    %3104 = vmatpush1.bf16.msra.mxu0 %v2750
    %3105 = vmatprep.subr.bf16.mxu0 %v2746
    %3106 = vmatpush1.bf16.msra.mxu0 %v2745
    %3107 = vmatprep.subr.bf16.mxu0 %v2741
    %3108 = vmatpush1.bf16.msra.mxu0 %v2740
    %3109 = vmatprep.subr.bf16.mxu0 %v2736
    %3110 = vmatpush1.bf16.msra.mxu0 %v2735
    %3111 = vmatprep.subr.bf16.mxu0 %v2731
    %3112 = vmatpush1.bf16.msra.mxu0 %v2730
    %3113 = vmatprep.subr.bf16.mxu0 %v2806
    %3114 = vmatpush2.bf16.msra.mxu0 %v2805
    %3115 = vmatprep.subr.bf16.mxu0 %v2801
    %3116 = vmatpush2.bf16.msra.mxu0 %v2800
    %3117 = vmatprep.subr.bf16.mxu0 %v2796
    %3118 = vmatpush2.bf16.msra.mxu0 %v2795
    %3119 = vmatprep.subr.bf16.mxu0 %v2791
    %3120 = vmatpush2.bf16.msra.mxu0 %v2790
    %3121 = vmatprep.subr.bf16.mxu0 %v2786
    %3122 = vmatpush2.bf16.msra.mxu0 %v2785
    %3123 = vmatprep.subr.bf16.mxu0 %v2781
    %3124 = vmatpush2.bf16.msra.mxu0 %v2780
    %3125 = vmatprep.subr.bf16.mxu0 %v2776
    %3126 = vmatpush2.bf16.msra.mxu0 %v2775
    %3127 = vmatprep.subr.bf16.mxu0 %v2771
    %3128 = vmatpush2.bf16.msra.mxu0 %v2770
    %3129 = vmatprep.mubr.bf16.mxu0 %v1917
    %3130 = vmatmul.mubr.bf16.gmra.mxu0 %v1916
    %v3131 = vpop.f32.mrf.mxu0
    %v3132 = vadd.f32 %v3089, %v3131
    %v3133 = vpop.f32.mrf.mxu0
    %v3134 = vadd.f32 %v3091, %v3133
    %v3135 = vpop.f32.mrf.mxu0
    %v3136 = vadd.f32 %v3093, %v3135
    %v3137 = vpop.f32.mrf.mxu0
    %v3138 = vadd.f32 %v3095, %v3137
    %3139 = vdwg.mxu0
    %3140 = vmatprep.subr.bf16.mxu0 0
    %3141 = vmatpush1.bf16.msra.mxu0 %v2687
    %3142 = vmatprep.subr.bf16.mxu0 0
    %3143 = vmatpush1.bf16.msra.mxu0 %v2682
    %3144 = vmatprep.subr.bf16.mxu0 0
    %3145 = vmatpush1.bf16.msra.mxu0 %v2677
    %3146 = vmatprep.subr.bf16.mxu0 0
    %3147 = vmatpush1.bf16.msra.mxu0 %v2672
    %3148 = vmatprep.subr.bf16.mxu0 0
    %3149 = vmatpush1.bf16.msra.mxu0 %v2667
    %3150 = vmatprep.subr.bf16.mxu0 0
    %3151 = vmatpush1.bf16.msra.mxu0 %v2662
    %3152 = vmatprep.subr.bf16.mxu0 0
    %3153 = vmatpush1.bf16.msra.mxu0 %v2657
    %3154 = vmatprep.subr.bf16.mxu0 0
    %3155 = vmatpush1.bf16.msra.mxu0 %v2652
    %3156 = vmatprep.subr.bf16.mxu0 0
    %3157 = vmatpush2.bf16.msra.mxu0 %v2727
    %3158 = vmatprep.subr.bf16.mxu0 0
    %3159 = vmatpush2.bf16.msra.mxu0 %v2722
    %3160 = vmatprep.subr.bf16.mxu0 0
    %3161 = vmatpush2.bf16.msra.mxu0 %v2717
    %3162 = vmatprep.subr.bf16.mxu0 0
    %3163 = vmatpush2.bf16.msra.mxu0 %v2712
    %3164 = vmatprep.subr.bf16.mxu0 0
    %3165 = vmatpush2.bf16.msra.mxu0 %v2707
    %3166 = vmatprep.subr.bf16.mxu0 0
    %3167 = vmatpush2.bf16.msra.mxu0 %v2702
    %3168 = vmatprep.subr.bf16.mxu0 0
    %3169 = vmatpush2.bf16.msra.mxu0 %v2697
    %3170 = vmatprep.subr.bf16.mxu0 0
    %3171 = vmatpush2.bf16.msra.mxu0 %v2692
    %3172 = vmatprep.mubr.bf16.mxu0 %v1915
    %3173 = vmatmul.mubr.bf16.gmra.mxu0 %v1914
    %v3174 = vpop.f32.mrf.mxu0
    %v3175 = vadd.f32 %v2130, %v3174
    %v3176 = vpop.f32.mrf.mxu0
    %v3177 = vpop.f32.mrf.mxu0
    %v3178 = vadd.f32 %v2130, %v3177
    %v3179 = vpop.f32.mrf.mxu0
    %3180 = vdwg.mxu0
    %3181 = vmatprep.subr.bf16.mxu0 0
    %3182 = vmatpush1.bf16.msra.mxu0 %v2767
    %3183 = vmatprep.subr.bf16.mxu0 0
    %3184 = vmatpush1.bf16.msra.mxu0 %v2762
    %3185 = vmatprep.subr.bf16.mxu0 0
    %3186 = vmatpush1.bf16.msra.mxu0 %v2757
    %3187 = vmatprep.subr.bf16.mxu0 0
    %3188 = vmatpush1.bf16.msra.mxu0 %v2752
    %3189 = vmatprep.subr.bf16.mxu0 0
    %3190 = vmatpush1.bf16.msra.mxu0 %v2747
    %3191 = vmatprep.subr.bf16.mxu0 0
    %3192 = vmatpush1.bf16.msra.mxu0 %v2742
    %3193 = vmatprep.subr.bf16.mxu0 0
    %3194 = vmatpush1.bf16.msra.mxu0 %v2737
    %3195 = vmatprep.subr.bf16.mxu0 0
    %3196 = vmatpush1.bf16.msra.mxu0 %v2732
    %3197 = vmatprep.subr.bf16.mxu0 0
    %3198 = vmatpush2.bf16.msra.mxu0 %v2807
    %3199 = vmatprep.subr.bf16.mxu0 0
    %3200 = vmatpush2.bf16.msra.mxu0 %v2802
    %3201 = vmatprep.subr.bf16.mxu0 0
    %3202 = vmatpush2.bf16.msra.mxu0 %v2797
    %3203 = vmatprep.subr.bf16.mxu0 0
    %3204 = vmatpush2.bf16.msra.mxu0 %v2792
    %3205 = vmatprep.subr.bf16.mxu0 0
    %3206 = vmatpush2.bf16.msra.mxu0 %v2787
    %3207 = vmatprep.subr.bf16.mxu0 0
    %3208 = vmatpush2.bf16.msra.mxu0 %v2782
    %3209 = vmatprep.subr.bf16.mxu0 0
    %3210 = vmatpush2.bf16.msra.mxu0 %v2777
    %3211 = vmatprep.subr.bf16.mxu0 0
    %3212 = vmatpush2.bf16.msra.mxu0 %v2772
    %3213 = vmatprep.mubr.bf16.mxu0 %v1917
    %3214 = vmatmul.mubr.bf16.gmra.mxu0 %v1916
    %v3215 = vpop.f32.mrf.mxu0
    %v3216 = vadd.f32 %v3175, %v3215
    %v3217 = vpop.f32.mrf.mxu0
    %v3218 = vpop.f32.mrf.mxu0
    %v3219 = vadd.f32 %v3178, %v3218
    %v3220 = vpop.f32.mrf.mxu0
    %3221 = vdwg.mxu0
    %v3222 = vmax.f32 %v3134, 0.0
    %v3223 = vmax.f32 %v3138, 0.0
    %v3224 = vand.u32 2147483647, %v3134
    %v3225 = vand.u32 2147483647, %v3138
    %v3226 = vsub.f32 0.0, %v3224
    %v3227 = vsub.f32 0.0, %v3225
    %v3228 = vmul.f32 %v3226, 1.442695
    %v3229 = vpow.pop %v3228
    %v3230 = vmul.f32 %v3227, 1.442695
    %v3231 = vpow.pop %v3230
    %v3232 = vadd.f32 %v3229, 1.0
    %v3233 = vlog2.pop %v3232
    %v3234 = vmul.f32 %v3233, 0.6931472
    %v3235 = vmul.f32 -0.5, %v3229
    %v3236 = vadd.f32 %v3235, 1.0
    %v3237 = vmul.f32 %v3236, %v3229
    %v3238 = vand.u32 2147483647, %v3229
    %vm3239 = vcmp.lt.f32.partialorder %v3238, 0.0004427343
    %v3240 = vsel %vm3239, %v3237, %v3234
    %v3241 = vadd.f32 %v3231, 1.0
    %v3242 = vlog2.pop %v3241
    %v3243 = vmul.f32 %v3242, 0.6931472
    %v3244 = vmul.f32 -0.5, %v3231
    %v3245 = vadd.f32 %v3244, 1.0
    %v3246 = vmul.f32 %v3245, %v3231
    %v3247 = vand.u32 2147483647, %v3231
    %vm3248 = vcmp.lt.f32.partialorder %v3247, 0.0004427343
    %v3249 = vsel %vm3248, %v3246, %v3243
    %v3250 = vadd.f32 %v3222, %v3240
    %v3251 = vadd.f32 %v3223, %v3249
    %v3252 = vadd.f32 %v3250, 0.01
    %v3253 = vadd.f32 %v3251, 0.01
    %v3254 = vmax.f32 %v3216, 0.0
    %v3255 = vmax.f32 %v3219, 0.0
    %v3256 = vand.u32 2147483647, %v3216
    %v3257 = vand.u32 2147483647, %v3219
    %v3258 = vsub.f32 0.0, %v3256
    %v3259 = vsub.f32 0.0, %v3257
    %v3260 = vmul.f32 %v3258, 1.442695
    %v3261 = vpow.pop %v3260
    %v3262 = vmul.f32 %v3259, 1.442695
    %v3263 = vpow.pop %v3262
    %v3264 = vadd.f32 %v3261, 1.0
    %v3265 = vlog2.pop %v3264
    %v3266 = vmul.f32 %v3265, 0.6931472
    %v3267 = vmul.f32 -0.5, %v3261
    %v3268 = vadd.f32 %v3267, 1.0
    %v3269 = vmul.f32 %v3268, %v3261
    %v3270 = vand.u32 2147483647, %v3261
    %vm3271 = vcmp.lt.f32.partialorder %v3270, 0.0004427343
    %v3272 = vsel %vm3271, %v3269, %v3266
    %v3273 = vadd.f32 %v3263, 1.0
    %v3274 = vlog2.pop %v3273
    %v3275 = vmul.f32 %v3274, 0.6931472
    %v3276 = vmul.f32 -0.5, %v3263
    %v3277 = vadd.f32 %v3276, 1.0
    %v3278 = vmul.f32 %v3277, %v3263
    %v3279 = vand.u32 2147483647, %v3263
    %vm3280 = vcmp.lt.f32.partialorder %v3279, 0.0004427343
    %v3281 = vsel %vm3280, %v3278, %v3275
    %v3282 = vadd.f32 %v3254, %v3272
    %v3283 = vadd.f32 %v3255, %v3281
    %v3284 = vadd.f32 %v3282, 0.01
    %v3285 = vadd.f32 %v3283, 0.01
    %v3286 = vadd.f32 %v3132, %v151
    %v3287 = vadd.f32 %v3136, %v152
    %v3288 = vmul.f32 %v3286, 1.5151515
    %v3289 = vmul.f32 %v3287, 1.5151515
    %v3290 = vmul.f32 %v3288, 0.5
    %v3291 = vmul.f32 %v3289, 0.5
    %v3292 = vtanh.pop %v3290
    %v3293 = vtanh.pop %v3291
    %v3294 = vmul.f32 %v3292, 0.5
    %v3295 = vmul.f32 %v3293, 0.5
    %v3296 = vadd.f32 %v3294, 0.5
    %v3297 = vadd.f32 %v3295, 0.5
    %v3298 = vmul.f32 %v3048, 0.5
    %v3299 = vmul.f32 %v3052, 0.5
    %v3300 = vmul.f32 %v3298, 1.442695
    %v3301 = vpow.pop %v3300
    %v3302 = vmul.f32 %v3299, 1.442695
    %v3303 = vpow.pop %v3302
    %v3304 = vmul.f32 %v149, %v3301
    %v3305 = vmul.f32 %v150, %v3303
    %v3306 = vadd.f32 %v3304, %v3046
    %v3307 = vadd.f32 %v3305, %v3050
    %v3308 = vmul.f32 %v3296, %v3306
    %v3309 = vmul.f32 %v3297, %v3307
    %v3310 = vpack.c.bf16 %v3309, %v3308
    %v3311 = vld [vmem:[#allocation11] sm:$0xff]
    %v3312 = vld [vmem:[#allocation11 + $0x8] sm:$0xff]
    %v3313 = vld [vmem:[#allocation11 + $0x10] sm:$0xff]
    %v3314 = vld [vmem:[#allocation11 + $0x18] sm:$0xff]
    %v3315 = vld [vmem:[#allocation11 + $0x20] sm:$0xff]
    %v3316 = vld [vmem:[#allocation11 + $0x28] sm:$0xff]
    %v3317 = vld [vmem:[#allocation11 + $0x30] sm:$0xff]
    %v3318 = vld [vmem:[#allocation11 + $0x38] sm:$0xff]
    %v3319 = vld [vmem:[#allocation11 + $0x40] sm:$0xff]
    %v3320 = vld [vmem:[#allocation11 + $0x48] sm:$0xff]
    %v3321 = vld [vmem:[#allocation11 + $0x50] sm:$0xff]
    %v3322 = vld [vmem:[#allocation11 + $0x58] sm:$0xff]
    %v3323 = vld [vmem:[#allocation11 + $0x60] sm:$0xff]
    %v3324 = vld [vmem:[#allocation11 + $0x68] sm:$0xff]
    %v3325 = vld [vmem:[#allocation11 + $0x70] sm:$0xff]
    %v3326 = vld [vmem:[#allocation11 + $0x78] sm:$0xff]
    %v3327 = vld [vmem:[#allocation11 + $0x80] sm:$0xff]
    %v3328 = vld [vmem:[#allocation11 + $0x88] sm:$0xff]
    %v3329 = vld [vmem:[#allocation11 + $0x90] sm:$0xff]
    %v3330 = vld [vmem:[#allocation11 + $0x98] sm:$0xff]
    %v3331 = vld [vmem:[#allocation11 + $0xa0] sm:$0xff]
    %v3332 = vld [vmem:[#allocation11 + $0xa8] sm:$0xff]
    %v3333 = vld [vmem:[#allocation11 + $0xb0] sm:$0xff]
    %v3334 = vld [vmem:[#allocation11 + $0xb8] sm:$0xff]
    %v3335 = vld [vmem:[#allocation11 + $0xc0] sm:$0xff]
    %v3336 = vld [vmem:[#allocation11 + $0xc8] sm:$0xff]
    %v3337 = vld [vmem:[#allocation11 + $0xd0] sm:$0xff]
    %v3338 = vld [vmem:[#allocation11 + $0xd8] sm:$0xff]
    %v3339 = vld [vmem:[#allocation11 + $0xe0] sm:$0xff]
    %v3340 = vld [vmem:[#allocation11 + $0xe8] sm:$0xff]
    %v3341 = vld [vmem:[#allocation11 + $0xf0] sm:$0xff]
    %v3342 = vld [vmem:[#allocation11 + $0xf8] sm:$0xff]
    %v3344 = vlaneseq
    %v3345 = vshrl.u32 %v3344, 7
    %v3346 = vsub.s32 0, %v3345
    %v3347 = vrot.slane %v147, %v3346
    %v3348 = vlaneseq
    %v3349 = vshrl.u32 %v3348, 7
    %v3350 = vsub.s32 1, %v3349
    %v3351 = vrot.slane %v147, %v3350
    %v3352 = vlaneseq
    %v3353 = vshrl.u32 %v3352, 7
    %v3354 = vsub.s32 2, %v3353
    %v3355 = vrot.slane %v147, %v3354
    %v3356 = vlaneseq
    %v3357 = vshrl.u32 %v3356, 7
    %v3358 = vsub.s32 3, %v3357
    %v3359 = vrot.slane %v147, %v3358
    %v3396 = vunpack.c.l.b16 %v3311
    %v3397 = vunpack.c.h.b16 %v3311
    %v3398 = vunpack.c.l.b16 %v3312
    %v3399 = vunpack.c.h.b16 %v3312
    %v3400 = vunpack.c.l.b16 %v3313
    %v3401 = vunpack.c.h.b16 %v3313
    %v3402 = vunpack.c.l.b16 %v3314
    %v3403 = vunpack.c.h.b16 %v3314
    %v3404 = vunpack.c.l.b16 %v3315
    %v3405 = vunpack.c.h.b16 %v3315
    %v3406 = vunpack.c.l.b16 %v3316
    %v3407 = vunpack.c.h.b16 %v3316
    %v3408 = vunpack.c.l.b16 %v3317
    %v3409 = vunpack.c.h.b16 %v3317
    %v3410 = vunpack.c.l.b16 %v3318
    %v3411 = vunpack.c.h.b16 %v3318
    %v3412 = vunpack.c.l.b16 %v3319
    %v3413 = vunpack.c.h.b16 %v3319
    %v3414 = vunpack.c.l.b16 %v3320
    %v3415 = vunpack.c.h.b16 %v3320
    %v3416 = vunpack.c.l.b16 %v3321
    %v3417 = vunpack.c.h.b16 %v3321
    %v3418 = vunpack.c.l.b16 %v3322
    %v3419 = vunpack.c.h.b16 %v3322
    %v3420 = vunpack.c.l.b16 %v3323
    %v3421 = vunpack.c.h.b16 %v3323
    %v3422 = vunpack.c.l.b16 %v3324
    %v3423 = vunpack.c.h.b16 %v3324
    %v3424 = vunpack.c.l.b16 %v3325
    %v3425 = vunpack.c.h.b16 %v3325
    %v3426 = vunpack.c.l.b16 %v3326
    %v3427 = vunpack.c.h.b16 %v3326
    %v3428 = vunpack.c.l.b16 %v3327
    %v3429 = vunpack.c.h.b16 %v3327
    %v3430 = vunpack.c.l.b16 %v3328
    %v3431 = vunpack.c.h.b16 %v3328
    %v3432 = vunpack.c.l.b16 %v3329
    %v3433 = vunpack.c.h.b16 %v3329
    %v3434 = vunpack.c.l.b16 %v3330
    %v3435 = vunpack.c.h.b16 %v3330
    %v3436 = vunpack.c.l.b16 %v3331
    %v3437 = vunpack.c.h.b16 %v3331
    %v3438 = vunpack.c.l.b16 %v3332
    %v3439 = vunpack.c.h.b16 %v3332
    %v3440 = vunpack.c.l.b16 %v3333
    %v3441 = vunpack.c.h.b16 %v3333
    %v3442 = vunpack.c.l.b16 %v3334
    %v3443 = vunpack.c.h.b16 %v3334
    %v3444 = vunpack.c.l.b16 %v3335
    %v3445 = vunpack.c.h.b16 %v3335
    %v3446 = vunpack.c.l.b16 %v3336
    %v3447 = vunpack.c.h.b16 %v3336
    %v3448 = vunpack.c.l.b16 %v3337
    %v3449 = vunpack.c.h.b16 %v3337
    %v3450 = vunpack.c.l.b16 %v3338
    %v3451 = vunpack.c.h.b16 %v3338
    %v3452 = vunpack.c.l.b16 %v3339
    %v3453 = vunpack.c.h.b16 %v3339
    %v3454 = vunpack.c.l.b16 %v3340
    %v3455 = vunpack.c.h.b16 %v3340
    %v3456 = vunpack.c.l.b16 %v3341
    %v3457 = vunpack.c.h.b16 %v3341
    %v3458 = vunpack.c.l.b16 %v3342
    %v3459 = vunpack.c.h.b16 %v3342
    %v3460 = vpack.c.b16 %v3400, %v3396
    %v3461 = vpack.c.b16 %v3401, %v3397
    %v3462 = vpack.c.b16 %v3402, %v3398
    %v3463 = vpack.c.b16 %v3403, %v3399
    %v3464 = vpack.c.b16 %v3408, %v3404
    %v3465 = vpack.c.b16 %v3409, %v3405
    %v3466 = vpack.c.b16 %v3410, %v3406
    %v3467 = vpack.c.b16 %v3411, %v3407
    %v3468 = vpack.c.b16 %v3416, %v3412
    %v3469 = vpack.c.b16 %v3417, %v3413
    %v3470 = vpack.c.b16 %v3418, %v3414
    %v3471 = vpack.c.b16 %v3419, %v3415
    %v3472 = vpack.c.b16 %v3424, %v3420
    %v3473 = vpack.c.b16 %v3425, %v3421
    %v3474 = vpack.c.b16 %v3426, %v3422
    %v3475 = vpack.c.b16 %v3427, %v3423
    %v3476 = vpack.c.b16 %v3432, %v3428
    %v3477 = vpack.c.b16 %v3433, %v3429
    %v3478 = vpack.c.b16 %v3434, %v3430
    %v3479 = vpack.c.b16 %v3435, %v3431
    %v3480 = vpack.c.b16 %v3440, %v3436
    %v3481 = vpack.c.b16 %v3441, %v3437
    %v3482 = vpack.c.b16 %v3442, %v3438
    %v3483 = vpack.c.b16 %v3443, %v3439
    %v3484 = vpack.c.b16 %v3448, %v3444
    %v3485 = vpack.c.b16 %v3449, %v3445
    %v3486 = vpack.c.b16 %v3450, %v3446
    %v3487 = vpack.c.b16 %v3451, %v3447
    %v3488 = vpack.c.b16 %v3456, %v3452
    %v3489 = vpack.c.b16 %v3457, %v3453
    %v3490 = vpack.c.b16 %v3458, %v3454
    %v3491 = vpack.c.b16 %v3459, %v3455
    %3524 = vmatprep.subr.bf16.mxu0 %v3489
    %3525 = vmatpush1.bf16.msra.mxu0 %v3488
    %3526 = vmatprep.subr.bf16.mxu0 %v3485
    %3527 = vmatpush1.bf16.msra.mxu0 %v3484
    %3528 = vmatprep.subr.bf16.mxu0 %v3481
    %3529 = vmatpush1.bf16.msra.mxu0 %v3480
    %3530 = vmatprep.subr.bf16.mxu0 %v3477
    %3531 = vmatpush1.bf16.msra.mxu0 %v3476
    %3532 = vmatprep.subr.bf16.mxu0 %v3473
    %3533 = vmatpush1.bf16.msra.mxu0 %v3472
    %3534 = vmatprep.subr.bf16.mxu0 %v3469
    %3535 = vmatpush1.bf16.msra.mxu0 %v3468
    %3536 = vmatprep.subr.bf16.mxu0 %v3465
    %3537 = vmatpush1.bf16.msra.mxu0 %v3464
    %3538 = vmatprep.subr.bf16.mxu0 %v3461
    %3539 = vmatpush1.bf16.msra.mxu0 %v3460
    %3540 = vmatprep.subr.bf16.mxu0 0
    %3541 = vmatpush2.bf16.msra.mxu0 0
    %3542 = vmatprep.subr.bf16.mxu0 0
    %3543 = vmatpush2.bf16.msra.mxu0 0
    %3544 = vmatprep.subr.bf16.mxu0 0
    %3545 = vmatpush2.bf16.msra.mxu0 0
    %3546 = vmatprep.subr.bf16.mxu0 0
    %3547 = vmatpush2.bf16.msra.mxu0 0
    %3548 = vmatprep.subr.bf16.mxu0 0
    %3549 = vmatpush2.bf16.msra.mxu0 0
    %3550 = vmatprep.subr.bf16.mxu0 0
    %3551 = vmatpush2.bf16.msra.mxu0 0
    %3552 = vmatprep.subr.bf16.mxu0 0
    %3553 = vmatpush2.bf16.msra.mxu0 0
    %3554 = vmatprep.subr.bf16.mxu0 0
    %3555 = vmatpush2.bf16.msra.mxu0 0
    %3556 = vmatprep.mubr.bf16.mxu0 0
    %3557 = vmatmul.mubr.bf16.gmra.mxu0 %v3310
    %v3558 = vpop.f32.mrf.mxu0
    %v3559 = vadd.f32 %v3347, %v3558
    %v3560 = vpop.f32.mrf.mxu0
    %v3561 = vadd.f32 %v3351, %v3560
    %v3562 = vpop.f32.mrf.mxu0
    %v3563 = vadd.f32 %v3347, %v3562
    %v3564 = vpop.f32.mrf.mxu0
    %v3565 = vadd.f32 %v3351, %v3564
    %3566 = vdwg.mxu0
    %3567 = vmatprep.subr.bf16.mxu0 %v3491
    %3568 = vmatpush1.bf16.msra.mxu0 %v3490
    %3569 = vmatprep.subr.bf16.mxu0 %v3487
    %3570 = vmatpush1.bf16.msra.mxu0 %v3486
    %3571 = vmatprep.subr.bf16.mxu0 %v3483
    %3572 = vmatpush1.bf16.msra.mxu0 %v3482
    %3573 = vmatprep.subr.bf16.mxu0 %v3479
    %3574 = vmatpush1.bf16.msra.mxu0 %v3478
    %3575 = vmatprep.subr.bf16.mxu0 %v3475
    %3576 = vmatpush1.bf16.msra.mxu0 %v3474
    %3577 = vmatprep.subr.bf16.mxu0 %v3471
    %3578 = vmatpush1.bf16.msra.mxu0 %v3470
    %3579 = vmatprep.subr.bf16.mxu0 %v3467
    %3580 = vmatpush1.bf16.msra.mxu0 %v3466
    %3581 = vmatprep.subr.bf16.mxu0 %v3463
    %3582 = vmatpush1.bf16.msra.mxu0 %v3462
    %3583 = vmatprep.subr.bf16.mxu0 0
    %3584 = vmatpush2.bf16.msra.mxu0 0
    %3585 = vmatprep.subr.bf16.mxu0 0
    %3586 = vmatpush2.bf16.msra.mxu0 0
    %3587 = vmatprep.subr.bf16.mxu0 0
    %3588 = vmatpush2.bf16.msra.mxu0 0
    %3589 = vmatprep.subr.bf16.mxu0 0
    %3590 = vmatpush2.bf16.msra.mxu0 0
    %3591 = vmatprep.subr.bf16.mxu0 0
    %3592 = vmatpush2.bf16.msra.mxu0 0
    %3593 = vmatprep.subr.bf16.mxu0 0
    %3594 = vmatpush2.bf16.msra.mxu0 0
    %3595 = vmatprep.subr.bf16.mxu0 0
    %3596 = vmatpush2.bf16.msra.mxu0 0
    %3597 = vmatprep.subr.bf16.mxu0 0
    %3598 = vmatpush2.bf16.msra.mxu0 0
    %3599 = vmatprep.mubr.bf16.mxu0 0
    %3600 = vmatmul.mubr.bf16.gmra.mxu0 %v3310
    %v3601 = vpop.f32.mrf.mxu0
    %v3602 = vadd.f32 %v3355, %v3601
    %v3603 = vpop.f32.mrf.mxu0
    %v3604 = vadd.f32 %v3359, %v3603
    %v3605 = vpop.f32.mrf.mxu0
    %v3606 = vadd.f32 %v3355, %v3605
    %v3607 = vpop.f32.mrf.mxu0
    %v3608 = vadd.f32 %v3359, %v3607
    %3609 = vdwg.mxu0
    %v3610 = vmax.f32 %v3559, 0.0
    %v3611 = vmax.f32 %v3561, 0.0
    %v3612 = vmax.f32 %v3602, 0.0
    %v3613 = vmax.f32 %v3604, 0.0
    %v3614 = vmax.f32 %v3563, 0.0
    %v3615 = vmax.f32 %v3565, 0.0
    %v3616 = vmax.f32 %v3606, 0.0
    %v3617 = vmax.f32 %v3608, 0.0
    %v3618 = vpack.c.bf16 %v3614, %v3610
    %v3619 = vpack.c.bf16 %v3615, %v3611
    %v3620 = vpack.c.bf16 %v3616, %v3612
    %v3621 = vpack.c.bf16 %v3617, %v3613
    %v3622 = vld [vmem:[#allocation14] sm:$0xff]
    %v3623 = vld [vmem:[#allocation14 + $0x8] sm:$0xff]
    %v3624 = vld [vmem:[#allocation14 + $0x10] sm:$0xff]
    %v3625 = vld [vmem:[#allocation14 + $0x18] sm:$0xf]
    %v3626 = vld [vmem:[#allocation14 + $0x1c] sm:$0xff]
    %v3627 = vld [vmem:[#allocation14 + $0x24] sm:$0xff]
    %v3628 = vld [vmem:[#allocation14 + $0x2c] sm:$0xff]
    %v3629 = vld [vmem:[#allocation14 + $0x34] sm:$0xf]
    %v3630 = vld [vmem:[#allocation14 + $0x38] sm:$0xff]
    %v3631 = vld [vmem:[#allocation14 + $0x40] sm:$0xff]
    %v3632 = vld [vmem:[#allocation14 + $0x48] sm:$0xff]
    %v3633 = vld [vmem:[#allocation14 + $0x50] sm:$0xf]
    %v3634 = vld [vmem:[#allocation14 + $0x54] sm:$0xff]
    %v3635 = vld [vmem:[#allocation14 + $0x5c] sm:$0xff]
    %v3636 = vld [vmem:[#allocation14 + $0x64] sm:$0xff]
    %v3637 = vld [vmem:[#allocation14 + $0x6c] sm:$0xf]
    %v3638 = vld [vmem:[#allocation14 + $0x70] sm:$0xff]
    %v3639 = vld [vmem:[#allocation14 + $0x78] sm:$0xff]
    %v3640 = vld [vmem:[#allocation14 + $0x80] sm:$0xff]
    %v3641 = vld [vmem:[#allocation14 + $0x88] sm:$0xf]
    %v3642 = vld [vmem:[#allocation14 + $0x8c] sm:$0xff]
    %v3643 = vld [vmem:[#allocation14 + $0x94] sm:$0xff]
    %v3644 = vld [vmem:[#allocation14 + $0x9c] sm:$0xff]
    %v3645 = vld [vmem:[#allocation14 + $0xa4] sm:$0xf]
    %v3646 = vld [vmem:[#allocation14 + $0xa8] sm:$0xff]
    %v3647 = vld [vmem:[#allocation14 + $0xb0] sm:$0xff]
    %v3648 = vld [vmem:[#allocation14 + $0xb8] sm:$0xff]
    %v3649 = vld [vmem:[#allocation14 + $0xc0] sm:$0xf]
    %v3650 = vld [vmem:[#allocation14 + $0xc4] sm:$0xff]
    %v3651 = vld [vmem:[#allocation14 + $0xcc] sm:$0xff]
    %v3652 = vld [vmem:[#allocation14 + $0xd4] sm:$0xff]
    %v3653 = vld [vmem:[#allocation14 + $0xdc] sm:$0xf]
    %v3654 = vld [vmem:[#allocation14 + $0xe0] sm:$0xff]
    %v3655 = vld [vmem:[#allocation14 + $0xe8] sm:$0xff]
    %v3656 = vld [vmem:[#allocation14 + $0xf0] sm:$0xff]
    %v3657 = vld [vmem:[#allocation14 + $0xf8] sm:$0xf]
    %v3658 = vld [vmem:[#allocation14 + $0xfc] sm:$0xff]
    %v3659 = vld [vmem:[#allocation14 + $0x104] sm:$0xff]
    %v3660 = vld [vmem:[#allocation14 + $0x10c] sm:$0xff]
    %v3661 = vld [vmem:[#allocation14 + $0x114] sm:$0xf]
    %v3662 = vld [vmem:[#allocation14 + $0x118] sm:$0xff]
    %v3663 = vld [vmem:[#allocation14 + $0x120] sm:$0xff]
    %v3664 = vld [vmem:[#allocation14 + $0x128] sm:$0xff]
    %v3665 = vld [vmem:[#allocation14 + $0x130] sm:$0xf]
    %v3666 = vld [vmem:[#allocation14 + $0x134] sm:$0xff]
    %v3667 = vld [vmem:[#allocation14 + $0x13c] sm:$0xff]
    %v3668 = vld [vmem:[#allocation14 + $0x144] sm:$0xff]
    %v3669 = vld [vmem:[#allocation14 + $0x14c] sm:$0xf]
    %v3670 = vld [vmem:[#allocation14 + $0x150] sm:$0xff]
    %v3671 = vld [vmem:[#allocation14 + $0x158] sm:$0xff]
    %v3672 = vld [vmem:[#allocation14 + $0x160] sm:$0xff]
    %v3673 = vld [vmem:[#allocation14 + $0x168] sm:$0xf]
    %v3674 = vld [vmem:[#allocation14 + $0x16c] sm:$0xff]
    %v3675 = vld [vmem:[#allocation14 + $0x174] sm:$0xff]
    %v3676 = vld [vmem:[#allocation14 + $0x17c] sm:$0xff]
    %v3677 = vld [vmem:[#allocation14 + $0x184] sm:$0xf]
    %v3678 = vld [vmem:[#allocation14 + $0x188] sm:$0xff]
    %v3679 = vld [vmem:[#allocation14 + $0x190] sm:$0xff]
    %v3680 = vld [vmem:[#allocation14 + $0x198] sm:$0xff]
    %v3681 = vld [vmem:[#allocation14 + $0x1a0] sm:$0xf]
    %v3682 = vld [vmem:[#allocation14 + $0x1a4] sm:$0xff]
    %v3683 = vld [vmem:[#allocation14 + $0x1ac] sm:$0xff]
    %v3684 = vld [vmem:[#allocation14 + $0x1b4] sm:$0xff]
    %v3685 = vld [vmem:[#allocation14 + $0x1bc] sm:$0xf]
    %v3686 = vld [vmem:[#allocation14 + $0x1c0] sm:$0xff]
    %v3687 = vld [vmem:[#allocation14 + $0x1c8] sm:$0xff]
    %v3688 = vld [vmem:[#allocation14 + $0x1d0] sm:$0xff]
    %v3689 = vld [vmem:[#allocation14 + $0x1d8] sm:$0xf]
    %v3690 = vld [vmem:[#allocation14 + $0x1dc] sm:$0xff]
    %v3691 = vld [vmem:[#allocation14 + $0x1e4] sm:$0xff]
    %v3692 = vld [vmem:[#allocation14 + $0x1ec] sm:$0xff]
    %v3693 = vld [vmem:[#allocation14 + $0x1f4] sm:$0xf]
    %v3694 = vld [vmem:[#allocation14 + $0x1f8] sm:$0xff]
    %v3695 = vld [vmem:[#allocation14 + $0x200] sm:$0xff]
    %v3696 = vld [vmem:[#allocation14 + $0x208] sm:$0xff]
    %v3697 = vld [vmem:[#allocation14 + $0x210] sm:$0xf]
    %v3698 = vld [vmem:[#allocation14 + $0x214] sm:$0xff]
    %v3699 = vld [vmem:[#allocation14 + $0x21c] sm:$0xff]
    %v3700 = vld [vmem:[#allocation14 + $0x224] sm:$0xff]
    %v3701 = vld [vmem:[#allocation14 + $0x22c] sm:$0xf]
    %v3702 = vld [vmem:[#allocation14 + $0x230] sm:$0xff]
    %v3703 = vld [vmem:[#allocation14 + $0x238] sm:$0xff]
    %v3704 = vld [vmem:[#allocation14 + $0x240] sm:$0xff]
    %v3705 = vld [vmem:[#allocation14 + $0x248] sm:$0xf]
    %v3706 = vld [vmem:[#allocation14 + $0x24c] sm:$0xff]
    %v3707 = vld [vmem:[#allocation14 + $0x254] sm:$0xff]
    %v3708 = vld [vmem:[#allocation14 + $0x25c] sm:$0xff]
    %v3709 = vld [vmem:[#allocation14 + $0x264] sm:$0xf]
    %v3710 = vld [vmem:[#allocation14 + $0x268] sm:$0xff]
    %v3711 = vld [vmem:[#allocation14 + $0x270] sm:$0xff]
    %v3712 = vld [vmem:[#allocation14 + $0x278] sm:$0xff]
    %v3713 = vld [vmem:[#allocation14 + $0x280] sm:$0xf]
    %v3714 = vld [vmem:[#allocation14 + $0x284] sm:$0xff]
    %v3715 = vld [vmem:[#allocation14 + $0x28c] sm:$0xff]
    %v3716 = vld [vmem:[#allocation14 + $0x294] sm:$0xff]
    %v3717 = vld [vmem:[#allocation14 + $0x29c] sm:$0xf]
    %v3718 = vld [vmem:[#allocation14 + $0x2a0] sm:$0xff]
    %v3719 = vld [vmem:[#allocation14 + $0x2a8] sm:$0xff]
    %v3720 = vld [vmem:[#allocation14 + $0x2b0] sm:$0xff]
    %v3721 = vld [vmem:[#allocation14 + $0x2b8] sm:$0xf]
    %v3722 = vld [vmem:[#allocation14 + $0x2bc] sm:$0xff]
    %v3723 = vld [vmem:[#allocation14 + $0x2c4] sm:$0xff]
    %v3724 = vld [vmem:[#allocation14 + $0x2cc] sm:$0xff]
    %v3725 = vld [vmem:[#allocation14 + $0x2d4] sm:$0xf]
    %v3726 = vld [vmem:[#allocation14 + $0x2d8] sm:$0xff]
    %v3727 = vld [vmem:[#allocation14 + $0x2e0] sm:$0xff]
    %v3728 = vld [vmem:[#allocation14 + $0x2e8] sm:$0xff]
    %v3729 = vld [vmem:[#allocation14 + $0x2f0] sm:$0xf]
    %v3730 = vld [vmem:[#allocation14 + $0x2f4] sm:$0xff]
    %v3731 = vld [vmem:[#allocation14 + $0x2fc] sm:$0xff]
    %v3732 = vld [vmem:[#allocation14 + $0x304] sm:$0xff]
    %v3733 = vld [vmem:[#allocation14 + $0x30c] sm:$0xf]
    %v3734 = vld [vmem:[#allocation14 + $0x310] sm:$0xff]
    %v3735 = vld [vmem:[#allocation14 + $0x318] sm:$0xff]
    %v3736 = vld [vmem:[#allocation14 + $0x320] sm:$0xff]
    %v3737 = vld [vmem:[#allocation14 + $0x328] sm:$0xf]
    %v3738 = vld [vmem:[#allocation14 + $0x32c] sm:$0xff]
    %v3739 = vld [vmem:[#allocation14 + $0x334] sm:$0xff]
    %v3740 = vld [vmem:[#allocation14 + $0x33c] sm:$0xff]
    %v3741 = vld [vmem:[#allocation14 + $0x344] sm:$0xf]
    %v3742 = vld [vmem:[#allocation14 + $0x348] sm:$0xff]
    %v3743 = vld [vmem:[#allocation14 + $0x350] sm:$0xff]
    %v3744 = vld [vmem:[#allocation14 + $0x358] sm:$0xff]
    %v3745 = vld [vmem:[#allocation14 + $0x360] sm:$0xf]
    %v3746 = vld [vmem:[#allocation14 + $0x364] sm:$0xff]
    %v3747 = vld [vmem:[#allocation14 + $0x36c] sm:$0xff]
    %v3748 = vld [vmem:[#allocation14 + $0x374] sm:$0xff]
    %v3749 = vld [vmem:[#allocation14 + $0x37c] sm:$0xf]
    %v3750 = vld [vmem:[#allocation14 + $0x380] sm:$0xff]
    %v3751 = vld [vmem:[#allocation14 + $0x388] sm:$0xff]
    %v3752 = vld [vmem:[#allocation14 + $0x390] sm:$0xff]
    %v3753 = vld [vmem:[#allocation14 + $0x398] sm:$0xf]
    %v3754 = vld [vmem:[#allocation14 + $0x39c] sm:$0xff]
    %v3755 = vld [vmem:[#allocation14 + $0x3a4] sm:$0xff]
    %v3756 = vld [vmem:[#allocation14 + $0x3ac] sm:$0xff]
    %v3757 = vld [vmem:[#allocation14 + $0x3b4] sm:$0xf]
    %v3758 = vld [vmem:[#allocation14 + $0x3b8] sm:$0xff]
    %v3759 = vld [vmem:[#allocation14 + $0x3c0] sm:$0xff]
    %v3760 = vld [vmem:[#allocation14 + $0x3c8] sm:$0xff]
    %v3761 = vld [vmem:[#allocation14 + $0x3d0] sm:$0xf]
    %v3762 = vld [vmem:[#allocation14 + $0x3d4] sm:$0xff]
    %v3763 = vld [vmem:[#allocation14 + $0x3dc] sm:$0xff]
    %v3764 = vld [vmem:[#allocation14 + $0x3e4] sm:$0xff]
    %v3765 = vld [vmem:[#allocation14 + $0x3ec] sm:$0xf]
    %v3766 = vld [vmem:[#allocation14 + $0x3f0] sm:$0xff]
    %v3767 = vld [vmem:[#allocation14 + $0x3f8] sm:$0xff]
    %v3768 = vld [vmem:[#allocation14 + $0x400] sm:$0xff]
    %v3769 = vld [vmem:[#allocation14 + $0x408] sm:$0xf]
    %v3770 = vld [vmem:[#allocation14 + $0x40c] sm:$0xff]
    %v3771 = vld [vmem:[#allocation14 + $0x414] sm:$0xff]
    %v3772 = vld [vmem:[#allocation14 + $0x41c] sm:$0xff]
    %v3773 = vld [vmem:[#allocation14 + $0x424] sm:$0xf]
    %v3774 = vld [vmem:[#allocation14 + $0x428] sm:$0xff]
    %v3775 = vld [vmem:[#allocation14 + $0x430] sm:$0xff]
    %v3776 = vld [vmem:[#allocation14 + $0x438] sm:$0xff]
    %v3777 = vld [vmem:[#allocation14 + $0x440] sm:$0xf]
    %v3778 = vld [vmem:[#allocation14 + $0x444] sm:$0xff]
    %v3779 = vld [vmem:[#allocation14 + $0x44c] sm:$0xff]
    %v3780 = vld [vmem:[#allocation14 + $0x454] sm:$0xff]
    %v3781 = vld [vmem:[#allocation14 + $0x45c] sm:$0xf]
    %v3782 = vld [vmem:[#allocation14 + $0x460] sm:$0xff]
    %v3783 = vld [vmem:[#allocation14 + $0x468] sm:$0xff]
    %v3784 = vld [vmem:[#allocation14 + $0x470] sm:$0xff]
    %v3785 = vld [vmem:[#allocation14 + $0x478] sm:$0xf]
    %v3786 = vld [vmem:[#allocation14 + $0x47c] sm:$0xff]
    %v3787 = vld [vmem:[#allocation14 + $0x484] sm:$0xff]
    %v3788 = vld [vmem:[#allocation14 + $0x48c] sm:$0xff]
    %v3789 = vld [vmem:[#allocation14 + $0x494] sm:$0xf]
    %v3790 = vld [vmem:[#allocation14 + $0x498] sm:$0xff]
    %v3791 = vld [vmem:[#allocation14 + $0x4a0] sm:$0xff]
    %v3792 = vld [vmem:[#allocation14 + $0x4a8] sm:$0xff]
    %v3793 = vld [vmem:[#allocation14 + $0x4b0] sm:$0xf]
    %v3794 = vld [vmem:[#allocation14 + $0x4b4] sm:$0xff]
    %v3795 = vld [vmem:[#allocation14 + $0x4bc] sm:$0xff]
    %v3796 = vld [vmem:[#allocation14 + $0x4c4] sm:$0xff]
    %v3797 = vld [vmem:[#allocation14 + $0x4cc] sm:$0xf]
    %v3798 = vld [vmem:[#allocation14 + $0x4d0] sm:$0xff]
    %v3799 = vld [vmem:[#allocation14 + $0x4d8] sm:$0xff]
    %v3800 = vld [vmem:[#allocation14 + $0x4e0] sm:$0xff]
    %v3801 = vld [vmem:[#allocation14 + $0x4e8] sm:$0xf]
    %v3802 = vld [vmem:[#allocation14 + $0x4ec] sm:$0xff]
    %v3803 = vld [vmem:[#allocation14 + $0x4f4] sm:$0xff]
    %v3804 = vld [vmem:[#allocation14 + $0x4fc] sm:$0xff]
    %v3805 = vld [vmem:[#allocation14 + $0x504] sm:$0xf]
    %v3806 = vld [vmem:[#allocation14 + $0x508] sm:$0xff]
    %v3807 = vld [vmem:[#allocation14 + $0x510] sm:$0xff]
    %v3808 = vld [vmem:[#allocation14 + $0x518] sm:$0xff]
    %v3809 = vld [vmem:[#allocation14 + $0x520] sm:$0xf]
    %v3810 = vld [vmem:[#allocation14 + $0x524] sm:$0xff]
    %v3811 = vld [vmem:[#allocation14 + $0x52c] sm:$0xff]
    %v3812 = vld [vmem:[#allocation14 + $0x534] sm:$0xff]
    %v3813 = vld [vmem:[#allocation14 + $0x53c] sm:$0xf]
    %v3814 = vld [vmem:[#allocation14 + $0x540] sm:$0xff]
    %v3815 = vld [vmem:[#allocation14 + $0x548] sm:$0xff]
    %v3816 = vld [vmem:[#allocation14 + $0x550] sm:$0xff]
    %v3817 = vld [vmem:[#allocation14 + $0x558] sm:$0xf]
    %v3818 = vld [vmem:[#allocation14 + $0x55c] sm:$0xff]
    %v3819 = vld [vmem:[#allocation14 + $0x564] sm:$0xff]
    %v3820 = vld [vmem:[#allocation14 + $0x56c] sm:$0xff]
    %v3821 = vld [vmem:[#allocation14 + $0x574] sm:$0xf]
    %v3822 = vld [vmem:[#allocation14 + $0x578] sm:$0xff]
    %v3823 = vld [vmem:[#allocation14 + $0x580] sm:$0xff]
    %v3824 = vld [vmem:[#allocation14 + $0x588] sm:$0xff]
    %v3825 = vld [vmem:[#allocation14 + $0x590] sm:$0xf]
    %v3826 = vld [vmem:[#allocation14 + $0x594] sm:$0xff]
    %v3827 = vld [vmem:[#allocation14 + $0x59c] sm:$0xff]
    %v3828 = vld [vmem:[#allocation14 + $0x5a4] sm:$0xff]
    %v3829 = vld [vmem:[#allocation14 + $0x5ac] sm:$0xf]
    %v3830 = vld [vmem:[#allocation14 + $0x5b0] sm:$0xff]
    %v3831 = vld [vmem:[#allocation14 + $0x5b8] sm:$0xff]
    %v3832 = vld [vmem:[#allocation14 + $0x5c0] sm:$0xff]
    %v3833 = vld [vmem:[#allocation14 + $0x5c8] sm:$0xf]
    %v3834 = vld [vmem:[#allocation14 + $0x5cc] sm:$0xff]
    %v3835 = vld [vmem:[#allocation14 + $0x5d4] sm:$0xff]
    %v3836 = vld [vmem:[#allocation14 + $0x5dc] sm:$0xff]
    %v3837 = vld [vmem:[#allocation14 + $0x5e4] sm:$0xf]
    %v3838 = vld [vmem:[#allocation14 + $0x5e8] sm:$0xff]
    %v3839 = vld [vmem:[#allocation14 + $0x5f0] sm:$0xff]
    %v3840 = vld [vmem:[#allocation14 + $0x5f8] sm:$0xff]
    %v3841 = vld [vmem:[#allocation14 + $0x600] sm:$0xf]
    %v3842 = vld [vmem:[#allocation14 + $0x604] sm:$0xff]
    %v3843 = vld [vmem:[#allocation14 + $0x60c] sm:$0xff]
    %v3844 = vld [vmem:[#allocation14 + $0x614] sm:$0xff]
    %v3845 = vld [vmem:[#allocation14 + $0x61c] sm:$0xf]
    %v3846 = vld [vmem:[#allocation14 + $0x620] sm:$0xff]
    %v3847 = vld [vmem:[#allocation14 + $0x628] sm:$0xff]
    %v3848 = vld [vmem:[#allocation14 + $0x630] sm:$0xff]
    %v3849 = vld [vmem:[#allocation14 + $0x638] sm:$0xf]
    %v3850 = vld [vmem:[#allocation14 + $0x63c] sm:$0xff]
    %v3851 = vld [vmem:[#allocation14 + $0x644] sm:$0xff]
    %v3852 = vld [vmem:[#allocation14 + $0x64c] sm:$0xff]
    %v3853 = vld [vmem:[#allocation14 + $0x654] sm:$0xf]
    %v3854 = vld [vmem:[#allocation14 + $0x658] sm:$0xff]
    %v3855 = vld [vmem:[#allocation14 + $0x660] sm:$0xff]
    %v3856 = vld [vmem:[#allocation14 + $0x668] sm:$0xff]
    %v3857 = vld [vmem:[#allocation14 + $0x670] sm:$0xf]
    %v3858 = vld [vmem:[#allocation14 + $0x674] sm:$0xff]
    %v3859 = vld [vmem:[#allocation14 + $0x67c] sm:$0xff]
    %v3860 = vld [vmem:[#allocation14 + $0x684] sm:$0xff]
    %v3861 = vld [vmem:[#allocation14 + $0x68c] sm:$0xf]
    %v3862 = vld [vmem:[#allocation14 + $0x690] sm:$0xff]
    %v3863 = vld [vmem:[#allocation14 + $0x698] sm:$0xff]
    %v3864 = vld [vmem:[#allocation14 + $0x6a0] sm:$0xff]
    %v3865 = vld [vmem:[#allocation14 + $0x6a8] sm:$0xf]
    %v3866 = vld [vmem:[#allocation14 + $0x6ac] sm:$0xff]
    %v3867 = vld [vmem:[#allocation14 + $0x6b4] sm:$0xff]
    %v3868 = vld [vmem:[#allocation14 + $0x6bc] sm:$0xff]
    %v3869 = vld [vmem:[#allocation14 + $0x6c4] sm:$0xf]
    %v3870 = vld [vmem:[#allocation14 + $0x6c8] sm:$0xff]
    %v3871 = vld [vmem:[#allocation14 + $0x6d0] sm:$0xff]
    %v3872 = vld [vmem:[#allocation14 + $0x6d8] sm:$0xff]
    %v3873 = vld [vmem:[#allocation14 + $0x6e0] sm:$0xf]
    %v3874 = vld [vmem:[#allocation14 + $0x6e4] sm:$0xff]
    %v3875 = vld [vmem:[#allocation14 + $0x6ec] sm:$0xff]
    %v3876 = vld [vmem:[#allocation14 + $0x6f4] sm:$0xff]
    %v3877 = vld [vmem:[#allocation14 + $0x6fc] sm:$0xf]
    %v3879 = vlaneseq
    %v3880 = vshrl.u32 %v3879, 7
    %v3881 = vsub.s32 0, %v3880
    %v3882 = vrot.slane %v148, %v3881
    %v3883 = vlaneseq
    %v3884 = vshrl.u32 %v3883, 7
    %v3885 = vsub.s32 1, %v3884
    %v3886 = vrot.slane %v148, %v3885
    %v3887 = vlaneseq
    %v3888 = vshrl.u32 %v3887, 7
    %v3889 = vsub.s32 2, %v3888
    %v3890 = vrot.slane %v148, %v3889
    %v3891 = vlaneseq
    %v3892 = vshrl.u32 %v3891, 7
    %v3893 = vsub.s32 3, %v3892
    %v3894 = vrot.slane %v148, %v3893
    %v3895 = vlaneseq
    %v3896 = vshrl.u32 %v3895, 7
    %v3897 = vsub.s32 4, %v3896
    %v3898 = vrot.slane %v148, %v3897
    %v3899 = vlaneseq
    %v3900 = vshrl.u32 %v3899, 7
    %v3901 = vsub.s32 5, %v3900
    %v3902 = vrot.slane %v148, %v3901
    %v3903 = vlaneseq
    %v3904 = vshrl.u32 %v3903, 7
    %v3905 = vsub.s32 6, %v3904
    %v3906 = vrot.slane %v148, %v3905
    %v4170 = vunpack.c.l.b16 %v3622
    %v4171 = vunpack.c.h.b16 %v3622
    %v4172 = vunpack.c.l.b16 %v3623
    %v4173 = vunpack.c.h.b16 %v3623
    %v4174 = vunpack.c.l.b16 %v3624
    %v4175 = vunpack.c.h.b16 %v3624
    %v4176 = vunpack.c.l.b16 %v3625
    %v4177 = vunpack.c.l.b16 %v3626
    %v4178 = vunpack.c.h.b16 %v3626
    %v4179 = vunpack.c.l.b16 %v3627
    %v4180 = vunpack.c.h.b16 %v3627
    %v4181 = vunpack.c.l.b16 %v3628
    %v4182 = vunpack.c.h.b16 %v3628
    %v4183 = vunpack.c.l.b16 %v3629
    %v4184 = vunpack.c.l.b16 %v3630
    %v4185 = vunpack.c.h.b16 %v3630
    %v4186 = vunpack.c.l.b16 %v3631
    %v4187 = vunpack.c.h.b16 %v3631
    %v4188 = vunpack.c.l.b16 %v3632
    %v4189 = vunpack.c.h.b16 %v3632
    %v4190 = vunpack.c.l.b16 %v3633
    %v4191 = vunpack.c.l.b16 %v3634
    %v4192 = vunpack.c.h.b16 %v3634
    %v4193 = vunpack.c.l.b16 %v3635
    %v4194 = vunpack.c.h.b16 %v3635
    %v4195 = vunpack.c.l.b16 %v3636
    %v4196 = vunpack.c.h.b16 %v3636
    %v4197 = vunpack.c.l.b16 %v3637
    %v4198 = vunpack.c.l.b16 %v3638
    %v4199 = vunpack.c.h.b16 %v3638
    %v4200 = vunpack.c.l.b16 %v3639
    %v4201 = vunpack.c.h.b16 %v3639
    %v4202 = vunpack.c.l.b16 %v3640
    %v4203 = vunpack.c.h.b16 %v3640
    %v4204 = vunpack.c.l.b16 %v3641
    %v4205 = vunpack.c.l.b16 %v3642
    %v4206 = vunpack.c.h.b16 %v3642
    %v4207 = vunpack.c.l.b16 %v3643
    %v4208 = vunpack.c.h.b16 %v3643
    %v4209 = vunpack.c.l.b16 %v3644
    %v4210 = vunpack.c.h.b16 %v3644
    %v4211 = vunpack.c.l.b16 %v3645
    %v4212 = vunpack.c.l.b16 %v3646
    %v4213 = vunpack.c.h.b16 %v3646
    %v4214 = vunpack.c.l.b16 %v3647
    %v4215 = vunpack.c.h.b16 %v3647
    %v4216 = vunpack.c.l.b16 %v3648
    %v4217 = vunpack.c.h.b16 %v3648
    %v4218 = vunpack.c.l.b16 %v3649
    %v4219 = vunpack.c.l.b16 %v3650
    %v4220 = vunpack.c.h.b16 %v3650
    %v4221 = vunpack.c.l.b16 %v3651
    %v4222 = vunpack.c.h.b16 %v3651
    %v4223 = vunpack.c.l.b16 %v3652
    %v4224 = vunpack.c.h.b16 %v3652
    %v4225 = vunpack.c.l.b16 %v3653
    %v4226 = vunpack.c.l.b16 %v3654
    %v4227 = vunpack.c.h.b16 %v3654
    %v4228 = vunpack.c.l.b16 %v3655
    %v4229 = vunpack.c.h.b16 %v3655
    %v4230 = vunpack.c.l.b16 %v3656
    %v4231 = vunpack.c.h.b16 %v3656
    %v4232 = vunpack.c.l.b16 %v3657
    %v4233 = vunpack.c.l.b16 %v3658
    %v4234 = vunpack.c.h.b16 %v3658
    %v4235 = vunpack.c.l.b16 %v3659
    %v4236 = vunpack.c.h.b16 %v3659
    %v4237 = vunpack.c.l.b16 %v3660
    %v4238 = vunpack.c.h.b16 %v3660
    %v4239 = vunpack.c.l.b16 %v3661
    %v4240 = vunpack.c.l.b16 %v3662
    %v4241 = vunpack.c.h.b16 %v3662
    %v4242 = vunpack.c.l.b16 %v3663
    %v4243 = vunpack.c.h.b16 %v3663
    %v4244 = vunpack.c.l.b16 %v3664
    %v4245 = vunpack.c.h.b16 %v3664
    %v4246 = vunpack.c.l.b16 %v3665
    %v4247 = vunpack.c.l.b16 %v3666
    %v4248 = vunpack.c.h.b16 %v3666
    %v4249 = vunpack.c.l.b16 %v3667
    %v4250 = vunpack.c.h.b16 %v3667
    %v4251 = vunpack.c.l.b16 %v3668
    %v4252 = vunpack.c.h.b16 %v3668
    %v4253 = vunpack.c.l.b16 %v3669
    %v4254 = vunpack.c.l.b16 %v3670
    %v4255 = vunpack.c.h.b16 %v3670
    %v4256 = vunpack.c.l.b16 %v3671
    %v4257 = vunpack.c.h.b16 %v3671
    %v4258 = vunpack.c.l.b16 %v3672
    %v4259 = vunpack.c.h.b16 %v3672
    %v4260 = vunpack.c.l.b16 %v3673
    %v4261 = vunpack.c.l.b16 %v3674
    %v4262 = vunpack.c.h.b16 %v3674
    %v4263 = vunpack.c.l.b16 %v3675
    %v4264 = vunpack.c.h.b16 %v3675
    %v4265 = vunpack.c.l.b16 %v3676
    %v4266 = vunpack.c.h.b16 %v3676
    %v4267 = vunpack.c.l.b16 %v3677
    %v4268 = vunpack.c.l.b16 %v3678
    %v4269 = vunpack.c.h.b16 %v3678
    %v4270 = vunpack.c.l.b16 %v3679
    %v4271 = vunpack.c.h.b16 %v3679
    %v4272 = vunpack.c.l.b16 %v3680
    %v4273 = vunpack.c.h.b16 %v3680
    %v4274 = vunpack.c.l.b16 %v3681
    %v4275 = vunpack.c.l.b16 %v3682
    %v4276 = vunpack.c.h.b16 %v3682
    %v4277 = vunpack.c.l.b16 %v3683
    %v4278 = vunpack.c.h.b16 %v3683
    %v4279 = vunpack.c.l.b16 %v3684
    %v4280 = vunpack.c.h.b16 %v3684
    %v4281 = vunpack.c.l.b16 %v3685
    %v4282 = vunpack.c.l.b16 %v3686
    %v4283 = vunpack.c.h.b16 %v3686
    %v4284 = vunpack.c.l.b16 %v3687
    %v4285 = vunpack.c.h.b16 %v3687
    %v4286 = vunpack.c.l.b16 %v3688
    %v4287 = vunpack.c.h.b16 %v3688
    %v4288 = vunpack.c.l.b16 %v3689
    %v4289 = vunpack.c.l.b16 %v3690
    %v4290 = vunpack.c.h.b16 %v3690
    %v4291 = vunpack.c.l.b16 %v3691
    %v4292 = vunpack.c.h.b16 %v3691
    %v4293 = vunpack.c.l.b16 %v3692
    %v4294 = vunpack.c.h.b16 %v3692
    %v4295 = vunpack.c.l.b16 %v3693
    %v4296 = vunpack.c.l.b16 %v3694
    %v4297 = vunpack.c.h.b16 %v3694
    %v4298 = vunpack.c.l.b16 %v3695
    %v4299 = vunpack.c.h.b16 %v3695
    %v4300 = vunpack.c.l.b16 %v3696
    %v4301 = vunpack.c.h.b16 %v3696
    %v4302 = vunpack.c.l.b16 %v3697
    %v4303 = vunpack.c.l.b16 %v3698
    %v4304 = vunpack.c.h.b16 %v3698
    %v4305 = vunpack.c.l.b16 %v3699
    %v4306 = vunpack.c.h.b16 %v3699
    %v4307 = vunpack.c.l.b16 %v3700
    %v4308 = vunpack.c.h.b16 %v3700
    %v4309 = vunpack.c.l.b16 %v3701
    %v4310 = vunpack.c.l.b16 %v3702
    %v4311 = vunpack.c.h.b16 %v3702
    %v4312 = vunpack.c.l.b16 %v3703
    %v4313 = vunpack.c.h.b16 %v3703
    %v4314 = vunpack.c.l.b16 %v3704
    %v4315 = vunpack.c.h.b16 %v3704
    %v4316 = vunpack.c.l.b16 %v3705
    %v4317 = vunpack.c.l.b16 %v3706
    %v4318 = vunpack.c.h.b16 %v3706
    %v4319 = vunpack.c.l.b16 %v3707
    %v4320 = vunpack.c.h.b16 %v3707
    %v4321 = vunpack.c.l.b16 %v3708
    %v4322 = vunpack.c.h.b16 %v3708
    %v4323 = vunpack.c.l.b16 %v3709
    %v4324 = vunpack.c.l.b16 %v3710
    %v4325 = vunpack.c.h.b16 %v3710
    %v4326 = vunpack.c.l.b16 %v3711
    %v4327 = vunpack.c.h.b16 %v3711
    %v4328 = vunpack.c.l.b16 %v3712
    %v4329 = vunpack.c.h.b16 %v3712
    %v4330 = vunpack.c.l.b16 %v3713
    %v4331 = vunpack.c.l.b16 %v3714
    %v4332 = vunpack.c.h.b16 %v3714
    %v4333 = vunpack.c.l.b16 %v3715
    %v4334 = vunpack.c.h.b16 %v3715
    %v4335 = vunpack.c.l.b16 %v3716
    %v4336 = vunpack.c.h.b16 %v3716
    %v4337 = vunpack.c.l.b16 %v3717
    %v4338 = vunpack.c.l.b16 %v3718
    %v4339 = vunpack.c.h.b16 %v3718
    %v4340 = vunpack.c.l.b16 %v3719
    %v4341 = vunpack.c.h.b16 %v3719
    %v4342 = vunpack.c.l.b16 %v3720
    %v4343 = vunpack.c.h.b16 %v3720
    %v4344 = vunpack.c.l.b16 %v3721
    %v4345 = vunpack.c.l.b16 %v3722
    %v4346 = vunpack.c.h.b16 %v3722
    %v4347 = vunpack.c.l.b16 %v3723
    %v4348 = vunpack.c.h.b16 %v3723
    %v4349 = vunpack.c.l.b16 %v3724
    %v4350 = vunpack.c.h.b16 %v3724
    %v4351 = vunpack.c.l.b16 %v3725
    %v4352 = vunpack.c.l.b16 %v3726
    %v4353 = vunpack.c.h.b16 %v3726
    %v4354 = vunpack.c.l.b16 %v3727
    %v4355 = vunpack.c.h.b16 %v3727
    %v4356 = vunpack.c.l.b16 %v3728
    %v4357 = vunpack.c.h.b16 %v3728
    %v4358 = vunpack.c.l.b16 %v3729
    %v4359 = vunpack.c.l.b16 %v3730
    %v4360 = vunpack.c.h.b16 %v3730
    %v4361 = vunpack.c.l.b16 %v3731
    %v4362 = vunpack.c.h.b16 %v3731
    %v4363 = vunpack.c.l.b16 %v3732
    %v4364 = vunpack.c.h.b16 %v3732
    %v4365 = vunpack.c.l.b16 %v3733
    %v4366 = vunpack.c.l.b16 %v3734
    %v4367 = vunpack.c.h.b16 %v3734
    %v4368 = vunpack.c.l.b16 %v3735
    %v4369 = vunpack.c.h.b16 %v3735
    %v4370 = vunpack.c.l.b16 %v3736
    %v4371 = vunpack.c.h.b16 %v3736
    %v4372 = vunpack.c.l.b16 %v3737
    %v4373 = vunpack.c.l.b16 %v3738
    %v4374 = vunpack.c.h.b16 %v3738
    %v4375 = vunpack.c.l.b16 %v3739
    %v4376 = vunpack.c.h.b16 %v3739
    %v4377 = vunpack.c.l.b16 %v3740
    %v4378 = vunpack.c.h.b16 %v3740
    %v4379 = vunpack.c.l.b16 %v3741
    %v4380 = vunpack.c.l.b16 %v3742
    %v4381 = vunpack.c.h.b16 %v3742
    %v4382 = vunpack.c.l.b16 %v3743
    %v4383 = vunpack.c.h.b16 %v3743
    %v4384 = vunpack.c.l.b16 %v3744
    %v4385 = vunpack.c.h.b16 %v3744
    %v4386 = vunpack.c.l.b16 %v3745
    %v4387 = vunpack.c.l.b16 %v3746
    %v4388 = vunpack.c.h.b16 %v3746
    %v4389 = vunpack.c.l.b16 %v3747
    %v4390 = vunpack.c.h.b16 %v3747
    %v4391 = vunpack.c.l.b16 %v3748
    %v4392 = vunpack.c.h.b16 %v3748
    %v4393 = vunpack.c.l.b16 %v3749
    %v4394 = vunpack.c.l.b16 %v3750
    %v4395 = vunpack.c.h.b16 %v3750
    %v4396 = vunpack.c.l.b16 %v3751
    %v4397 = vunpack.c.h.b16 %v3751
    %v4398 = vunpack.c.l.b16 %v3752
    %v4399 = vunpack.c.h.b16 %v3752
    %v4400 = vunpack.c.l.b16 %v3753
    %v4401 = vunpack.c.l.b16 %v3754
    %v4402 = vunpack.c.h.b16 %v3754
    %v4403 = vunpack.c.l.b16 %v3755
    %v4404 = vunpack.c.h.b16 %v3755
    %v4405 = vunpack.c.l.b16 %v3756
    %v4406 = vunpack.c.h.b16 %v3756
    %v4407 = vunpack.c.l.b16 %v3757
    %v4408 = vunpack.c.l.b16 %v3758
    %v4409 = vunpack.c.h.b16 %v3758
    %v4410 = vunpack.c.l.b16 %v3759
    %v4411 = vunpack.c.h.b16 %v3759
    %v4412 = vunpack.c.l.b16 %v3760
    %v4413 = vunpack.c.h.b16 %v3760
    %v4414 = vunpack.c.l.b16 %v3761
    %v4415 = vunpack.c.l.b16 %v3762
    %v4416 = vunpack.c.h.b16 %v3762
    %v4417 = vunpack.c.l.b16 %v3763
    %v4418 = vunpack.c.h.b16 %v3763
    %v4419 = vunpack.c.l.b16 %v3764
    %v4420 = vunpack.c.h.b16 %v3764
    %v4421 = vunpack.c.l.b16 %v3765
    %v4422 = vunpack.c.l.b16 %v3766
    %v4423 = vunpack.c.h.b16 %v3766
    %v4424 = vunpack.c.l.b16 %v3767
    %v4425 = vunpack.c.h.b16 %v3767
    %v4426 = vunpack.c.l.b16 %v3768
    %v4427 = vunpack.c.h.b16 %v3768
    %v4428 = vunpack.c.l.b16 %v3769
    %v4429 = vunpack.c.l.b16 %v3770
    %v4430 = vunpack.c.h.b16 %v3770
    %v4431 = vunpack.c.l.b16 %v3771
    %v4432 = vunpack.c.h.b16 %v3771
    %v4433 = vunpack.c.l.b16 %v3772
    %v4434 = vunpack.c.h.b16 %v3772
    %v4435 = vunpack.c.l.b16 %v3773
    %v4436 = vunpack.c.l.b16 %v3774
    %v4437 = vunpack.c.h.b16 %v3774
    %v4438 = vunpack.c.l.b16 %v3775
    %v4439 = vunpack.c.h.b16 %v3775
    %v4440 = vunpack.c.l.b16 %v3776
    %v4441 = vunpack.c.h.b16 %v3776
    %v4442 = vunpack.c.l.b16 %v3777
    %v4443 = vunpack.c.l.b16 %v3778
    %v4444 = vunpack.c.h.b16 %v3778
    %v4445 = vunpack.c.l.b16 %v3779
    %v4446 = vunpack.c.h.b16 %v3779
    %v4447 = vunpack.c.l.b16 %v3780
    %v4448 = vunpack.c.h.b16 %v3780
    %v4449 = vunpack.c.l.b16 %v3781
    %v4450 = vunpack.c.l.b16 %v3782
    %v4451 = vunpack.c.h.b16 %v3782
    %v4452 = vunpack.c.l.b16 %v3783
    %v4453 = vunpack.c.h.b16 %v3783
    %v4454 = vunpack.c.l.b16 %v3784
    %v4455 = vunpack.c.h.b16 %v3784
    %v4456 = vunpack.c.l.b16 %v3785
    %v4457 = vunpack.c.l.b16 %v3786
    %v4458 = vunpack.c.h.b16 %v3786
    %v4459 = vunpack.c.l.b16 %v3787
    %v4460 = vunpack.c.h.b16 %v3787
    %v4461 = vunpack.c.l.b16 %v3788
    %v4462 = vunpack.c.h.b16 %v3788
    %v4463 = vunpack.c.l.b16 %v3789
    %v4464 = vunpack.c.l.b16 %v3790
    %v4465 = vunpack.c.h.b16 %v3790
    %v4466 = vunpack.c.l.b16 %v3791
    %v4467 = vunpack.c.h.b16 %v3791
    %v4468 = vunpack.c.l.b16 %v3792
    %v4469 = vunpack.c.h.b16 %v3792
    %v4470 = vunpack.c.l.b16 %v3793
    %v4471 = vunpack.c.l.b16 %v3794
    %v4472 = vunpack.c.h.b16 %v3794
    %v4473 = vunpack.c.l.b16 %v3795
    %v4474 = vunpack.c.h.b16 %v3795
    %v4475 = vunpack.c.l.b16 %v3796
    %v4476 = vunpack.c.h.b16 %v3796
    %v4477 = vunpack.c.l.b16 %v3797
    %v4478 = vunpack.c.l.b16 %v3798
    %v4479 = vunpack.c.h.b16 %v3798
    %v4480 = vunpack.c.l.b16 %v3799
    %v4481 = vunpack.c.h.b16 %v3799
    %v4482 = vunpack.c.l.b16 %v3800
    %v4483 = vunpack.c.h.b16 %v3800
    %v4484 = vunpack.c.l.b16 %v3801
    %v4485 = vunpack.c.l.b16 %v3802
    %v4486 = vunpack.c.h.b16 %v3802
    %v4487 = vunpack.c.l.b16 %v3803
    %v4488 = vunpack.c.h.b16 %v3803
    %v4489 = vunpack.c.l.b16 %v3804
    %v4490 = vunpack.c.h.b16 %v3804
    %v4491 = vunpack.c.l.b16 %v3805
    %v4492 = vunpack.c.l.b16 %v3806
    %v4493 = vunpack.c.h.b16 %v3806
    %v4494 = vunpack.c.l.b16 %v3807
    %v4495 = vunpack.c.h.b16 %v3807
    %v4496 = vunpack.c.l.b16 %v3808
    %v4497 = vunpack.c.h.b16 %v3808
    %v4498 = vunpack.c.l.b16 %v3809
    %v4499 = vunpack.c.l.b16 %v3810
    %v4500 = vunpack.c.h.b16 %v3810
    %v4501 = vunpack.c.l.b16 %v3811
    %v4502 = vunpack.c.h.b16 %v3811
    %v4503 = vunpack.c.l.b16 %v3812
    %v4504 = vunpack.c.h.b16 %v3812
    %v4505 = vunpack.c.l.b16 %v3813
    %v4506 = vunpack.c.l.b16 %v3814
    %v4507 = vunpack.c.h.b16 %v3814
    %v4508 = vunpack.c.l.b16 %v3815
    %v4509 = vunpack.c.h.b16 %v3815
    %v4510 = vunpack.c.l.b16 %v3816
    %v4511 = vunpack.c.h.b16 %v3816
    %v4512 = vunpack.c.l.b16 %v3817
    %v4513 = vunpack.c.l.b16 %v3818
    %v4514 = vunpack.c.h.b16 %v3818
    %v4515 = vunpack.c.l.b16 %v3819
    %v4516 = vunpack.c.h.b16 %v3819
    %v4517 = vunpack.c.l.b16 %v3820
    %v4518 = vunpack.c.h.b16 %v3820
    %v4519 = vunpack.c.l.b16 %v3821
    %v4520 = vunpack.c.l.b16 %v3822
    %v4521 = vunpack.c.h.b16 %v3822
    %v4522 = vunpack.c.l.b16 %v3823
    %v4523 = vunpack.c.h.b16 %v3823
    %v4524 = vunpack.c.l.b16 %v3824
    %v4525 = vunpack.c.h.b16 %v3824
    %v4526 = vunpack.c.l.b16 %v3825
    %v4527 = vunpack.c.l.b16 %v3826
    %v4528 = vunpack.c.h.b16 %v3826
    %v4529 = vunpack.c.l.b16 %v3827
    %v4530 = vunpack.c.h.b16 %v3827
    %v4531 = vunpack.c.l.b16 %v3828
    %v4532 = vunpack.c.h.b16 %v3828
    %v4533 = vunpack.c.l.b16 %v3829
    %v4534 = vunpack.c.l.b16 %v3830
    %v4535 = vunpack.c.h.b16 %v3830
    %v4536 = vunpack.c.l.b16 %v3831
    %v4537 = vunpack.c.h.b16 %v3831
    %v4538 = vunpack.c.l.b16 %v3832
    %v4539 = vunpack.c.h.b16 %v3832
    %v4540 = vunpack.c.l.b16 %v3833
    %v4541 = vunpack.c.l.b16 %v3834
    %v4542 = vunpack.c.h.b16 %v3834
    %v4543 = vunpack.c.l.b16 %v3835
    %v4544 = vunpack.c.h.b16 %v3835
    %v4545 = vunpack.c.l.b16 %v3836
    %v4546 = vunpack.c.h.b16 %v3836
    %v4547 = vunpack.c.l.b16 %v3837
    %v4548 = vunpack.c.l.b16 %v3838
    %v4549 = vunpack.c.h.b16 %v3838
    %v4550 = vunpack.c.l.b16 %v3839
    %v4551 = vunpack.c.h.b16 %v3839
    %v4552 = vunpack.c.l.b16 %v3840
    %v4553 = vunpack.c.h.b16 %v3840
    %v4554 = vunpack.c.l.b16 %v3841
    %v4555 = vunpack.c.l.b16 %v3842
    %v4556 = vunpack.c.h.b16 %v3842
    %v4557 = vunpack.c.l.b16 %v3843
    %v4558 = vunpack.c.h.b16 %v3843
    %v4559 = vunpack.c.l.b16 %v3844
    %v4560 = vunpack.c.h.b16 %v3844
    %v4561 = vunpack.c.l.b16 %v3845
    %v4562 = vunpack.c.l.b16 %v3846
    %v4563 = vunpack.c.h.b16 %v3846
    %v4564 = vunpack.c.l.b16 %v3847
    %v4565 = vunpack.c.h.b16 %v3847
    %v4566 = vunpack.c.l.b16 %v3848
    %v4567 = vunpack.c.h.b16 %v3848
    %v4568 = vunpack.c.l.b16 %v3849
    %v4569 = vunpack.c.l.b16 %v3850
    %v4570 = vunpack.c.h.b16 %v3850
    %v4571 = vunpack.c.l.b16 %v3851
    %v4572 = vunpack.c.h.b16 %v3851
    %v4573 = vunpack.c.l.b16 %v3852
    %v4574 = vunpack.c.h.b16 %v3852
    %v4575 = vunpack.c.l.b16 %v3853
    %v4576 = vunpack.c.l.b16 %v3854
    %v4577 = vunpack.c.h.b16 %v3854
    %v4578 = vunpack.c.l.b16 %v3855
    %v4579 = vunpack.c.h.b16 %v3855
    %v4580 = vunpack.c.l.b16 %v3856
    %v4581 = vunpack.c.h.b16 %v3856
    %v4582 = vunpack.c.l.b16 %v3857
    %v4583 = vunpack.c.l.b16 %v3858
    %v4584 = vunpack.c.h.b16 %v3858
    %v4585 = vunpack.c.l.b16 %v3859
    %v4586 = vunpack.c.h.b16 %v3859
    %v4587 = vunpack.c.l.b16 %v3860
    %v4588 = vunpack.c.h.b16 %v3860
    %v4589 = vunpack.c.l.b16 %v3861
    %v4590 = vunpack.c.l.b16 %v3862
    %v4591 = vunpack.c.h.b16 %v3862
    %v4592 = vunpack.c.l.b16 %v3863
    %v4593 = vunpack.c.h.b16 %v3863
    %v4594 = vunpack.c.l.b16 %v3864
    %v4595 = vunpack.c.h.b16 %v3864
    %v4596 = vunpack.c.l.b16 %v3865
    %v4597 = vunpack.c.l.b16 %v3866
    %v4598 = vunpack.c.h.b16 %v3866
    %v4599 = vunpack.c.l.b16 %v3867
    %v4600 = vunpack.c.h.b16 %v3867
    %v4601 = vunpack.c.l.b16 %v3868
    %v4602 = vunpack.c.h.b16 %v3868
    %v4603 = vunpack.c.l.b16 %v3869
    %v4604 = vunpack.c.l.b16 %v3870
    %v4605 = vunpack.c.h.b16 %v3870
    %v4606 = vunpack.c.l.b16 %v3871
    %v4607 = vunpack.c.h.b16 %v3871
    %v4608 = vunpack.c.l.b16 %v3872
    %v4609 = vunpack.c.h.b16 %v3872
    %v4610 = vunpack.c.l.b16 %v3873
    %v4611 = vunpack.c.l.b16 %v3874
    %v4612 = vunpack.c.h.b16 %v3874
    %v4613 = vunpack.c.l.b16 %v3875
    %v4614 = vunpack.c.h.b16 %v3875
    %v4615 = vunpack.c.l.b16 %v3876
    %v4616 = vunpack.c.h.b16 %v3876
    %v4617 = vunpack.c.l.b16 %v3877
    %v4618 = vpack.c.b16 %v4177, %v4170
    %v4619 = vpack.c.b16 %v4178, %v4171
    %v4620 = vpack.c.b16 %v4179, %v4172
    %v4621 = vpack.c.b16 %v4180, %v4173
    %v4622 = vpack.c.b16 %v4181, %v4174
    %v4623 = vpack.c.b16 %v4182, %v4175
    %v4624 = vpack.c.b16 %v4183, %v4176
    %v4625 = vpack.c.b16 %v4191, %v4184
    %v4626 = vpack.c.b16 %v4192, %v4185
    %v4627 = vpack.c.b16 %v4193, %v4186
    %v4628 = vpack.c.b16 %v4194, %v4187
    %v4629 = vpack.c.b16 %v4195, %v4188
    %v4630 = vpack.c.b16 %v4196, %v4189
    %v4631 = vpack.c.b16 %v4197, %v4190
    %v4632 = vpack.c.b16 %v4205, %v4198
    %v4633 = vpack.c.b16 %v4206, %v4199
    %v4634 = vpack.c.b16 %v4207, %v4200
    %v4635 = vpack.c.b16 %v4208, %v4201
    %v4636 = vpack.c.b16 %v4209, %v4202
    %v4637 = vpack.c.b16 %v4210, %v4203
    %v4638 = vpack.c.b16 %v4211, %v4204
    %v4639 = vpack.c.b16 %v4219, %v4212
    %v4640 = vpack.c.b16 %v4220, %v4213
    %v4641 = vpack.c.b16 %v4221, %v4214
    %v4642 = vpack.c.b16 %v4222, %v4215
    %v4643 = vpack.c.b16 %v4223, %v4216
    %v4644 = vpack.c.b16 %v4224, %v4217
    %v4645 = vpack.c.b16 %v4225, %v4218
    %v4646 = vpack.c.b16 %v4233, %v4226
    %v4647 = vpack.c.b16 %v4234, %v4227
    %v4648 = vpack.c.b16 %v4235, %v4228
    %v4649 = vpack.c.b16 %v4236, %v4229
    %v4650 = vpack.c.b16 %v4237, %v4230
    %v4651 = vpack.c.b16 %v4238, %v4231
    %v4652 = vpack.c.b16 %v4239, %v4232
    %v4653 = vpack.c.b16 %v4247, %v4240
    %v4654 = vpack.c.b16 %v4248, %v4241
    %v4655 = vpack.c.b16 %v4249, %v4242
    %v4656 = vpack.c.b16 %v4250, %v4243
    %v4657 = vpack.c.b16 %v4251, %v4244
    %v4658 = vpack.c.b16 %v4252, %v4245
    %v4659 = vpack.c.b16 %v4253, %v4246
    %v4660 = vpack.c.b16 %v4261, %v4254
    %v4661 = vpack.c.b16 %v4262, %v4255
    %v4662 = vpack.c.b16 %v4263, %v4256
    %v4663 = vpack.c.b16 %v4264, %v4257
    %v4664 = vpack.c.b16 %v4265, %v4258
    %v4665 = vpack.c.b16 %v4266, %v4259
    %v4666 = vpack.c.b16 %v4267, %v4260
    %v4667 = vpack.c.b16 %v4275, %v4268
    %v4668 = vpack.c.b16 %v4276, %v4269
    %v4669 = vpack.c.b16 %v4277, %v4270
    %v4670 = vpack.c.b16 %v4278, %v4271
    %v4671 = vpack.c.b16 %v4279, %v4272
    %v4672 = vpack.c.b16 %v4280, %v4273
    %v4673 = vpack.c.b16 %v4281, %v4274
    %v4674 = vpack.c.b16 %v4289, %v4282
    %v4675 = vpack.c.b16 %v4290, %v4283
    %v4676 = vpack.c.b16 %v4291, %v4284
    %v4677 = vpack.c.b16 %v4292, %v4285
    %v4678 = vpack.c.b16 %v4293, %v4286
    %v4679 = vpack.c.b16 %v4294, %v4287
    %v4680 = vpack.c.b16 %v4295, %v4288
    %v4681 = vpack.c.b16 %v4303, %v4296
    %v4682 = vpack.c.b16 %v4304, %v4297
    %v4683 = vpack.c.b16 %v4305, %v4298
    %v4684 = vpack.c.b16 %v4306, %v4299
    %v4685 = vpack.c.b16 %v4307, %v4300
    %v4686 = vpack.c.b16 %v4308, %v4301
    %v4687 = vpack.c.b16 %v4309, %v4302
    %v4688 = vpack.c.b16 %v4317, %v4310
    %v4689 = vpack.c.b16 %v4318, %v4311
    %v4690 = vpack.c.b16 %v4319, %v4312
    %v4691 = vpack.c.b16 %v4320, %v4313
    %v4692 = vpack.c.b16 %v4321, %v4314
    %v4693 = vpack.c.b16 %v4322, %v4315
    %v4694 = vpack.c.b16 %v4323, %v4316
    %v4695 = vpack.c.b16 %v4331, %v4324
    %v4696 = vpack.c.b16 %v4332, %v4325
    %v4697 = vpack.c.b16 %v4333, %v4326
    %v4698 = vpack.c.b16 %v4334, %v4327
    %v4699 = vpack.c.b16 %v4335, %v4328
    %v4700 = vpack.c.b16 %v4336, %v4329
    %v4701 = vpack.c.b16 %v4337, %v4330
    %v4702 = vpack.c.b16 %v4345, %v4338
    %v4703 = vpack.c.b16 %v4346, %v4339
    %v4704 = vpack.c.b16 %v4347, %v4340
    %v4705 = vpack.c.b16 %v4348, %v4341
    %v4706 = vpack.c.b16 %v4349, %v4342
    %v4707 = vpack.c.b16 %v4350, %v4343
    %v4708 = vpack.c.b16 %v4351, %v4344
    %v4709 = vpack.c.b16 %v4359, %v4352
    %v4710 = vpack.c.b16 %v4360, %v4353
    %v4711 = vpack.c.b16 %v4361, %v4354
    %v4712 = vpack.c.b16 %v4362, %v4355
    %v4713 = vpack.c.b16 %v4363, %v4356
    %v4714 = vpack.c.b16 %v4364, %v4357
    %v4715 = vpack.c.b16 %v4365, %v4358
    %v4716 = vpack.c.b16 %v4373, %v4366
    %v4717 = vpack.c.b16 %v4374, %v4367
    %v4718 = vpack.c.b16 %v4375, %v4368
    %v4719 = vpack.c.b16 %v4376, %v4369
    %v4720 = vpack.c.b16 %v4377, %v4370
    %v4721 = vpack.c.b16 %v4378, %v4371
    %v4722 = vpack.c.b16 %v4379, %v4372
    %v4723 = vpack.c.b16 %v4387, %v4380
    %v4724 = vpack.c.b16 %v4388, %v4381
    %v4725 = vpack.c.b16 %v4389, %v4382
    %v4726 = vpack.c.b16 %v4390, %v4383
    %v4727 = vpack.c.b16 %v4391, %v4384
    %v4728 = vpack.c.b16 %v4392, %v4385
    %v4729 = vpack.c.b16 %v4393, %v4386
    %v4730 = vpack.c.b16 %v4401, %v4394
    %v4731 = vpack.c.b16 %v4402, %v4395
    %v4732 = vpack.c.b16 %v4403, %v4396
    %v4733 = vpack.c.b16 %v4404, %v4397
    %v4734 = vpack.c.b16 %v4405, %v4398
    %v4735 = vpack.c.b16 %v4406, %v4399
    %v4736 = vpack.c.b16 %v4407, %v4400
    %v4737 = vpack.c.b16 %v4415, %v4408
    %v4738 = vpack.c.b16 %v4416, %v4409
    %v4739 = vpack.c.b16 %v4417, %v4410
    %v4740 = vpack.c.b16 %v4418, %v4411
    %v4741 = vpack.c.b16 %v4419, %v4412
    %v4742 = vpack.c.b16 %v4420, %v4413
    %v4743 = vpack.c.b16 %v4421, %v4414
    %v4744 = vpack.c.b16 %v4429, %v4422
    %v4745 = vpack.c.b16 %v4430, %v4423
    %v4746 = vpack.c.b16 %v4431, %v4424
    %v4747 = vpack.c.b16 %v4432, %v4425
    %v4748 = vpack.c.b16 %v4433, %v4426
    %v4749 = vpack.c.b16 %v4434, %v4427
    %v4750 = vpack.c.b16 %v4435, %v4428
    %v4751 = vpack.c.b16 %v4443, %v4436
    %v4752 = vpack.c.b16 %v4444, %v4437
    %v4753 = vpack.c.b16 %v4445, %v4438
    %v4754 = vpack.c.b16 %v4446, %v4439
    %v4755 = vpack.c.b16 %v4447, %v4440
    %v4756 = vpack.c.b16 %v4448, %v4441
    %v4757 = vpack.c.b16 %v4449, %v4442
    %v4758 = vpack.c.b16 %v4457, %v4450
    %v4759 = vpack.c.b16 %v4458, %v4451
    %v4760 = vpack.c.b16 %v4459, %v4452
    %v4761 = vpack.c.b16 %v4460, %v4453
    %v4762 = vpack.c.b16 %v4461, %v4454
    %v4763 = vpack.c.b16 %v4462, %v4455
    %v4764 = vpack.c.b16 %v4463, %v4456
    %v4765 = vpack.c.b16 %v4471, %v4464
    %v4766 = vpack.c.b16 %v4472, %v4465
    %v4767 = vpack.c.b16 %v4473, %v4466
    %v4768 = vpack.c.b16 %v4474, %v4467
    %v4769 = vpack.c.b16 %v4475, %v4468
    %v4770 = vpack.c.b16 %v4476, %v4469
    %v4771 = vpack.c.b16 %v4477, %v4470
    %v4772 = vpack.c.b16 %v4485, %v4478
    %v4773 = vpack.c.b16 %v4486, %v4479
    %v4774 = vpack.c.b16 %v4487, %v4480
    %v4775 = vpack.c.b16 %v4488, %v4481
    %v4776 = vpack.c.b16 %v4489, %v4482
    %v4777 = vpack.c.b16 %v4490, %v4483
    %v4778 = vpack.c.b16 %v4491, %v4484
    %v4779 = vpack.c.b16 %v4499, %v4492
    %v4780 = vpack.c.b16 %v4500, %v4493
    %v4781 = vpack.c.b16 %v4501, %v4494
    %v4782 = vpack.c.b16 %v4502, %v4495
    %v4783 = vpack.c.b16 %v4503, %v4496
    %v4784 = vpack.c.b16 %v4504, %v4497
    %v4785 = vpack.c.b16 %v4505, %v4498
    %v4786 = vpack.c.b16 %v4513, %v4506
    %v4787 = vpack.c.b16 %v4514, %v4507
    %v4788 = vpack.c.b16 %v4515, %v4508
    %v4789 = vpack.c.b16 %v4516, %v4509
    %v4790 = vpack.c.b16 %v4517, %v4510
    %v4791 = vpack.c.b16 %v4518, %v4511
    %v4792 = vpack.c.b16 %v4519, %v4512
    %v4793 = vpack.c.b16 %v4527, %v4520
    %v4794 = vpack.c.b16 %v4528, %v4521
    %v4795 = vpack.c.b16 %v4529, %v4522
    %v4796 = vpack.c.b16 %v4530, %v4523
    %v4797 = vpack.c.b16 %v4531, %v4524
    %v4798 = vpack.c.b16 %v4532, %v4525
    %v4799 = vpack.c.b16 %v4533, %v4526
    %v4800 = vpack.c.b16 %v4541, %v4534
    %v4801 = vpack.c.b16 %v4542, %v4535
    %v4802 = vpack.c.b16 %v4543, %v4536
    %v4803 = vpack.c.b16 %v4544, %v4537
    %v4804 = vpack.c.b16 %v4545, %v4538
    %v4805 = vpack.c.b16 %v4546, %v4539
    %v4806 = vpack.c.b16 %v4547, %v4540
    %v4807 = vpack.c.b16 %v4555, %v4548
    %v4808 = vpack.c.b16 %v4556, %v4549
    %v4809 = vpack.c.b16 %v4557, %v4550
    %v4810 = vpack.c.b16 %v4558, %v4551
    %v4811 = vpack.c.b16 %v4559, %v4552
    %v4812 = vpack.c.b16 %v4560, %v4553
    %v4813 = vpack.c.b16 %v4561, %v4554
    %v4814 = vpack.c.b16 %v4569, %v4562
    %v4815 = vpack.c.b16 %v4570, %v4563
    %v4816 = vpack.c.b16 %v4571, %v4564
    %v4817 = vpack.c.b16 %v4572, %v4565
    %v4818 = vpack.c.b16 %v4573, %v4566
    %v4819 = vpack.c.b16 %v4574, %v4567
    %v4820 = vpack.c.b16 %v4575, %v4568
    %v4821 = vpack.c.b16 %v4583, %v4576
    %v4822 = vpack.c.b16 %v4584, %v4577
    %v4823 = vpack.c.b16 %v4585, %v4578
    %v4824 = vpack.c.b16 %v4586, %v4579
    %v4825 = vpack.c.b16 %v4587, %v4580
    %v4826 = vpack.c.b16 %v4588, %v4581
    %v4827 = vpack.c.b16 %v4589, %v4582
    %v4828 = vpack.c.b16 %v4597, %v4590
    %v4829 = vpack.c.b16 %v4598, %v4591
    %v4830 = vpack.c.b16 %v4599, %v4592
    %v4831 = vpack.c.b16 %v4600, %v4593
    %v4832 = vpack.c.b16 %v4601, %v4594
    %v4833 = vpack.c.b16 %v4602, %v4595
    %v4834 = vpack.c.b16 %v4603, %v4596
    %v4835 = vpack.c.b16 %v4611, %v4604
    %v4836 = vpack.c.b16 %v4612, %v4605
    %v4837 = vpack.c.b16 %v4613, %v4606
    %v4838 = vpack.c.b16 %v4614, %v4607
    %v4839 = vpack.c.b16 %v4615, %v4608
    %v4840 = vpack.c.b16 %v4616, %v4609
    %v4841 = vpack.c.b16 %v4617, %v4610
    %5066 = vmatprep.subr.bf16.mxu0 %v4668
    %5067 = vmatpush1.bf16.msra.mxu0 %v4667
    %5068 = vmatprep.subr.bf16.mxu0 %v4661
    %5069 = vmatpush1.bf16.msra.mxu0 %v4660
    %5070 = vmatprep.subr.bf16.mxu0 %v4654
    %5071 = vmatpush1.bf16.msra.mxu0 %v4653
    %5072 = vmatprep.subr.bf16.mxu0 %v4647
    %5073 = vmatpush1.bf16.msra.mxu0 %v4646
    %5074 = vmatprep.subr.bf16.mxu0 %v4640
    %5075 = vmatpush1.bf16.msra.mxu0 %v4639
    %5076 = vmatprep.subr.bf16.mxu0 %v4633
    %5077 = vmatpush1.bf16.msra.mxu0 %v4632
    %5078 = vmatprep.subr.bf16.mxu0 %v4626
    %5079 = vmatpush1.bf16.msra.mxu0 %v4625
    %5080 = vmatprep.subr.bf16.mxu0 %v4619
    %5081 = vmatpush1.bf16.msra.mxu0 %v4618
    %5082 = vmatprep.subr.bf16.mxu0 %v4724
    %5083 = vmatpush2.bf16.msra.mxu0 %v4723
    %5084 = vmatprep.subr.bf16.mxu0 %v4717
    %5085 = vmatpush2.bf16.msra.mxu0 %v4716
    %5086 = vmatprep.subr.bf16.mxu0 %v4710
    %5087 = vmatpush2.bf16.msra.mxu0 %v4709
    %5088 = vmatprep.subr.bf16.mxu0 %v4703
    %5089 = vmatpush2.bf16.msra.mxu0 %v4702
    %5090 = vmatprep.subr.bf16.mxu0 %v4696
    %5091 = vmatpush2.bf16.msra.mxu0 %v4695
    %5092 = vmatprep.subr.bf16.mxu0 %v4689
    %5093 = vmatpush2.bf16.msra.mxu0 %v4688
    %5094 = vmatprep.subr.bf16.mxu0 %v4682
    %5095 = vmatpush2.bf16.msra.mxu0 %v4681
    %5096 = vmatprep.subr.bf16.mxu0 %v4675
    %5097 = vmatpush2.bf16.msra.mxu0 %v4674
    %5098 = vmatprep.mubr.bf16.mxu0 %v3619
    %5099 = vmatmul.mubr.bf16.gmra.mxu0 %v3618
    %v5100 = vpop.f32.mrf.mxu0
    %v5101 = vadd.f32 %v3882, %v5100
    %v5102 = vpop.f32.mrf.mxu0
    %v5103 = vadd.f32 %v3886, %v5102
    %v5104 = vpop.f32.mrf.mxu0
    %v5105 = vadd.f32 %v3882, %v5104
    %v5106 = vpop.f32.mrf.mxu0
    %v5107 = vadd.f32 %v3886, %v5106
    %5108 = vdwg.mxu0
    %5109 = vmatprep.subr.bf16.mxu0 %v4780
    %5110 = vmatpush1.bf16.msra.mxu0 %v4779
    %5111 = vmatprep.subr.bf16.mxu0 %v4773
    %5112 = vmatpush1.bf16.msra.mxu0 %v4772
    %5113 = vmatprep.subr.bf16.mxu0 %v4766
    %5114 = vmatpush1.bf16.msra.mxu0 %v4765
    %5115 = vmatprep.subr.bf16.mxu0 %v4759
    %5116 = vmatpush1.bf16.msra.mxu0 %v4758
    %5117 = vmatprep.subr.bf16.mxu0 %v4752
    %5118 = vmatpush1.bf16.msra.mxu0 %v4751
    %5119 = vmatprep.subr.bf16.mxu0 %v4745
    %5120 = vmatpush1.bf16.msra.mxu0 %v4744
    %5121 = vmatprep.subr.bf16.mxu0 %v4738
    %5122 = vmatpush1.bf16.msra.mxu0 %v4737
    %5123 = vmatprep.subr.bf16.mxu0 %v4731
    %5124 = vmatpush1.bf16.msra.mxu0 %v4730
    %5125 = vmatprep.subr.bf16.mxu0 %v4836
    %5126 = vmatpush2.bf16.msra.mxu0 %v4835
    %5127 = vmatprep.subr.bf16.mxu0 %v4829
    %5128 = vmatpush2.bf16.msra.mxu0 %v4828
    %5129 = vmatprep.subr.bf16.mxu0 %v4822
    %5130 = vmatpush2.bf16.msra.mxu0 %v4821
    %5131 = vmatprep.subr.bf16.mxu0 %v4815
    %5132 = vmatpush2.bf16.msra.mxu0 %v4814
    %5133 = vmatprep.subr.bf16.mxu0 %v4808
    %5134 = vmatpush2.bf16.msra.mxu0 %v4807
    %5135 = vmatprep.subr.bf16.mxu0 %v4801
    %5136 = vmatpush2.bf16.msra.mxu0 %v4800
    %5137 = vmatprep.subr.bf16.mxu0 %v4794
    %5138 = vmatpush2.bf16.msra.mxu0 %v4793
    %5139 = vmatprep.subr.bf16.mxu0 %v4787
    %5140 = vmatpush2.bf16.msra.mxu0 %v4786
    %5141 = vmatprep.mubr.bf16.mxu0 %v3621
    %5142 = vmatmul.mubr.bf16.gmra.mxu0 %v3620
    %v5143 = vpop.f32.mrf.mxu0
    %v5144 = vadd.f32 %v5101, %v5143
    %v5145 = vpop.f32.mrf.mxu0
    %v5146 = vadd.f32 %v5103, %v5145
    %v5147 = vpop.f32.mrf.mxu0
    %v5148 = vadd.f32 %v5105, %v5147
    %v5149 = vpop.f32.mrf.mxu0
    %v5150 = vadd.f32 %v5107, %v5149
    %5151 = vdwg.mxu0
    %5152 = vmatprep.subr.bf16.mxu0 %v4670
    %5153 = vmatpush1.bf16.msra.mxu0 %v4669
    %5154 = vmatprep.subr.bf16.mxu0 %v4663
    %5155 = vmatpush1.bf16.msra.mxu0 %v4662
    %5156 = vmatprep.subr.bf16.mxu0 %v4656
    %5157 = vmatpush1.bf16.msra.mxu0 %v4655
    %5158 = vmatprep.subr.bf16.mxu0 %v4649
    %5159 = vmatpush1.bf16.msra.mxu0 %v4648
    %5160 = vmatprep.subr.bf16.mxu0 %v4642
    %5161 = vmatpush1.bf16.msra.mxu0 %v4641
    %5162 = vmatprep.subr.bf16.mxu0 %v4635
    %5163 = vmatpush1.bf16.msra.mxu0 %v4634
    %5164 = vmatprep.subr.bf16.mxu0 %v4628
    %5165 = vmatpush1.bf16.msra.mxu0 %v4627
    %5166 = vmatprep.subr.bf16.mxu0 %v4621
    %5167 = vmatpush1.bf16.msra.mxu0 %v4620
    %5168 = vmatprep.subr.bf16.mxu0 %v4726
    %5169 = vmatpush2.bf16.msra.mxu0 %v4725
    %5170 = vmatprep.subr.bf16.mxu0 %v4719
    %5171 = vmatpush2.bf16.msra.mxu0 %v4718
    %5172 = vmatprep.subr.bf16.mxu0 %v4712
    %5173 = vmatpush2.bf16.msra.mxu0 %v4711
    %5174 = vmatprep.subr.bf16.mxu0 %v4705
    %5175 = vmatpush2.bf16.msra.mxu0 %v4704
    %5176 = vmatprep.subr.bf16.mxu0 %v4698
    %5177 = vmatpush2.bf16.msra.mxu0 %v4697
    %5178 = vmatprep.subr.bf16.mxu0 %v4691
    %5179 = vmatpush2.bf16.msra.mxu0 %v4690
    %5180 = vmatprep.subr.bf16.mxu0 %v4684
    %5181 = vmatpush2.bf16.msra.mxu0 %v4683
    %5182 = vmatprep.subr.bf16.mxu0 %v4677
    %5183 = vmatpush2.bf16.msra.mxu0 %v4676
    %5184 = vmatprep.mubr.bf16.mxu0 %v3619
    %5185 = vmatmul.mubr.bf16.gmra.mxu0 %v3618
    %v5186 = vpop.f32.mrf.mxu0
    %v5187 = vadd.f32 %v3890, %v5186
    %v5188 = vpop.f32.mrf.mxu0
    %v5189 = vadd.f32 %v3894, %v5188
    %v5190 = vpop.f32.mrf.mxu0
    %v5191 = vadd.f32 %v3890, %v5190
    %v5192 = vpop.f32.mrf.mxu0
    %v5193 = vadd.f32 %v3894, %v5192
    %5194 = vdwg.mxu0
    %5195 = vmatprep.subr.bf16.mxu0 %v4782
    %5196 = vmatpush1.bf16.msra.mxu0 %v4781
    %5197 = vmatprep.subr.bf16.mxu0 %v4775
    %5198 = vmatpush1.bf16.msra.mxu0 %v4774
    %5199 = vmatprep.subr.bf16.mxu0 %v4768
    %5200 = vmatpush1.bf16.msra.mxu0 %v4767
    %5201 = vmatprep.subr.bf16.mxu0 %v4761
    %5202 = vmatpush1.bf16.msra.mxu0 %v4760
    %5203 = vmatprep.subr.bf16.mxu0 %v4754
    %5204 = vmatpush1.bf16.msra.mxu0 %v4753
    %5205 = vmatprep.subr.bf16.mxu0 %v4747
    %5206 = vmatpush1.bf16.msra.mxu0 %v4746
    %5207 = vmatprep.subr.bf16.mxu0 %v4740
    %5208 = vmatpush1.bf16.msra.mxu0 %v4739
    %5209 = vmatprep.subr.bf16.mxu0 %v4733
    %5210 = vmatpush1.bf16.msra.mxu0 %v4732
    %5211 = vmatprep.subr.bf16.mxu0 %v4838
    %5212 = vmatpush2.bf16.msra.mxu0 %v4837
    %5213 = vmatprep.subr.bf16.mxu0 %v4831
    %5214 = vmatpush2.bf16.msra.mxu0 %v4830
    %5215 = vmatprep.subr.bf16.mxu0 %v4824
    %5216 = vmatpush2.bf16.msra.mxu0 %v4823
    %5217 = vmatprep.subr.bf16.mxu0 %v4817
    %5218 = vmatpush2.bf16.msra.mxu0 %v4816
    %5219 = vmatprep.subr.bf16.mxu0 %v4810
    %5220 = vmatpush2.bf16.msra.mxu0 %v4809
    %5221 = vmatprep.subr.bf16.mxu0 %v4803
    %5222 = vmatpush2.bf16.msra.mxu0 %v4802
    %5223 = vmatprep.subr.bf16.mxu0 %v4796
    %5224 = vmatpush2.bf16.msra.mxu0 %v4795
    %5225 = vmatprep.subr.bf16.mxu0 %v4789
    %5226 = vmatpush2.bf16.msra.mxu0 %v4788
    %5227 = vmatprep.mubr.bf16.mxu0 %v3621
    %5228 = vmatmul.mubr.bf16.gmra.mxu0 %v3620
    %v5229 = vpop.f32.mrf.mxu0
    %v5230 = vadd.f32 %v5187, %v5229
    %v5231 = vpop.f32.mrf.mxu0
    %v5232 = vadd.f32 %v5189, %v5231
    %v5233 = vpop.f32.mrf.mxu0
    %v5234 = vadd.f32 %v5191, %v5233
    %v5235 = vpop.f32.mrf.mxu0
    %v5236 = vadd.f32 %v5193, %v5235
    %5237 = vdwg.mxu0
    %5238 = vmatprep.subr.bf16.mxu0 %v4672
    %5239 = vmatpush1.bf16.msra.mxu0 %v4671
    %5240 = vmatprep.subr.bf16.mxu0 %v4665
    %5241 = vmatpush1.bf16.msra.mxu0 %v4664
    %5242 = vmatprep.subr.bf16.mxu0 %v4658
    %5243 = vmatpush1.bf16.msra.mxu0 %v4657
    %5244 = vmatprep.subr.bf16.mxu0 %v4651
    %5245 = vmatpush1.bf16.msra.mxu0 %v4650
    %5246 = vmatprep.subr.bf16.mxu0 %v4644
    %5247 = vmatpush1.bf16.msra.mxu0 %v4643
    %5248 = vmatprep.subr.bf16.mxu0 %v4637
    %5249 = vmatpush1.bf16.msra.mxu0 %v4636
    %5250 = vmatprep.subr.bf16.mxu0 %v4630
    %5251 = vmatpush1.bf16.msra.mxu0 %v4629
    %5252 = vmatprep.subr.bf16.mxu0 %v4623
    %5253 = vmatpush1.bf16.msra.mxu0 %v4622
    %5254 = vmatprep.subr.bf16.mxu0 %v4728
    %5255 = vmatpush2.bf16.msra.mxu0 %v4727
    %5256 = vmatprep.subr.bf16.mxu0 %v4721
    %5257 = vmatpush2.bf16.msra.mxu0 %v4720
    %5258 = vmatprep.subr.bf16.mxu0 %v4714
    %5259 = vmatpush2.bf16.msra.mxu0 %v4713
    %5260 = vmatprep.subr.bf16.mxu0 %v4707
    %5261 = vmatpush2.bf16.msra.mxu0 %v4706
    %5262 = vmatprep.subr.bf16.mxu0 %v4700
    %5263 = vmatpush2.bf16.msra.mxu0 %v4699
    %5264 = vmatprep.subr.bf16.mxu0 %v4693
    %5265 = vmatpush2.bf16.msra.mxu0 %v4692
    %5266 = vmatprep.subr.bf16.mxu0 %v4686
    %5267 = vmatpush2.bf16.msra.mxu0 %v4685
    %5268 = vmatprep.subr.bf16.mxu0 %v4679
    %5269 = vmatpush2.bf16.msra.mxu0 %v4678
    %5270 = vmatprep.mubr.bf16.mxu0 %v3619
    %5271 = vmatmul.mubr.bf16.gmra.mxu0 %v3618
    %v5272 = vpop.f32.mrf.mxu0
    %v5273 = vadd.f32 %v3898, %v5272
    %v5274 = vpop.f32.mrf.mxu0
    %v5275 = vadd.f32 %v3902, %v5274
    %v5276 = vpop.f32.mrf.mxu0
    %v5277 = vadd.f32 %v3898, %v5276
    %v5278 = vpop.f32.mrf.mxu0
    %v5279 = vadd.f32 %v3902, %v5278
    %5280 = vdwg.mxu0
    %5281 = vmatprep.subr.bf16.mxu0 %v4784
    %5282 = vmatpush1.bf16.msra.mxu0 %v4783
    %5283 = vmatprep.subr.bf16.mxu0 %v4777
    %5284 = vmatpush1.bf16.msra.mxu0 %v4776
    %5285 = vmatprep.subr.bf16.mxu0 %v4770
    %5286 = vmatpush1.bf16.msra.mxu0 %v4769
    %5287 = vmatprep.subr.bf16.mxu0 %v4763
    %5288 = vmatpush1.bf16.msra.mxu0 %v4762
    %5289 = vmatprep.subr.bf16.mxu0 %v4756
    %5290 = vmatpush1.bf16.msra.mxu0 %v4755
    %5291 = vmatprep.subr.bf16.mxu0 %v4749
    %5292 = vmatpush1.bf16.msra.mxu0 %v4748
    %5293 = vmatprep.subr.bf16.mxu0 %v4742
    %5294 = vmatpush1.bf16.msra.mxu0 %v4741
    %5295 = vmatprep.subr.bf16.mxu0 %v4735
    %5296 = vmatpush1.bf16.msra.mxu0 %v4734
    %5297 = vmatprep.subr.bf16.mxu0 %v4840
    %5298 = vmatpush2.bf16.msra.mxu0 %v4839
    %5299 = vmatprep.subr.bf16.mxu0 %v4833
    %5300 = vmatpush2.bf16.msra.mxu0 %v4832
    %5301 = vmatprep.subr.bf16.mxu0 %v4826
    %5302 = vmatpush2.bf16.msra.mxu0 %v4825
    %5303 = vmatprep.subr.bf16.mxu0 %v4819
    %5304 = vmatpush2.bf16.msra.mxu0 %v4818
    %5305 = vmatprep.subr.bf16.mxu0 %v4812
    %5306 = vmatpush2.bf16.msra.mxu0 %v4811
    %5307 = vmatprep.subr.bf16.mxu0 %v4805
    %5308 = vmatpush2.bf16.msra.mxu0 %v4804
    %5309 = vmatprep.subr.bf16.mxu0 %v4798
    %5310 = vmatpush2.bf16.msra.mxu0 %v4797
    %5311 = vmatprep.subr.bf16.mxu0 %v4791
    %5312 = vmatpush2.bf16.msra.mxu0 %v4790
    %5313 = vmatprep.mubr.bf16.mxu0 %v3621
    %5314 = vmatmul.mubr.bf16.gmra.mxu0 %v3620
    %v5315 = vpop.f32.mrf.mxu0
    %v5316 = vadd.f32 %v5273, %v5315
    %v5317 = vpop.f32.mrf.mxu0
    %v5318 = vadd.f32 %v5275, %v5317
    %v5319 = vpop.f32.mrf.mxu0
    %v5320 = vadd.f32 %v5277, %v5319
    %v5321 = vpop.f32.mrf.mxu0
    %v5322 = vadd.f32 %v5279, %v5321
    %5323 = vdwg.mxu0
    %5324 = vmatprep.subr.bf16.mxu0 0
    %5325 = vmatpush1.bf16.msra.mxu0 %v4673
    %5326 = vmatprep.subr.bf16.mxu0 0
    %5327 = vmatpush1.bf16.msra.mxu0 %v4666
    %5328 = vmatprep.subr.bf16.mxu0 0
    %5329 = vmatpush1.bf16.msra.mxu0 %v4659
    %5330 = vmatprep.subr.bf16.mxu0 0
    %5331 = vmatpush1.bf16.msra.mxu0 %v4652
    %5332 = vmatprep.subr.bf16.mxu0 0
    %5333 = vmatpush1.bf16.msra.mxu0 %v4645
    %5334 = vmatprep.subr.bf16.mxu0 0
    %5335 = vmatpush1.bf16.msra.mxu0 %v4638
    %5336 = vmatprep.subr.bf16.mxu0 0
    %5337 = vmatpush1.bf16.msra.mxu0 %v4631
    %5338 = vmatprep.subr.bf16.mxu0 0
    %5339 = vmatpush1.bf16.msra.mxu0 %v4624
    %5340 = vmatprep.subr.bf16.mxu0 0
    %5341 = vmatpush2.bf16.msra.mxu0 %v4729
    %5342 = vmatprep.subr.bf16.mxu0 0
    %5343 = vmatpush2.bf16.msra.mxu0 %v4722
    %5344 = vmatprep.subr.bf16.mxu0 0
    %5345 = vmatpush2.bf16.msra.mxu0 %v4715
    %5346 = vmatprep.subr.bf16.mxu0 0
    %5347 = vmatpush2.bf16.msra.mxu0 %v4708
    %5348 = vmatprep.subr.bf16.mxu0 0
    %5349 = vmatpush2.bf16.msra.mxu0 %v4701
    %5350 = vmatprep.subr.bf16.mxu0 0
    %5351 = vmatpush2.bf16.msra.mxu0 %v4694
    %5352 = vmatprep.subr.bf16.mxu0 0
    %5353 = vmatpush2.bf16.msra.mxu0 %v4687
    %5354 = vmatprep.subr.bf16.mxu0 0
    %5355 = vmatpush2.bf16.msra.mxu0 %v4680
    %5356 = vmatprep.mubr.bf16.mxu0 %v3619
    %5357 = vmatmul.mubr.bf16.gmra.mxu0 %v3618
    %v5358 = vpop.f32.mrf.mxu0
    %v5359 = vadd.f32 %v3906, %v5358
    %v5360 = vpop.f32.mrf.mxu0
    %v5361 = vpop.f32.mrf.mxu0
    %v5362 = vadd.f32 %v3906, %v5361
    %v5363 = vpop.f32.mrf.mxu0
    %5364 = vdwg.mxu0
    %5365 = vmatprep.subr.bf16.mxu0 0
    %5366 = vmatpush1.bf16.msra.mxu0 %v4785
    %5367 = vmatprep.subr.bf16.mxu0 0
    %5368 = vmatpush1.bf16.msra.mxu0 %v4778
    %5369 = vmatprep.subr.bf16.mxu0 0
    %5370 = vmatpush1.bf16.msra.mxu0 %v4771
    %5371 = vmatprep.subr.bf16.mxu0 0
    %5372 = vmatpush1.bf16.msra.mxu0 %v4764
    %5373 = vmatprep.subr.bf16.mxu0 0
    %5374 = vmatpush1.bf16.msra.mxu0 %v4757
    %5375 = vmatprep.subr.bf16.mxu0 0
    %5376 = vmatpush1.bf16.msra.mxu0 %v4750
    %5377 = vmatprep.subr.bf16.mxu0 0
    %5378 = vmatpush1.bf16.msra.mxu0 %v4743
    %5379 = vmatprep.subr.bf16.mxu0 0
    %5380 = vmatpush1.bf16.msra.mxu0 %v4736
    %5381 = vmatprep.subr.bf16.mxu0 0
    %5382 = vmatpush2.bf16.msra.mxu0 %v4841
    %5383 = vmatprep.subr.bf16.mxu0 0
    %5384 = vmatpush2.bf16.msra.mxu0 %v4834
    %5385 = vmatprep.subr.bf16.mxu0 0
    %5386 = vmatpush2.bf16.msra.mxu0 %v4827
    %5387 = vmatprep.subr.bf16.mxu0 0
    %5388 = vmatpush2.bf16.msra.mxu0 %v4820
    %5389 = vmatprep.subr.bf16.mxu0 0
    %5390 = vmatpush2.bf16.msra.mxu0 %v4813
    %5391 = vmatprep.subr.bf16.mxu0 0
    %5392 = vmatpush2.bf16.msra.mxu0 %v4806
    %5393 = vmatprep.subr.bf16.mxu0 0
    %5394 = vmatpush2.bf16.msra.mxu0 %v4799
    %5395 = vmatprep.subr.bf16.mxu0 0
    %5396 = vmatpush2.bf16.msra.mxu0 %v4792
    %5397 = vmatprep.mubr.bf16.mxu0 %v3621
    %5398 = vmatmul.mubr.bf16.gmra.mxu0 %v3620
    %v5399 = vpop.f32.mrf.mxu0
    %v5400 = vadd.f32 %v5359, %v5399
    %v5401 = vpop.f32.mrf.mxu0
    %v5402 = vpop.f32.mrf.mxu0
    %v5403 = vadd.f32 %v5362, %v5402
    %v5404 = vpop.f32.mrf.mxu0
    %5405 = vdwg.mxu0
    %v5406 = vmul.f32 %v5144, 0.5
    %v5407 = vmul.f32 %v5146, 0.5
    %v5408 = vmul.f32 %v5230, 0.5
    %v5409 = vmul.f32 %v5232, 0.5
    %v5410 = vmul.f32 %v5316, 0.5
    %v5411 = vmul.f32 %v5318, 0.5
    %v5412 = vmul.f32 %v5400, 0.5
    %v5413 = vmul.f32 %v5148, 0.5
    %v5414 = vmul.f32 %v5150, 0.5
    %v5415 = vmul.f32 %v5234, 0.5
    %v5416 = vmul.f32 %v5236, 0.5
    %v5417 = vmul.f32 %v5320, 0.5
    %v5418 = vmul.f32 %v5322, 0.5
    %v5419 = vmul.f32 %v5403, 0.5
    %v5420 = vtanh.pop %v5406
    %v5421 = vtanh.pop %v5407
    %v5422 = vtanh.pop %v5408
    %v5423 = vtanh.pop %v5409
    %v5424 = vtanh.pop %v5410
    %v5425 = vtanh.pop %v5411
    %v5426 = vtanh.pop %v5412
    %v5427 = vtanh.pop %v5413
    %v5428 = vtanh.pop %v5414
    %v5429 = vtanh.pop %v5415
    %v5430 = vtanh.pop %v5416
    %v5431 = vtanh.pop %v5417
    %v5432 = vtanh.pop %v5418
    %v5433 = vtanh.pop %v5419
    %v5434 = vmul.f32 %v5420, 0.5
    %v5435 = vmul.f32 %v5421, 0.5
    %v5436 = vmul.f32 %v5422, 0.5
    %v5437 = vmul.f32 %v5423, 0.5
    %v5438 = vmul.f32 %v5424, 0.5
    %v5439 = vmul.f32 %v5425, 0.5
    %v5440 = vmul.f32 %v5426, 0.5
    %v5441 = vmul.f32 %v5427, 0.5
    %v5442 = vmul.f32 %v5428, 0.5
    %v5443 = vmul.f32 %v5429, 0.5
    %v5444 = vmul.f32 %v5430, 0.5
    %v5445 = vmul.f32 %v5431, 0.5
    %v5446 = vmul.f32 %v5432, 0.5
    %v5447 = vmul.f32 %v5433, 0.5
    %v5448 = vadd.f32 %v5434, 0.5
    %v5449 = vadd.f32 %v5435, 0.5
    %v5450 = vadd.f32 %v5436, 0.5
    %v5451 = vadd.f32 %v5437, 0.5
    %v5452 = vadd.f32 %v5438, 0.5
    %v5453 = vadd.f32 %v5439, 0.5
    %v5454 = vadd.f32 %v5440, 0.5
    %v5455 = vadd.f32 %v5441, 0.5
    %v5456 = vadd.f32 %v5442, 0.5
    %v5457 = vadd.f32 %v5443, 0.5
    %v5458 = vadd.f32 %v5444, 0.5
    %v5459 = vadd.f32 %v5445, 0.5
    %v5460 = vadd.f32 %v5446, 0.5
    %v5461 = vadd.f32 %v5447, 0.5
    %5462 = vst [vmem:[#allocation16] sm:$0xff] %v5448
    %5463 = vst [vmem:[#allocation16 + $0x8] sm:$0xff] %v5449
    %5464 = vst [vmem:[#allocation16 + $0x10] sm:$0xff] %v5450
    %5465 = vst [vmem:[#allocation16 + $0x18] sm:$0xff] %v5451
    %5466 = vst [vmem:[#allocation16 + $0x20] sm:$0xff] %v5452
    %5467 = vst [vmem:[#allocation16 + $0x28] sm:$0xff] %v5453
    %5468 = vst [vmem:[#allocation16 + $0x30] sm:$0xff] %v5454
    %5469 = vst [vmem:[#allocation16 + $0x38] sm:$0xff] %v5455
    %5470 = vst [vmem:[#allocation16 + $0x40] sm:$0xff] %v5456
    %5471 = vst [vmem:[#allocation16 + $0x48] sm:$0xff] %v5457
    %5472 = vst [vmem:[#allocation16 + $0x50] sm:$0xff] %v5458
    %5473 = vst [vmem:[#allocation16 + $0x58] sm:$0xff] %v5459
    %5474 = vst [vmem:[#allocation16 + $0x60] sm:$0xff] %v5460
    %5475 = vst [vmem:[#allocation16 + $0x68] sm:$0xff] %v5461
    %5476 = vst [vmem:[#allocation17] sm:$0xff] %v3296
    %5477 = vst [vmem:[#allocation17 + $0x8] sm:$0xff] %v3306
    %5478 = vst [vmem:[#allocation17 + $0x10] sm:$0xff] %v3046
    %5479 = vst [vmem:[#allocation17 + $0x18] sm:$0xff] %v3048
    %5480 = vst [vmem:[#allocation17 + $0x20] sm:$0xff] %v3132
    %5481 = vst [vmem:[#allocation17 + $0x28] sm:$0xff] %v3252
    %5482 = vst [vmem:[#allocation17 + $0x30] sm:$0xff] %v3284
    %5483 = vst [vmem:[#allocation17 + $0x38] sm:$0xff] %v3288
    %5484 = vst [vmem:[#allocation17 + $0x40] sm:$0xff] %v3297
    %5485 = vst [vmem:[#allocation17 + $0x48] sm:$0xff] %v3307
    %5486 = vst [vmem:[#allocation17 + $0x50] sm:$0xff] %v3050
    %5487 = vst [vmem:[#allocation17 + $0x58] sm:$0xff] %v3052
    %5488 = vst [vmem:[#allocation17 + $0x60] sm:$0xff] %v3136
    %5489 = vst [vmem:[#allocation17 + $0x68] sm:$0xff] %v3253
    %5490 = vst [vmem:[#allocation17 + $0x70] sm:$0xff] %v3285
    %5491 = vst [vmem:[#allocation17 + $0x78] sm:$0xff] %v3289
    // Predicated region
    $region74: #{tpu_custom_call.1} parent=1 // pred_check
      _
    $region75: #{tpu_custom_call.1} parent=1 // pred_check_branch
      %5493 = sbr.rel (0) target = $region77
    $region76: #{tpu_custom_call.1} parent=1 // pred_region
      %s5495 = ssub.s32 1792, 1792
      %5496 = vsyncadd [#allocation4], %s5495
      %s5497 = sshll.u32 [#allocation16], 4
      %s5498 = int_to_ptr.vmem [resolvable:$true] %s5497
      %5503 = dma.vmem_to_hbm [thread:$0]  %s5498, 1792, %s10, [#allocation4], 896, 896, 56
    $region77: #{tpu_custom_call.1} parent=1 // pred_fallthru
      _
    // Predicated region
    $region78: #{tpu_custom_call.1} parent=1 // pred_check
      _
    $region79: #{tpu_custom_call.1} parent=1 // pred_check_branch
      %5505 = sbr.rel (0) target = $region81
    $region80: #{tpu_custom_call.1} parent=1 // pred_region
      %s5507 = ssub.s32 2048, 2048
      %5508 = vsyncadd [#allocation18], %s5507
      %s5509 = sshll.u32 [#allocation17], 4
      %s5510 = int_to_ptr.vmem [resolvable:$true] %s5509
      %5515 = dma.vmem_to_hbm [thread:$0]  %s5510, 2048, %s11, [#allocation18], 1024, 1024, 64
    $region81: #{tpu_custom_call.1} parent=1 // pred_fallthru
      _
    // Predicated region
    $region82: #{tpu_custom_call.1} parent=1 // pred_check
      _
    $region83: #{tpu_custom_call.1} parent=1 // pred_check_branch
      %5517 = sbr.rel (0) target = $region85
    $region84: #{tpu_custom_call.1} parent=1 // pred_region
      %5518 = dma.done [#allocation4], 1792
    $region85: #{tpu_custom_call.1} parent=1 // pred_fallthru
      _
    // Predicated region
    $region86: #{tpu_custom_call.1} parent=1 // pred_check
      _
    $region87: #{tpu_custom_call.1} parent=1 // pred_check_branch
      %5520 = sbr.rel (0) target = $region89
    $region88: #{tpu_custom_call.1} parent=1 // pred_region
      %5521 = dma.done [#allocation18], 2048
    $region89: #{tpu_custom_call.1} parent=1 // pred_fallthru
      _
    %5522 = vsyncpa [#allocation3], 1
    %5523 = vsyncpa [#allocation6], 1
    %5524 = vsyncpa [#allocation9], 1
    %5525 = vsyncpa [#allocation12], 1
    %5526 = vsyncpa [#allocation15], 1
    %5527 = vsyncpa [#allocation4], 1
    %5528 = vsyncpa [#allocation18], 1

</llo_original>
